<compile_context>
chip_gen: v6e
topology: v6e:2x2x1
jax: 0.10.0
libtpu: 0.0.40
codegen_flags: <defaults>
</compile_context>

<pallas_src>
import functools

import jax
import jax.numpy as jnp
from jax.experimental import pallas as pl
from jax.experimental.pallas import tpu as pltpu

_LANE = 128     # lane width  (last dim)
_SUBLANE = 8    # sublane width (second-to-last dim)


# -----------------------------------------------------------------------------
# helpers
# -----------------------------------------------------------------------------
def _round_up(x, m):
    return ((x + m - 1) // m) * m


def _pick_tile(m, cap=512):
    """Largest tile <= cap that divides m and is a multiple of 8; else full extent."""
    for t in range(min(m, cap), 0, -1):
        if m % t == 0 and t % _SUBLANE == 0:
            return t
    return m


def _largest_divisor_leq(n, cap):
    cap = max(1, min(n, cap))
    for t in range(cap, 0, -1):
        if n % t == 0:
            return t
    return 1


def _pad2d(a, rows, cols):
    return jnp.pad(a, ((0, rows - a.shape[0]), (0, cols - a.shape[1])))


def _vmem_limit(*nbytes):
    """Explicit scoped-VMEM budget from the actual block footprint (+ slack)."""
    est = int(sum(int(b) for b in nbytes)) + (4 << 20)
    return int(min(max(est, 16 << 20), 64 << 20))


def _sigmoid(y):
    # Exact sigmoid with a single EUP push (tanh) instead of exp + reciprocal.
    return 0.5 * jnp.tanh(0.5 * y) + 0.5


# -----------------------------------------------------------------------------
# Kernel 1: pointwise (1x1) conv == matmul + fused BN (+ SiLU) (+ fused SE scale)
# -----------------------------------------------------------------------------
def _pw_conv_bn_kernel(x_ref, w_ref, scale_ref, shift_ref, *rest,
                       act, has_se, mxu_dtype):
    if has_se:
        se_ref, o_ref = rest
    else:
        (o_ref,) = rest
    x = x_ref[0]                                   # (tm, Cin), activation dtype
    if has_se:
        # Per-batch SE channel gate fused into the matmul input (f32 multiply).
        x = x.astype(jnp.float32) * se_ref[0]
    y = jnp.dot(x.astype(mxu_dtype), w_ref[...],   # w pre-cast to mxu_dtype in wrapper
                preferred_element_type=jnp.float32)
    y = y * scale_ref[...] + shift_ref[...]        # fused inference BN (f32 epilogue)
    if act:
        y = y * _sigmoid(y)                        # SiLU
    o_ref[0] = y.astype(o_ref.dtype)


def pointwise_conv_bn(x3, w, scale, shift, *, act, se=None,
                      mxu_dtype=jnp.bfloat16, out_dtype=jnp.bfloat16):
    """x3: (N, M, Cin); w: (Cin, Cout) f32; scale/shift: (1, Cout) f32; se: (N, Cin)|None."""
    N, M, cin = x3.shape
    cout = w.shape[1]
    tm = _pick_tile(M, cap=512)
    has_se = se is not None
    kernel = functools.partial(_pw_conv_bn_kernel, act=act, has_se=has_se,
                               mxu_dtype=mxu_dtype)
    in_specs = [
        pl.BlockSpec((1, tm, cin), lambda n, i: (n, i, 0)),
        pl.BlockSpec((cin, cout), lambda n, i: (0, 0)),
        pl.BlockSpec((1, cout), lambda n, i: (0, 0)),
        pl.BlockSpec((1, cout), lambda n, i: (0, 0)),
    ]
    args = [x3, w.astype(mxu_dtype), scale, shift]
    if has_se:
        in_specs.append(pl.BlockSpec((1, 1, cin), lambda n, i: (n, 0, 0)))
        args.append(se.reshape(N, 1, cin))
    vmem = _vmem_limit(
        2 * tm * cin * jnp.dtype(x3.dtype).itemsize,
        2 * cin * cout * jnp.dtype(mxu_dtype).itemsize,
        2 * tm * cout * jnp.dtype(out_dtype).itemsize,
        tm * cout * 4,                       # f32 matmul / epilogue temporary
        4 * cout * 4,
        (2 * cin * 4 if has_se else 0))
    return pl.pallas_call(
        kernel,
        out_shape=jax.ShapeDtypeStruct((N, M, cout), out_dtype),
        grid=(N, M // tm),
        in_specs=in_specs,
        out_specs=pl.BlockSpec((1, tm, cout), lambda n, i: (n, i, 0)),
        compiler_params=pltpu.CompilerParams(
            dimension_semantics=("parallel", "parallel"),
            vmem_limit_bytes=vmem),
    )(*args)


# -----------------------------------------------------------------------------
# Kernel 2: depthwise KxK conv + fused BN + SiLU (+ fused SE global-average-pool)
#           grid = (N, channel tiles, output-row tiles)
# -----------------------------------------------------------------------------
def _dw_conv_bn_silu_kernel(xp_ref, w_ref, scale_ref, shift_ref, o_ref, *rest,
                            K, stride, TH, Wo, inv_hw):
    pooled_ref = rest[0] if rest else None
    h = pl.program_id(2)
    TC = o_ref.shape[-1]
    row0 = h * (TH * stride)
    WIN = (TH - 1) * stride + K
    w = w_ref[...]                                          # (K*K, TC) f32
    # Load the whole input row window once and convert bf16 -> f32 once
    # (previously K separate row loads + K converts per tile).
    win = xp_ref[0, pl.ds(row0, WIN), :, :].astype(jnp.float32)   # (WIN, Wp, TC)
    acc = jnp.zeros((TH, Wo, TC), jnp.float32)
    for ky in range(K):
        rows = win[ky:ky + (TH - 1) * stride + 1:stride]    # (TH, Wp, TC) static slice
        for kx in range(K):
            if stride == 1:
                patch = rows[:, kx:kx + Wo, :]
            else:
                patch = rows[:, kx:kx + (Wo - 1) * stride + 1:stride, :]
            acc = acc + patch * w[ky * K + kx]              # (TC,) lane-vector broadcast
    y = acc * scale_ref[...] + shift_ref[...]               # fused inference BN (f32)
    y = y * _sigmoid(y)                                     # SiLU
    o_ref[0] = y.astype(o_ref.dtype)
    if pooled_ref is not None:                              # fused SE squeeze (f32)
        part = (jnp.sum(y, axis=(0, 1)) * inv_hw).reshape(1, 1, TC)

        # NOTE: this running accumulation is only correct while the h grid axis is
        # innermost and "arbitrary" (sequential).  Do not make it "parallel".
        @pl.when(h == 0)
        def _init():
            pooled_ref[...] = jnp.zeros(pooled_ref.shape, pooled_ref.dtype)

        pooled_ref[...] += part


def depthwise_conv_bn_silu(xp, w_dw, scale, shift, *, K, stride, Ho, Wo, do_se,
                           out_dtype=jnp.bfloat16):
    """xp: (N, Hp, Wp, C) zero-padded, Wp % 8 == 0, C % 128 == 0 (or C itself)."""
    N, Hp, Wp, C = xp.shape
    TC = _LANE if C % _LANE == 0 else C
    # Larger row tiles amortize the ~0.35us/step overhead (perf-review item).
    TH = _largest_divisor_leq(Ho, max(1, 384 // max(Wo, 1)))
    WIN = (TH - 1) * stride + K
    inv_hw = 1.0 / float(Ho * Wo)
    grid = (N, C // TC, Ho // TH)
    kernel = functools.partial(_dw_conv_bn_silu_kernel, K=K, stride=stride,
                               TH=TH, Wo=Wo, inv_hw=inv_hw)
    y_shape = jax.ShapeDtypeStruct((N, Ho, Wo, C), out_dtype)
    y_spec = pl.BlockSpec((1, TH, Wo, TC), lambda n, c, h: (n, h, 0, c))
    if do_se:
        out_shape = (y_shape, jax.ShapeDtypeStruct((N, 1, C), jnp.float32))
        out_specs = (y_spec, pl.BlockSpec((1, 1, TC), lambda n, c, h: (n, 0, c)))
    else:
        out_shape = y_shape
        out_specs = y_spec
    vmem = _vmem_limit(
        2 * Hp * Wp * TC * jnp.dtype(xp.dtype).itemsize,   # resident image (2 bufs)
        2 * TH * Wo * TC * jnp.dtype(out_dtype).itemsize,  # y output blocks
        WIN * Wp * TC * 4,                                 # f32 row-window temporary
        TH * Wo * TC * 4,                                  # f32 accumulator
        2 * (K * K + 4) * TC * 4)                          # weights / BN / pooled
    outs = pl.pallas_call(
        kernel,
        out_shape=out_shape,
        grid=grid,
        in_specs=[
            # Full padded image per (n, c-tile); stays resident across the row axis
            # (fetched once per (n, c), not re-fetched per row tile).  bf16 halves it.
            # TODO(synk): manual double-buffered row-window DMA for huge feature maps.
            pl.BlockSpec((1, Hp, Wp, TC), lambda n, c, h: (n, 0, 0, c)),
            pl.BlockSpec((K * K, TC), lambda n, c, h: (0, c)),
            pl.BlockSpec((1, TC), lambda n, c, h: (0, c)),
            pl.BlockSpec((1, TC), lambda n, c, h: (0, c)),
        ],
        out_specs=out_specs,
        compiler_params=pltpu.CompilerParams(
            dimension_semantics=("parallel", "parallel", "arbitrary"),
            vmem_limit_bytes=vmem),
    )(xp, w_dw, scale, shift)
    if do_se:
        y, pooled = outs
        return y, pooled.reshape(N, C)
    return outs, None


# -----------------------------------------------------------------------------
# MBConv forward (wrapper; transposes / pads / reshapes are boundary glue)
# -----------------------------------------------------------------------------
def mbconv_forward(x_nchw, params, *, in_chn, out_chn, kernel_size, stride,
                   expansion_factor, do_se, compute_dtype=jnp.bfloat16):
    N, Cin, H, W = x_nchw.shape
    assert Cin == in_chn
    K = kernel_size
    pad = kernel_size - 1 // 2            # == kernel_size (reproduces PyTorch expr)
    Cexp = expansion_factor * in_chn
    do_skip = (stride == 1 and in_chn == out_chn)

    Cin_p = _round_up(in_chn, _LANE)
    Cexp_p = _round_up(Cexp, _LANE)
    Cout_p = _round_up(out_chn, _LANE)

    # --- lane-dense (multiple-of-128) channel padding of the parameters ---------
    p = {}
    if expansion_factor != 1:
        p["w_pw1"] = _pad2d(params["w_pw1"], Cin_p, Cexp_p)
        p["bn1_scale"] = _pad2d(params["bn1_scale"], 1, Cexp_p)
        p["bn1_shift"] = _pad2d(params["bn1_shift"], 1, Cexp_p)
    p["w_dw"] = _pad2d(params["w_dw"], K * K, Cexp_p)
    p["bn_dw_scale"] = _pad2d(params["bn_dw_scale"], 1, Cexp_p)
    p["bn_dw_shift"] = _pad2d(params["bn_dw_shift"], 1, Cexp_p)
    if do_se:
        Cr_p = _round_up(max(Cexp // 4, 1), _LANE)
        p["w_se1"] = _pad2d(params["w_se1"], Cexp_p, Cr_p)
        p["w_se2"] = _pad2d(params["w_se2"], Cr_p, Cexp_p)
    p["w_pw2"] = _pad2d(params["w_pw2"], Cexp_p, Cout_p)
    p["bn2_scale"] = _pad2d(params["bn2_scale"], 1, Cout_p)
    p["bn2_shift"] = _pad2d(params["bn2_shift"], 1, Cout_p)

    # --- NCHW -> NHWC + channel pad + activation-dtype cast (boundary glue) -----
    x = jnp.transpose(x_nchw, (0, 2, 3, 1)).astype(jnp.float32)
    res = x
    x = jnp.pad(x, ((0, 0), (0, 0), (0, 0), (0, Cin_p - in_chn))).astype(compute_dtype)

    # conv_pw1 : Identity if expansion_factor == 1, else 1x1 conv + BN + SiLU
    if expansion_factor != 1:
        y = pointwise_conv_bn(x.reshape(N, H * W, Cin_p), p["w_pw1"],
                              p["bn1_scale"], p["bn1_shift"],
                              act=True, mxu_dtype=compute_dtype,
                              out_dtype=compute_dtype)
        x = y.reshape(N, H, W, Cexp_p)

    # conv_dw : depthwise KxK, stride, padding=K, + BN + SiLU (+ fused SE pool)
    Hp = H + 2 * pad
    Wp = _round_up(W + 2 * pad, _SUBLANE)     # sublane-aligned padded width
    Ho = (H + 2 * pad - K) // stride + 1
    Wo = (W + 2 * pad - K) // stride + 1
    # TODO(synk): fold this zero-pad into the depthwise kernel (masked border taps).
    xp = jnp.pad(x, ((0, 0), (pad, pad), (pad, Wp - W - pad), (0, 0)))
    x, pooled = depthwise_conv_bn_silu(xp, p["w_dw"],
                                       p["bn_dw_scale"], p["bn_dw_shift"],
                                       K=K, stride=stride, Ho=Ho, Wo=Wo, do_se=do_se,
                                       out_dtype=compute_dtype)

    # SE excitation: tiny (N, Cexp) MLP -> plain XLA (not worth a pallas_call);
    # the channel re-scale itself is fused into the pw2 matmul input.
    if do_se:
        hdn = pooled @ p["w_se1"]                     # f32
        hdn = hdn * jax.nn.sigmoid(hdn)               # SiLU
        s = jax.nn.sigmoid(hdn @ p["w_se2"])          # (N, Cexp_p) f32 exact gate
    else:
        s = None

    # conv_pw2 : 1x1 conv (stride applied again, per reference) + BN, no act
    if stride != 1:
        # TODO(synk): fold this strided selection into pw2's input BlockSpec.
        x = x[:, ::stride, ::stride, :]
    H2, W2 = x.shape[1], x.shape[2]
    y = pointwise_conv_bn(x.reshape(N, H2 * W2, Cexp_p), p["w_pw2"],
                          p["bn2_scale"], p["bn2_shift"],
                          act=False, se=s, mxu_dtype=compute_dtype,
                          out_dtype=jnp.float32)
    out = y.reshape(N, H2, W2, Cout_p)[..., :out_chn]

    if do_skip:
        # Faithful to the module: with padding == kernel_size the spatial dims differ,
        # so this add raises exactly like the PyTorch reference would.  Do not "fix".
        out = out + res

    return jnp.transpose(out, (0, 3, 1, 2))   # back to NCHW


# -----------------------------------------------------------------------------
# Pure-JAX reference (for correctness check only)
# -----------------------------------------------------------------------------
def mbconv_reference(x_nchw, params, *, in_chn, out_chn, kernel_size, stride,
                     expansion_factor, do_se):
    K = kernel_size
    pad = kernel_size - 1 // 2
    Cexp = expansion_factor * in_chn
    do_skip = (stride == 1 and in_chn == out_chn)

    def silu(v):
        return v * jax.nn.sigmoid(v)

    x = jnp.transpose(x_nchw, (0, 2, 3, 1)).astype(jnp.float32)
    res = x
    if expansion_factor != 1:
        y = jnp.einsum("nhwc,ce->nhwe", x, params["w_pw1"])
        y = y * params["bn1_scale"].reshape(1, 1, 1, -1) + params["bn1_shift"].reshape(1, 1, 1, -1)
        x = silu(y)
    w_hwio = params["w_dw"].reshape(K, K, Cexp)[:, :, None, :]
    y = jax.lax.conv_general_dilated(
        x, w_hwio, (stride, stride), [(pad, pad), (pad, pad)],
        feature_group_count=Cexp, dimension_numbers=("NHWC", "HWIO", "NHWC"))
    y = y * params["bn_dw_scale"].reshape(1, 1, 1, -1) + params["bn_dw_shift"].reshape(1, 1, 1, -1)
    x = silu(y)
    if do_se:
        pooled = x.mean(axis=(1, 2))
        s = jax.nn.sigmoid(silu(pooled @ params["w_se1"]) @ params["w_se2"])
        x = x * s[:, None, None, :]
    if stride != 1:
        x = x[:, ::stride, ::stride, :]
    y = jnp.einsum("nhwc,co->nhwo", x, params["w_pw2"])
    x = y * params["bn2_scale"].reshape(1, 1, 1, -1) + params["bn2_shift"].reshape(1, 1, 1, -1)
    if do_skip:
        x = x + res
    return jnp.transpose(x, (0, 3, 1, 2))


# -----------------------------------------------------------------------------
# Deterministic parameter init (synthetic weights; eval-mode BN folded)
# -----------------------------------------------------------------------------
def _bn_scale_shift(key, c, eps=1e-5):
    k1, k2, k3, k4 = jax.random.split(key, 4)
    gamma = 1.0 + 0.1 * jax.random.normal(k1, (c,))
    beta = 0.05 * jax.random.normal(k2, (c,))
    mean = 0.1 * jax.random.normal(k3, (c,))
    var = 0.9 + 0.2 * jax.random.uniform(k4, (c,))
    scale = gamma / jnp.sqrt(var + eps)
    shift = beta - mean * scale
    return (scale.reshape(1, c).astype(jnp.float32),
            shift.reshape(1, c).astype(jnp.float32))


def init_params(key, *, in_chn, out_chn, kernel_size, stride, expansion_factor, do_se):
    del stride
    Cexp = expansion_factor * in_chn
    K = kernel_size
    keys = jax.random.split(key, 8)

    def nrm(k, shape, s=0.3):
        return (s * jax.random.normal(k, shape)).astype(jnp.float32)

    params = {}
    if expansion_factor != 1:
        params["w_pw1"] = nrm(keys[0], (in_chn, Cexp))           # (Cin, Cexp)
        params["bn1_scale"], params["bn1_shift"] = _bn_scale_shift(keys[1], Cexp)
    params["w_dw"] = nrm(keys[2], (K * K, Cexp))                 # depthwise (K*K, Cexp)
    params["bn_dw_scale"], params["bn_dw_shift"] = _bn_scale_shift(keys[3], Cexp)
    if do_se:
        params["w_se1"] = nrm(keys[4], (Cexp, Cexp // 4))
        params["w_se2"] = nrm(keys[5], (Cexp // 4, Cexp))
    params["w_pw2"] = nrm(keys[6], (Cexp, out_chn))              # (Cexp, Cout)
    params["bn2_scale"], params["bn2_shift"] = _bn_scale_shift(keys[7], out_chn)
    return params


# -----------------------------------------------------------------------------
if __name__ == "__main__":
    cfg = dict(in_chn=4, out_chn=8, kernel_size=3, stride=1,
               expansion_factor=2, do_se=True)
    key = jax.random.PRNGKey(0)
    params = init_params(key, **cfg)
    x = jax.random.normal(jax.random.fold_in(key, 123),
                          (2, cfg["in_chn"], 16, 16), jnp.float32)

    ref = mbconv_reference(x, params, **cfg)
    # Expected spatial: (16 + 2*3 - 3)/1 + 1 = 20 (padding == kernel_size quirk)
    expected_shape = (2, cfg["out_chn"], 20, 20)

    # Structural-correctness path: f32 activations + f32 MXU inputs.
    fwd_f32 = jax.jit(functools.partial(mbconv_forward,
                                        compute_dtype=jnp.float32, **cfg))
    out_f32 = jax.block_until_ready(fwd_f32(x, params))
    assert out_f32.shape == expected_shape, out_f32.shape
    if not bool(jnp.allclose(out_f32, ref, rtol=2e-2, atol=2e-2)):
        raise AssertionError("Pallas MBConv (f32 path) does not match JAX reference")

    # Fast path: bf16 activations in HBM + bf16 MXU inputs, f32 accumulate.
    fwd_bf16 = jax.jit(functools.partial(mbconv_forward,
                                         compute_dtype=jnp.bfloat16, **cfg))
    out_bf16 = jax.block_until_ready(fwd_bf16(x, params))
    assert out_bf16.shape == expected_shape, out_bf16.shape
    if not bool(jnp.allclose(out_bf16, ref, rtol=5e-2, atol=5e-2)):
        raise AssertionError("Pallas MBConv (bf16 path) does not match JAX reference")

    print("KERNEL_OK")
</pallas_src>

<mosaic_0001>
module attributes {stable_mosaic.version = 11 : i64} {
  func.func @_pw_conv_bn_kernel(%arg0: i32, %arg1: i32, %arg2: memref<1x256x128xf32, #tpu.memory_space<vmem>>, %arg3: memref<128x128xf32, #tpu.memory_space<vmem>>, %arg4: memref<1x128xf32, #tpu.memory_space<vmem>>, %arg5: memref<1x128xf32, #tpu.memory_space<vmem>>, %arg6: memref<1x256x128xf32, #tpu.memory_space<vmem>>) attributes {dimension_semantics = [#tpu.dimension_semantics<parallel>, #tpu.dimension_semantics<parallel>], iteration_bounds = array<i64: 2, 1>, scalar_prefetch = 0 : i64, scratch_operands = 0 : i64, tpu.core_type = #tpu.core_type<tc>, window_params = [{transform_indices = @transform_0, window_bounds = array<i64: 1, 256, 128>}, {pipeline_mode = #tpu.pipeline_mode<synchronous>, transform_indices = @transform_1, window_bounds = array<i64: 128, 128>}, {pipeline_mode = #tpu.pipeline_mode<synchronous>, transform_indices = @transform_2, window_bounds = array<i64: 1, 128>}, {pipeline_mode = #tpu.pipeline_mode<synchronous>, transform_indices = @transform_3, window_bounds = array<i64: 1, 128>}, {transform_indices = @transform_4, window_bounds = array<i64: 1, 256, 128>}]} {
    %c0 = arith.constant 0 : index
    %c0_0 = arith.constant 0 : index
    %c0_1 = arith.constant 0 : index
    %0 = vector.load %arg2[%c0, %c0_0, %c0_1] : memref<1x256x128xf32, #tpu.memory_space<vmem>>, vector<1x256x128xf32>
    %1 = vector.shape_cast %0 : vector<1x256x128xf32> to vector<256x128xf32>
    %c0_2 = arith.constant 0 : index
    %c0_3 = arith.constant 0 : index
    %2 = vector.load %arg3[%c0_2, %c0_3] : memref<128x128xf32, #tpu.memory_space<vmem>>, vector<128x128xf32>
    %cst = arith.constant dense<0.000000e+00> : vector<256x128xf32>
    %3 = tpu.matmul %1, %2, %cst {dimension_numbers = #tpu.dot_dimension_numbers<[1], [0], [0], [1], [0, 0, 1, 1], [], []>} : vector<256x128xf32>, vector<128x128xf32>, vector<256x128xf32> -> vector<256x128xf32>
    %c0_4 = arith.constant 0 : index
    %c0_5 = arith.constant 0 : index
    %4 = vector.load %arg4[%c0_4, %c0_5] : memref<1x128xf32, #tpu.memory_space<vmem>>, vector<1x128xf32>
    %5 = vector.broadcast %4 : vector<1x128xf32> to vector<256x128xf32>
    %6 = arith.mulf %3, %5 : vector<256x128xf32>
    %c0_6 = arith.constant 0 : index
    %c0_7 = arith.constant 0 : index
    %7 = vector.load %arg5[%c0_6, %c0_7] : memref<1x128xf32, #tpu.memory_space<vmem>>, vector<1x128xf32>
    %8 = vector.broadcast %7 : vector<1x128xf32> to vector<256x128xf32>
    %9 = arith.addf %6, %8 : vector<256x128xf32>
    %cst_8 = arith.constant 5.000000e-01 : f32
    %10 = vector.broadcast %cst_8 : f32 to vector<256x128xf32>
    %11 = arith.mulf %10, %9 : vector<256x128xf32>
    %12 = math.tanh %11 : vector<256x128xf32>
    %cst_9 = arith.constant 5.000000e-01 : f32
    %13 = vector.broadcast %cst_9 : f32 to vector<256x128xf32>
    %14 = arith.mulf %13, %12 : vector<256x128xf32>
    %cst_10 = arith.constant 5.000000e-01 : f32
    %15 = vector.broadcast %cst_10 : f32 to vector<256x128xf32>
    %16 = arith.addf %14, %15 : vector<256x128xf32>
    %17 = arith.mulf %9, %16 : vector<256x128xf32>
    %c0_11 = arith.constant 0 : index
    %c0_12 = arith.constant 0 : index
    %c0_13 = arith.constant 0 : index
    %18 = vector.load %arg6[%c0_11, %c0_12, %c0_13] : memref<1x256x128xf32, #tpu.memory_space<vmem>>, vector<1x256x128xf32>
    %19 = vector.shape_cast %18 : vector<1x256x128xf32> to vector<256x128xf32>
    %20 = vector.shape_cast %17 : vector<256x128xf32> to vector<1x256x128xf32>
    tpu.vector_store %arg6[%c0_11, %c0_12, %c0_13], %20 {strides = array<i32>} : memref<1x256x128xf32, #tpu.memory_space<vmem>>, vector<1x256x128xf32>,
    return
  }
  func.func @transform_0(%arg0: i32, %arg1: i32) -> (i32, i32, i32) {
    %c0_i32 = arith.constant 0 : i32
    %c0_i32_0 = arith.constant 0 : i32
    return %arg0, %arg1, %c0_i32 : i32, i32, i32
  }
  func.func @transform_1(%arg0: i32, %arg1: i32) -> (i32, i32) {
    %c0_i32 = arith.constant 0 : i32
    %c0_i32_0 = arith.constant 0 : i32
    %c0_i32_1 = arith.constant 0 : i32
    return %c0_i32, %c0_i32_0 : i32, i32
  }
  func.func @transform_2(%arg0: i32, %arg1: i32) -> (i32, i32) {
    %c0_i32 = arith.constant 0 : i32
    %c0_i32_0 = arith.constant 0 : i32
    %c0_i32_1 = arith.constant 0 : i32
    return %c0_i32, %c0_i32_0 : i32, i32
  }
  func.func @transform_3(%arg0: i32, %arg1: i32) -> (i32, i32) {
    %c0_i32 = arith.constant 0 : i32
    %c0_i32_0 = arith.constant 0 : i32
    %c0_i32_1 = arith.constant 0 : i32
    return %c0_i32, %c0_i32_0 : i32, i32
  }
  func.func @transform_4(%arg0: i32, %arg1: i32) -> (i32, i32, i32) {
    %c0_i32 = arith.constant 0 : i32
    %c0_i32_0 = arith.constant 0 : i32
    return %arg0, %arg1, %c0_i32 : i32, i32, i32
  }
}

module attributes {stable_mosaic.version = 11 : i64} {
  func.func @_dw_conv_bn_silu_kernel(%arg0: i32, %arg1: i32, %arg2: i32, %arg3: memref<1x22x24x128xf32, #tpu.memory_space<vmem>>, %arg4: memref<9x128xf32, #tpu.memory_space<vmem>>, %arg5: memref<1x128xf32, #tpu.memory_space<vmem>>, %arg6: memref<1x128xf32, #tpu.memory_space<vmem>>, %arg7: memref<1x10x20x128xf32, #tpu.memory_space<vmem>>, %arg8: memref<1x1x128xf32, #tpu.memory_space<vmem>>) attributes {dimension_semantics = [#tpu.dimension_semantics<parallel>, #tpu.dimension_semantics<parallel>, #tpu.dimension_semantics<arbitrary>], iteration_bounds = array<i64: 2, 1, 2>, scalar_prefetch = 0 : i64, scratch_operands = 0 : i64, tpu.core_type = #tpu.core_type<tc>, window_params = [{transform_indices = @transform_0, window_bounds = array<i64: 1, 22, 24, 128>}, {transform_indices = @transform_1, window_bounds = array<i64: 9, 128>}, {transform_indices = @transform_2, window_bounds = array<i64: 1, 128>}, {transform_indices = @transform_3, window_bounds = array<i64: 1, 128>}, {transform_indices = @transform_4, window_bounds = array<i64: 1, 10, 20, 128>}, {transform_indices = @transform_5, window_bounds = array<i64: 1, 1, 128>}]} {
    %c10_i32 = arith.constant 10 : i32
    %0 = arith.muli %arg2, %c10_i32 : i32
    %c0 = arith.constant 0 : index
    %c0_0 = arith.constant 0 : index
    %1 = vector.load %arg4[%c0, %c0_0] : memref<9x128xf32, #tpu.memory_space<vmem>>, vector<9x128xf32>
    %c0_1 = arith.constant 0 : index
    %2 = arith.index_cast %0 : i32 to index
    %c0_2 = arith.constant 0 : index
    %c0_3 = arith.constant 0 : index
    %3 = vector.load %arg3[%c0_1, %2, %c0_2, %c0_3] : memref<1x22x24x128xf32, #tpu.memory_space<vmem>>, vector<1x12x24x128xf32>
    %4 = vector.shape_cast %3 : vector<1x12x24x128xf32> to vector<12x24x128xf32>
    %cst = arith.constant 0.000000e+00 : f32
    %5 = vector.broadcast %cst : f32 to vector<10x20x128xf32>
    %6 = vector.extract_strided_slice %4 {offsets = [0, 0, 0], sizes = [10, 24, 128], strides = [1, 1, 1]} : vector<12x24x128xf32> to vector<10x24x128xf32>
    %7 = vector.extract_strided_slice %6 {offsets = [0, 0, 0], sizes = [10, 20, 128], strides = [1, 1, 1]} : vector<10x24x128xf32> to vector<10x20x128xf32>
    %8 = vector.extract_strided_slice %1 {offsets = [0, 0], sizes = [1, 128], strides = [1, 1]} : vector<9x128xf32> to vector<1x128xf32>
    %9 = vector.shape_cast %8 : vector<1x128xf32> to vector<128xf32>
    %10 = vector.shape_cast %9 : vector<128xf32> to vector<1x1x128xf32>
    %11 = vector.broadcast %10 : vector<1x1x128xf32> to vector<10x20x128xf32>
    %12 = arith.mulf %7, %11 : vector<10x20x128xf32>
    %13 = arith.addf %5, %12 : vector<10x20x128xf32>
    %14 = vector.extract_strided_slice %6 {offsets = [0, 1, 0], sizes = [10, 20, 128], strides = [1, 1, 1]} : vector<10x24x128xf32> to vector<10x20x128xf32>
    %15 = vector.extract_strided_slice %1 {offsets = [1, 0], sizes = [1, 128], strides = [1, 1]} : vector<9x128xf32> to vector<1x128xf32>
    %16 = vector.shape_cast %15 : vector<1x128xf32> to vector<128xf32>
    %17 = vector.shape_cast %16 : vector<128xf32> to vector<1x1x128xf32>
    %18 = vector.broadcast %17 : vector<1x1x128xf32> to vector<10x20x128xf32>
    %19 = arith.mulf %14, %18 : vector<10x20x128xf32>
    %20 = arith.addf %13, %19 : vector<10x20x128xf32>
    %21 = vector.extract_strided_slice %6 {offsets = [0, 2, 0], sizes = [10, 20, 128], strides = [1, 1, 1]} : vector<10x24x128xf32> to vector<10x20x128xf32>
    %22 = vector.extract_strided_slice %1 {offsets = [2, 0], sizes = [1, 128], strides = [1, 1]} : vector<9x128xf32> to vector<1x128xf32>
    %23 = vector.shape_cast %22 : vector<1x128xf32> to vector<128xf32>
    %24 = vector.shape_cast %23 : vector<128xf32> to vector<1x1x128xf32>
    %25 = vector.broadcast %24 : vector<1x1x128xf32> to vector<10x20x128xf32>
    %26 = arith.mulf %21, %25 : vector<10x20x128xf32>
    %27 = arith.addf %20, %26 : vector<10x20x128xf32>
    %28 = vector.extract_strided_slice %4 {offsets = [1, 0, 0], sizes = [10, 24, 128], strides = [1, 1, 1]} : vector<12x24x128xf32> to vector<10x24x128xf32>
    %29 = vector.extract_strided_slice %28 {offsets = [0, 0, 0], sizes = [10, 20, 128], strides = [1, 1, 1]} : vector<10x24x128xf32> to vector<10x20x128xf32>
    %30 = vector.extract_strided_slice %1 {offsets = [3, 0], sizes = [1, 128], strides = [1, 1]} : vector<9x128xf32> to vector<1x128xf32>
    %31 = vector.shape_cast %30 : vector<1x128xf32> to vector<128xf32>
    %32 = vector.shape_cast %31 : vector<128xf32> to vector<1x1x128xf32>
    %33 = vector.broadcast %32 : vector<1x1x128xf32> to vector<10x20x128xf32>
    %34 = arith.mulf %29, %33 : vector<10x20x128xf32>
    %35 = arith.addf %27, %34 : vector<10x20x128xf32>
    %36 = vector.extract_strided_slice %28 {offsets = [0, 1, 0], sizes = [10, 20, 128], strides = [1, 1, 1]} : vector<10x24x128xf32> to vector<10x20x128xf32>
    %37 = vector.extract_strided_slice %1 {offsets = [4, 0], sizes = [1, 128], strides = [1, 1]} : vector<9x128xf32> to vector<1x128xf32>
    %38 = vector.shape_cast %37 : vector<1x128xf32> to vector<128xf32>
    %39 = vector.shape_cast %38 : vector<128xf32> to vector<1x1x128xf32>
    %40 = vector.broadcast %39 : vector<1x1x128xf32> to vector<10x20x128xf32>
    %41 = arith.mulf %36, %40 : vector<10x20x128xf32>
    %42 = arith.addf %35, %41 : vector<10x20x128xf32>
    %43 = vector.extract_strided_slice %28 {offsets = [0, 2, 0], sizes = [10, 20, 128], strides = [1, 1, 1]} : vector<10x24x128xf32> to vector<10x20x128xf32>
    %44 = vector.extract_strided_slice %1 {offsets = [5, 0], sizes = [1, 128], strides = [1, 1]} : vector<9x128xf32> to vector<1x128xf32>
    %45 = vector.shape_cast %44 : vector<1x128xf32> to vector<128xf32>
    %46 = vector.shape_cast %45 : vector<128xf32> to vector<1x1x128xf32>
    %47 = vector.broadcast %46 : vector<1x1x128xf32> to vector<10x20x128xf32>
    %48 = arith.mulf %43, %47 : vector<10x20x128xf32>
    %49 = arith.addf %42, %48 : vector<10x20x128xf32>
    %50 = vector.extract_strided_slice %4 {offsets = [2, 0, 0], sizes = [10, 24, 128], strides = [1, 1, 1]} : vector<12x24x128xf32> to vector<10x24x128xf32>
    %51 = vector.extract_strided_slice %50 {offsets = [0, 0, 0], sizes = [10, 20, 128], strides = [1, 1, 1]} : vector<10x24x128xf32> to vector<10x20x128xf32>
    %52 = vector.extract_strided_slice %1 {offsets = [6, 0], sizes = [1, 128], strides = [1, 1]} : vector<9x128xf32> to vector<1x128xf32>
    %53 = vector.shape_cast %52 : vector<1x128xf32> to vector<128xf32>
    %54 = vector.shape_cast %53 : vector<128xf32> to vector<1x1x128xf32>
    %55 = vector.broadcast %54 : vector<1x1x128xf32> to vector<10x20x128xf32>
    %56 = arith.mulf %51, %55 : vector<10x20x128xf32>
    %57 = arith.addf %49, %56 : vector<10x20x128xf32>
    %58 = vector.extract_strided_slice %50 {offsets = [0, 1, 0], sizes = [10, 20, 128], strides = [1, 1, 1]} : vector<10x24x128xf32> to vector<10x20x128xf32>
    %59 = vector.extract_strided_slice %1 {offsets = [7, 0], sizes = [1, 128], strides = [1, 1]} : vector<9x128xf32> to vector<1x128xf32>
    %60 = vector.shape_cast %59 : vector<1x128xf32> to vector<128xf32>
    %61 = vector.shape_cast %60 : vector<128xf32> to vector<1x1x128xf32>
    %62 = vector.broadcast %61 : vector<1x1x128xf32> to vector<10x20x128xf32>
    %63 = arith.mulf %58, %62 : vector<10x20x128xf32>
    %64 = arith.addf %57, %63 : vector<10x20x128xf32>
    %65 = vector.extract_strided_slice %50 {offsets = [0, 2, 0], sizes = [10, 20, 128], strides = [1, 1, 1]} : vector<10x24x128xf32> to vector<10x20x128xf32>
    %66 = vector.extract_strided_slice %1 {offsets = [8, 0], sizes = [1, 128], strides = [1, 1]} : vector<9x128xf32> to vector<1x128xf32>
    %67 = vector.shape_cast %66 : vector<1x128xf32> to vector<128xf32>
    %68 = vector.shape_cast %67 : vector<128xf32> to vector<1x1x128xf32>
    %69 = vector.broadcast %68 : vector<1x1x128xf32> to vector<10x20x128xf32>
    %70 = arith.mulf %65, %69 : vector<10x20x128xf32>
    %71 = arith.addf %64, %70 : vector<10x20x128xf32>
    %c0_4 = arith.constant 0 : index
    %c0_5 = arith.constant 0 : index
    %72 = vector.load %arg5[%c0_4, %c0_5] : memref<1x128xf32, #tpu.memory_space<vmem>>, vector<1x128xf32>
    %73 = vector.shape_cast %72 : vector<1x128xf32> to vector<1x1x128xf32>
    %74 = vector.broadcast %73 : vector<1x1x128xf32> to vector<10x20x128xf32>
    %75 = arith.mulf %71, %74 : vector<10x20x128xf32>
    %c0_6 = arith.constant 0 : index
    %c0_7 = arith.constant 0 : index
    %76 = vector.load %arg6[%c0_6, %c0_7] : memref<1x128xf32, #tpu.memory_space<vmem>>, vector<1x128xf32>
    %77 = vector.shape_cast %76 : vector<1x128xf32> to vector<1x1x128xf32>
    %78 = vector.broadcast %77 : vector<1x1x128xf32> to vector<10x20x128xf32>
    %79 = arith.addf %75, %78 : vector<10x20x128xf32>
    %cst_8 = arith.constant 5.000000e-01 : f32
    %80 = vector.broadcast %cst_8 : f32 to vector<10x20x128xf32>
    %81 = arith.mulf %80, %79 : vector<10x20x128xf32>
    %82 = math.tanh %81 : vector<10x20x128xf32>
    %cst_9 = arith.constant 5.000000e-01 : f32
    %83 = vector.broadcast %cst_9 : f32 to vector<10x20x128xf32>
    %84 = arith.mulf %83, %82 : vector<10x20x128xf32>
    %cst_10 = arith.constant 5.000000e-01 : f32
    %85 = vector.broadcast %cst_10 : f32 to vector<10x20x128xf32>
    %86 = arith.addf %84, %85 : vector<10x20x128xf32>
    %87 = arith.mulf %79, %86 : vector<10x20x128xf32>
    %c0_11 = arith.constant 0 : index
    %c0_12 = arith.constant 0 : index
    %c0_13 = arith.constant 0 : index
    %c0_14 = arith.constant 0 : index
    %88 = vector.load %arg7[%c0_11, %c0_12, %c0_13, %c0_14] : memref<1x10x20x128xf32, #tpu.memory_space<vmem>>, vector<1x10x20x128xf32>
    %89 = vector.shape_cast %88 : vector<1x10x20x128xf32> to vector<10x20x128xf32>
    %90 = vector.shape_cast %87 : vector<10x20x128xf32> to vector<1x10x20x128xf32>
    tpu.vector_store %arg7[%c0_11, %c0_12, %c0_13, %c0_14], %90 {strides = array<i32>} : memref<1x10x20x128xf32, #tpu.memory_space<vmem>>, vector<1x10x20x128xf32>,
    %cst_15 = arith.constant dense<0.000000e+00> : vector<128xf32>
    %91 = vector.multi_reduction <add>, %87, %cst_15 [0, 1] : vector<10x20x128xf32> to vector<128xf32>
    %cst_16 = arith.constant 2.500000e-03 : f32
    %92 = vector.broadcast %cst_16 : f32 to vector<128xf32>
    %93 = arith.mulf %91, %92 : vector<128xf32>
    %94 = vector.shape_cast %93 : vector<128xf32> to vector<1x1x128xf32>
    %c0_i32 = arith.constant 0 : i32
    %95 = arith.cmpi eq, %arg2, %c0_i32 : i32
    %96 = arith.extui %95 : i1 to i32
    %c0_i32_17 = arith.constant 0 : i32
    %97 = arith.cmpi ne, %96, %c0_i32_17 : i32
    scf.if %97 {
      %cst_24 = arith.constant 0.000000e+00 : f32
      %101 = vector.broadcast %cst_24 : f32 to vector<1x1x128xf32>
      %c0_25 = arith.constant 0 : index
      %c0_26 = arith.constant 0 : index
      %c0_27 = arith.constant 0 : index
      %102 = vector.load %arg8[%c0_25, %c0_26, %c0_27] : memref<1x1x128xf32, #tpu.memory_space<vmem>>, vector<1x1x128xf32>
      tpu.vector_store %arg8[%c0_25, %c0_26, %c0_27], %101 {strides = array<i32>} : memref<1x1x128xf32, #tpu.memory_space<vmem>>, vector<1x1x128xf32>,
    } else {
    }
    %c0_18 = arith.constant 0 : index
    %c0_19 = arith.constant 0 : index
    %c0_20 = arith.constant 0 : index
    %98 = vector.load %arg8[%c0_18, %c0_19, %c0_20] : memref<1x1x128xf32, #tpu.memory_space<vmem>>, vector<1x1x128xf32>
    %99 = arith.addf %98, %94 : vector<1x1x128xf32>
    %c0_21 = arith.constant 0 : index
    %c0_22 = arith.constant 0 : index
    %c0_23 = arith.constant 0 : index
    %100 = vector.load %arg8[%c0_21, %c0_22, %c0_23] : memref<1x1x128xf32, #tpu.memory_space<vmem>>, vector<1x1x128xf32>
    tpu.vector_store %arg8[%c0_21, %c0_22, %c0_23], %99 {strides = array<i32>} : memref<1x1x128xf32, #tpu.memory_space<vmem>>, vector<1x1x128xf32>,
    return
  }
  func.func @transform_0(%arg0: i32, %arg1: i32, %arg2: i32) -> (i32, i32, i32, i32) {
    %c0_i32 = arith.constant 0 : i32
    %c0_i32_0 = arith.constant 0 : i32
    %c0_i32_1 = arith.constant 0 : i32
    return %arg0, %c0_i32, %c0_i32_0, %arg1 : i32, i32, i32, i32
  }
  func.func @transform_1(%arg0: i32, %arg1: i32, %arg2: i32) -> (i32, i32) {
    %c0_i32 = arith.constant 0 : i32
    %c0_i32_0 = arith.constant 0 : i32
    return %c0_i32, %arg1 : i32, i32
  }
  func.func @transform_2(%arg0: i32, %arg1: i32, %arg2: i32) -> (i32, i32) {
    %c0_i32 = arith.constant 0 : i32
    %c0_i32_0 = arith.constant 0 : i32
    return %c0_i32, %arg1 : i32, i32
  }
  func.func @transform_3(%arg0: i32, %arg1: i32, %arg2: i32) -> (i32, i32) {
    %c0_i32 = arith.constant 0 : i32
    %c0_i32_0 = arith.constant 0 : i32
    return %c0_i32, %arg1 : i32, i32
  }
  func.func @transform_4(%arg0: i32, %arg1: i32, %arg2: i32) -> (i32, i32, i32, i32) {
    %c0_i32 = arith.constant 0 : i32
    %c0_i32_0 = arith.constant 0 : i32
    return %arg0, %arg2, %c0_i32, %arg1 : i32, i32, i32, i32
  }
  func.func @transform_5(%arg0: i32, %arg1: i32, %arg2: i32) -> (i32, i32, i32) {
    %c0_i32 = arith.constant 0 : i32
    %c0_i32_0 = arith.constant 0 : i32
    return %arg0, %c0_i32, %arg1 : i32, i32, i32
  }
}

module attributes {stable_mosaic.version = 11 : i64} {
  func.func @_pw_conv_bn_kernel(%arg0: i32, %arg1: i32, %arg2: memref<1x400x128xf32, #tpu.memory_space<vmem>>, %arg3: memref<128x128xf32, #tpu.memory_space<vmem>>, %arg4: memref<1x128xf32, #tpu.memory_space<vmem>>, %arg5: memref<1x128xf32, #tpu.memory_space<vmem>>, %arg6: memref<1x1x128xf32, #tpu.memory_space<vmem>>, %arg7: memref<1x400x128xf32, #tpu.memory_space<vmem>>) attributes {dimension_semantics = [#tpu.dimension_semantics<parallel>, #tpu.dimension_semantics<parallel>], iteration_bounds = array<i64: 2, 1>, scalar_prefetch = 0 : i64, scratch_operands = 0 : i64, tpu.core_type = #tpu.core_type<tc>, window_params = [{transform_indices = @transform_0, window_bounds = array<i64: 1, 400, 128>}, {pipeline_mode = #tpu.pipeline_mode<synchronous>, transform_indices = @transform_1, window_bounds = array<i64: 128, 128>}, {pipeline_mode = #tpu.pipeline_mode<synchronous>, transform_indices = @transform_2, window_bounds = array<i64: 1, 128>}, {pipeline_mode = #tpu.pipeline_mode<synchronous>, transform_indices = @transform_3, window_bounds = array<i64: 1, 128>}, {transform_indices = @transform_4, window_bounds = array<i64: 1, 1, 128>}, {transform_indices = @transform_5, window_bounds = array<i64: 1, 400, 128>}]} {
    %c0 = arith.constant 0 : index
    %c0_0 = arith.constant 0 : index
    %c0_1 = arith.constant 0 : index
    %0 = vector.load %arg2[%c0, %c0_0, %c0_1] : memref<1x400x128xf32, #tpu.memory_space<vmem>>, vector<1x400x128xf32>
    %1 = vector.shape_cast %0 : vector<1x400x128xf32> to vector<400x128xf32>
    %c0_2 = arith.constant 0 : index
    %c0_3 = arith.constant 0 : index
    %c0_4 = arith.constant 0 : index
    %2 = vector.load %arg6[%c0_2, %c0_3, %c0_4] : memref<1x1x128xf32, #tpu.memory_space<vmem>>, vector<1x1x128xf32>
    %3 = vector.shape_cast %2 : vector<1x1x128xf32> to vector<1x128xf32>
    %4 = vector.broadcast %3 : vector<1x128xf32> to vector<400x128xf32>
    %5 = arith.mulf %1, %4 : vector<400x128xf32>
    %c0_5 = arith.constant 0 : index
    %c0_6 = arith.constant 0 : index
    %6 = vector.load %arg3[%c0_5, %c0_6] : memref<128x128xf32, #tpu.memory_space<vmem>>, vector<128x128xf32>
    %cst = arith.constant dense<0.000000e+00> : vector<400x128xf32>
    %7 = tpu.matmul %5, %6, %cst {dimension_numbers = #tpu.dot_dimension_numbers<[1], [0], [0], [1], [0, 0, 1, 1], [], []>} : vector<400x128xf32>, vector<128x128xf32>, vector<400x128xf32> -> vector<400x128xf32>
    %c0_7 = arith.constant 0 : index
    %c0_8 = arith.constant 0 : index
    %8 = vector.load %arg4[%c0_7, %c0_8] : memref<1x128xf32, #tpu.memory_space<vmem>>, vector<1x128xf32>
    %9 = vector.broadcast %8 : vector<1x128xf32> to vector<400x128xf32>
    %10 = arith.mulf %7, %9 : vector<400x128xf32>
    %c0_9 = arith.constant 0 : index
    %c0_10 = arith.constant 0 : index
    %11 = vector.load %arg5[%c0_9, %c0_10] : memref<1x128xf32, #tpu.memory_space<vmem>>, vector<1x128xf32>
    %12 = vector.broadcast %11 : vector<1x128xf32> to vector<400x128xf32>
    %13 = arith.addf %10, %12 : vector<400x128xf32>
    %c0_11 = arith.constant 0 : index
    %c0_12 = arith.constant 0 : index
    %c0_13 = arith.constant 0 : index
    %14 = vector.load %arg7[%c0_11, %c0_12, %c0_13] : memref<1x400x128xf32, #tpu.memory_space<vmem>>, vector<1x400x128xf32>
    %15 = vector.shape_cast %14 : vector<1x400x128xf32> to vector<400x128xf32>
    %16 = vector.shape_cast %13 : vector<400x128xf32> to vector<1x400x128xf32>
    tpu.vector_store %arg7[%c0_11, %c0_12, %c0_13], %16 {strides = array<i32>} : memref<1x400x128xf32, #tpu.memory_space<vmem>>, vector<1x400x128xf32>,
    return
  }
  func.func @transform_0(%arg0: i32, %arg1: i32) -> (i32, i32, i32) {
    %c0_i32 = arith.constant 0 : i32
    %c0_i32_0 = arith.constant 0 : i32
    return %arg0, %arg1, %c0_i32 : i32, i32, i32
  }
  func.func @transform_1(%arg0: i32, %arg1: i32) -> (i32, i32) {
    %c0_i32 = arith.constant 0 : i32
    %c0_i32_0 = arith.constant 0 : i32
    %c0_i32_1 = arith.constant 0 : i32
    return %c0_i32, %c0_i32_0 : i32, i32
  }
  func.func @transform_2(%arg0: i32, %arg1: i32) -> (i32, i32) {
    %c0_i32 = arith.constant 0 : i32
    %c0_i32_0 = arith.constant 0 : i32
    %c0_i32_1 = arith.constant 0 : i32
    return %c0_i32, %c0_i32_0 : i32, i32
  }
  func.func @transform_3(%arg0: i32, %arg1: i32) -> (i32, i32) {
    %c0_i32 = arith.constant 0 : i32
    %c0_i32_0 = arith.constant 0 : i32
    %c0_i32_1 = arith.constant 0 : i32
    return %c0_i32, %c0_i32_0 : i32, i32
  }
  func.func @transform_4(%arg0: i32, %arg1: i32) -> (i32, i32, i32) {
    %c0_i32 = arith.constant 0 : i32
    %c0_i32_0 = arith.constant 0 : i32
    %c0_i32_1 = arith.constant 0 : i32
    return %arg0, %c0_i32, %c0_i32_0 : i32, i32, i32
  }
  func.func @transform_5(%arg0: i32, %arg1: i32) -> (i32, i32, i32) {
    %c0_i32 = arith.constant 0 : i32
    %c0_i32_0 = arith.constant 0 : i32
    return %arg0, %arg1, %c0_i32 : i32, i32, i32
  }
}

</mosaic_0001>

<llo_original>
// kernel: mbconv_forward.3
$region0: #{mbconv_forward.3}
  #allocation0 [shape = 'u32[]', space=smem, size = 0x4, offset = 0x4, fixed_abs, tag = 'smem constant byte address 0x4 - core index']
  #allocation1 [shape = 'u32[144,128]{1,0:T(1,128)}', space=vmem, size = 0x12000, scoped, tag = 'internal scratch']
  %s0 = inlined_call_operand.vmem [shape: f32[2,256,128], index: 0, kind: input, shape index: {}]
  %s1 = inlined_call_operand.vmem [shape: f32[128,128], index: 1, kind: input, shape index: {}]
  %s2 = inlined_call_operand.vmem [shape: f32[1,128], index: 2, kind: input, shape index: {}]
  %s3 = inlined_call_operand.vmem [shape: f32[1,128], index: 3, kind: input, shape index: {}]
  %s4 = inlined_call_operand.vmem [shape: f32[2,256,128], index: 4, kind: output, shape index: {}]
  %s5 = sld [smem:[#allocation0]]
  $region49: #{mbconv_forward.3} parent=0
    _
  %s7 = ssub.s32 1, %s5
  %s8 = scalar_select 0, %s7, %s5
  loop: start=0, step=1, limit=4
  $region2: #{mbconv_forward.3} parent=0 // loop_pre_header
    _
  $region3: #{mbconv_forward.3} parent=0 // loop_header
    %s10 = sphi 0, %s14
    %p11 = scmp.ge.s32.totalorder %s10, 4
    %s17 = sphi 0, %s29
    %s18 = sphi 0, %s25
    %s19 = sphi 0, %s17
    %s20 = sphi 0, %s18
    %s21 = sphi 0, %s19
    %s22 = sphi 0, %s20
    %s34 = sphi 0, %s36
    %s37 = sphi 0, %s34
    %s38 = sphi 0, %s37
    %s54 = sphi 0, %s38
    %s58 = sphi 0, %s58
    %s60 = sphi 0, %s58
    %s61 = sphi 0, %s60
    %s75 = sphi 0, %s61
    %s79 = sphi 0, %s79
    %s81 = sphi 0, %s79
    %s82 = sphi 0, %s81
    %s96 = sphi 0, %s82
    %s100 = sphi 0, %s100
    %s102 = sphi 0, %s100
    %s103 = sphi 0, %s102
    %s117 = sphi 0, %s103
    %s125 = sphi 0, %s127
    %s128 = sphi 0, %s125
    %s129 = sphi 0, %s128
    %s145 = sphi 0, %s129
  $region4: #{mbconv_forward.3} parent=0 // loop_header_branch
    %13 = sbr.rel (%p11) target = $region8
  $region5: #{mbconv_forward.3} parent=0 // loop_body
    %s15 = ssub.s32 %s10, 1
    %s16 = ssub.s32 %s10, 2
    %s23 = sadd.s32 1, %s18
    %p24 = scmp.ge.s32.totalorder %s23, 1
    %s25 = scalar_select %p24, 0, %s23
    %s26 = sadd.s32 1, %s17
    %s27 = scalar_select %p24, %s26, %s17
    %p28 = scmp.ge.s32.totalorder %s27, 2
    %s29 = scalar_select %p28, 0, %s27
    %s30 = ssub.s32 %s17, %s29
    %s31 = ssub.s32 %s18, %s25
    %s32 = sor.u32 %s30, %s31
    %p33 = scmp.eq.s32.totalorder %s32, 0
    %s35 = sadd.s32 %s34, 1
    %s36 = scalar_select %p33, %s34, %s35
    %p39 = pneg %p33
    %p40 = scmp.eq.s32.totalorder %s10, 1
    %p41 = por %p39, %p40
    %p42 = scmp.ne.s32.totalorder %s34, %s37
    %p43 = scmp.eq.s32.totalorder %s10, 0
    %p44 = por %p42, %p43
    %p45 = scmp.ne.s32.totalorder %s34, %s37
    %p46 = scmp.eq.s32.totalorder %s15, 1
    %p47 = por %p45, %p46
    %p48 = scmp.ne.s32.totalorder %s37, %s38
    %p49 = scmp.eq.s32.totalorder %s15, 0
    %p50 = por %p48, %p49
    %p51 = scmp.ne.s32.totalorder %s37, %s38
    %p52 = scmp.eq.s32.totalorder %s16, 1
    %p53 = por %p51, %p52
    %p55 = scmp.ne.s32.totalorder %s38, %s54
    %p56 = scmp.eq.s32.totalorder %s16, 0
    %p57 = por %p55, %p56
    %s59 = sadd.s32 %s58, 1
    %p62 = scmp.eq.s32.totalorder %s10, 1
    %p63 = scmp.ne.s32.totalorder %s58, %s60
    %p64 = scmp.eq.s32.totalorder %s10, 0
    %p65 = por %p63, %p64
    %p66 = scmp.ne.s32.totalorder %s58, %s60
    %p67 = scmp.eq.s32.totalorder %s15, 1
    %p68 = por %p66, %p67
    %p69 = scmp.ne.s32.totalorder %s60, %s61
    %p70 = scmp.eq.s32.totalorder %s15, 0
    %p71 = por %p69, %p70
    %p72 = scmp.ne.s32.totalorder %s60, %s61
    %p73 = scmp.eq.s32.totalorder %s16, 1
    %p74 = por %p72, %p73
    %p76 = scmp.ne.s32.totalorder %s61, %s75
    %p77 = scmp.eq.s32.totalorder %s16, 0
    %p78 = por %p76, %p77
    %s80 = sadd.s32 %s79, 1
    %p83 = scmp.eq.s32.totalorder %s10, 1
    %p84 = scmp.ne.s32.totalorder %s79, %s81
    %p85 = scmp.eq.s32.totalorder %s10, 0
    %p86 = por %p84, %p85
    %p87 = scmp.ne.s32.totalorder %s79, %s81
    %p88 = scmp.eq.s32.totalorder %s15, 1
    %p89 = por %p87, %p88
    %p90 = scmp.ne.s32.totalorder %s81, %s82
    %p91 = scmp.eq.s32.totalorder %s15, 0
    %p92 = por %p90, %p91
    %p93 = scmp.ne.s32.totalorder %s81, %s82
    %p94 = scmp.eq.s32.totalorder %s16, 1
    %p95 = por %p93, %p94
    %p97 = scmp.ne.s32.totalorder %s82, %s96
    %p98 = scmp.eq.s32.totalorder %s16, 0
    %p99 = por %p97, %p98
    %s101 = sadd.s32 %s100, 1
    %p104 = scmp.eq.s32.totalorder %s10, 1
    %p105 = scmp.ne.s32.totalorder %s100, %s102
    %p106 = scmp.eq.s32.totalorder %s10, 0
    %p107 = por %p105, %p106
    %p108 = scmp.ne.s32.totalorder %s100, %s102
    %p109 = scmp.eq.s32.totalorder %s15, 1
    %p110 = por %p108, %p109
    %p111 = scmp.ne.s32.totalorder %s102, %s103
    %p112 = scmp.eq.s32.totalorder %s15, 0
    %p113 = por %p111, %p112
    %p114 = scmp.ne.s32.totalorder %s102, %s103
    %p115 = scmp.eq.s32.totalorder %s16, 1
    %p116 = por %p114, %p115
    %p118 = scmp.ne.s32.totalorder %s103, %s117
    %p119 = scmp.eq.s32.totalorder %s16, 0
    %p120 = por %p118, %p119
    %s121 = ssub.s32 %s17, %s29
    %s122 = ssub.s32 %s18, %s25
    %s123 = sor.u32 %s121, %s122
    %p124 = scmp.eq.s32.totalorder %s123, 0
    %s126 = sadd.s32 %s125, 1
    %s127 = scalar_select %p124, %s125, %s126
    %p130 = pneg %p124
    %p131 = scmp.eq.s32.totalorder %s10, 1
    %p132 = por %p130, %p131
    %p133 = scmp.ne.s32.totalorder %s125, %s128
    %p134 = scmp.eq.s32.totalorder %s10, 0
    %p135 = por %p133, %p134
    %p136 = scmp.ne.s32.totalorder %s125, %s128
    %p137 = scmp.eq.s32.totalorder %s15, 1
    %p138 = por %p136, %p137
    %p139 = scmp.ne.s32.totalorder %s128, %s129
    %p140 = scmp.eq.s32.totalorder %s15, 0
    %p141 = por %p139, %p140
    %p142 = scmp.ne.s32.totalorder %s128, %s129
    %p143 = scmp.eq.s32.totalorder %s16, 1
    %p144 = por %p142, %p143
    %p146 = scmp.ne.s32.totalorder %s129, %s145
    %p147 = scmp.eq.s32.totalorder %s16, 0
    %p148 = por %p146, %p147
    %p149 = scmp.le.s32.totalorder 1, %s10
    %p150 = scmp.lt.s32.totalorder %s10, 3
    %p151 = pnand %p149, %p150
    %p152 = pneg %p151
    // Predicated region
    $region9: #{mbconv_forward.3} parent=5 // pred_check
      _
    $region10: #{mbconv_forward.3} parent=5 // pred_check_branch
      %154 = sbr.rel (%p151) target = $region12
    $region11: #{mbconv_forward.3} parent=5 // pred_region
      %s155 = ssub.s32 %s10, 1
      // Predicated region
      $region13: #{mbconv_forward.3} parent=11 // pred_check
        %p156 = pneg %p71
      $region14: #{mbconv_forward.3} parent=11 // pred_check_branch
        %158 = sbr.rel (%p156) target = $region16
      $region15: #{mbconv_forward.3} parent=11 // pred_region
        _
      $region16: #{mbconv_forward.3} parent=11 // pred_fallthru
        _
      // Predicated region
      $region17: #{mbconv_forward.3} parent=11 // pred_check
        %p159 = pneg %p92
      $region18: #{mbconv_forward.3} parent=11 // pred_check_branch
        %161 = sbr.rel (%p159) target = $region20
      $region19: #{mbconv_forward.3} parent=11 // pred_region
        _
      $region20: #{mbconv_forward.3} parent=11 // pred_fallthru
        _
      // Predicated region
      $region21: #{mbconv_forward.3} parent=11 // pred_check
        %p162 = pneg %p113
      $region22: #{mbconv_forward.3} parent=11 // pred_check_branch
        %164 = sbr.rel (%p162) target = $region24
      $region23: #{mbconv_forward.3} parent=11 // pred_region
        _
      $region24: #{mbconv_forward.3} parent=11 // pred_fallthru
        _
    $region12: #{mbconv_forward.3} parent=5 // pred_fallthru
      _
    %p165 = scmp.lt.s32.totalorder %s10, 2
    // Predicated region
    $region25: #{mbconv_forward.3} parent=5 // pred_check
      %p166 = pneg %p165
    $region26: #{mbconv_forward.3} parent=5 // pred_check_branch
      %168 = sbr.rel (%p166) target = $region28
    $region27: #{mbconv_forward.3} parent=5 // pred_region
      // Predicated region
      $region29: #{mbconv_forward.3} parent=27 // pred_check
        %p169 = pneg %p44
      $region30: #{mbconv_forward.3} parent=27 // pred_check_branch
        %171 = sbr.rel (%p169) target = $region32
      $region31: #{mbconv_forward.3} parent=27 // pred_region
        %s172 = smul.u32 32, %s18
        %p173 = scmp.lt.s32.totalorder %s17, 1
        %s174 = scalar_select %p173, %s17, 1
        %p175 = scmp.lt.s32.totalorder %s172, 31
        %s176 = scalar_select %p175, %s172, 31
        %s177 = smul.addr %s174, 32
        %s178 = sadd.s32 %s176, %s177
        %s179 = smul.addr %s178, 8
        %s180 = scalar_lea.vmem %s0, %s179
        %s181 = smul.u32 32, %s18
      $region32: #{mbconv_forward.3} parent=27 // pred_fallthru
        _
    $region28: #{mbconv_forward.3} parent=5 // pred_fallthru
      _
    %p182 = scmp.le.s32.totalorder 1, %s10
    %p183 = scmp.lt.s32.totalorder %s10, 3
    %p184 = pnand %p182, %p183
    %p185 = pneg %p184
    // Predicated region
    $region33: #{mbconv_forward.3} parent=5 // pred_check
      _
    $region34: #{mbconv_forward.3} parent=5 // pred_check_branch
      %187 = sbr.rel (%p184) target = $region36
    $region35: #{mbconv_forward.3} parent=5 // pred_region
      %s188 = ssub.s32 %s10, 1
      %s189 = smul.u32 32, %s20
      %p190 = scmp.lt.s32.totalorder %s19, 1
      %s191 = scalar_select %p190, %s19, 1
      %p192 = scmp.lt.s32.totalorder %s189, 31
      %s193 = scalar_select %p192, %s189, 31
      %s194 = smul.addr %s191, 32
      %s195 = sadd.s32 %s193, %s194
      %s196 = smul.addr %s195, 8
      %s197 = scalar_lea.vmem %s0, %s196
      %p198 = pneg %p50
      %p199 = pneg %p47
      %p200 = pneg %p71
      %p201 = pneg %p68
      %p202 = pneg %p92
      %p203 = pneg %p89
      %p204 = pneg %p113
      %p205 = pneg %p110
      %p206 = pneg %p141
      %p207 = pneg %p138
      %s208 = smul.u32 32, %s20
      %p209 = scmp.lt.s32.totalorder %s19, 1
      %s210 = scalar_select %p209, %s19, 1
      %p211 = scmp.lt.s32.totalorder %s208, 31
      %s212 = scalar_select %p211, %s208, 31
      %s213 = smul.addr %s210, 32
      %s214 = sadd.s32 %s212, %s213
      %s215 = smul.addr %s214, 8
      %s216 = scalar_lea.vmem %s4, %s215
      %s217 = smul.u32 32, %s20
      %p218 = scmp.lt.s32.totalorder %s19, 1
      %s219 = scalar_select %p218, %s19, 1
      %p220 = scmp.lt.s32.totalorder %s217, 31
      %s221 = scalar_select %p220, %s217, 31
      %s222 = smul.addr %s219, 32
      %s223 = sadd.s32 %s221, %s222
      %s224 = smul.addr %s223, 8
      %s225 = scalar_lea.vmem %s0, %s224
      %s226 = smul.u32 32, %s20
      %s227 = smul.u32 32, %s20
      %p228 = scmp.lt.s32.totalorder %s19, 1
      %s229 = scalar_select %p228, %s19, 1
      %p230 = scmp.lt.s32.totalorder %s227, 31
      %s231 = scalar_select %p230, %s227, 31
      %s232 = smul.addr %s229, 32
      %s233 = sadd.s32 %s231, %s232
      %s234 = smul.addr %s233, 8
      %s235 = scalar_lea.vmem %s4, %s234
      %s236 = smul.u32 32, %s20
      %v237 = vld [vmem:[%s225] sm:$0xff]
      %v238 = vld [vmem:[%s225 + $0x8] sm:$0xff]
      %v239 = vld [vmem:[%s225 + $0x10] sm:$0xff]
      %v240 = vld [vmem:[%s225 + $0x18] sm:$0xff]
      %v241 = vld [vmem:[%s225 + $0x20] sm:$0xff]
      %v242 = vld [vmem:[%s225 + $0x28] sm:$0xff]
      %v243 = vld [vmem:[%s225 + $0x30] sm:$0xff]
      %v244 = vld [vmem:[%s225 + $0x38] sm:$0xff]
      %v245 = vld [vmem:[%s225 + $0x40] sm:$0xff]
      %v246 = vld [vmem:[%s225 + $0x48] sm:$0xff]
      %v247 = vld [vmem:[%s225 + $0x50] sm:$0xff]
      %v248 = vld [vmem:[%s225 + $0x58] sm:$0xff]
      %v249 = vld [vmem:[%s225 + $0x60] sm:$0xff]
      %v250 = vld [vmem:[%s225 + $0x68] sm:$0xff]
      %v251 = vld [vmem:[%s225 + $0x70] sm:$0xff]
      %v252 = vld [vmem:[%s225 + $0x78] sm:$0xff]
      %v253 = vld [vmem:[%s225 + $0x80] sm:$0xff]
      %v254 = vld [vmem:[%s225 + $0x88] sm:$0xff]
      %v255 = vld [vmem:[%s225 + $0x90] sm:$0xff]
      %v256 = vld [vmem:[%s225 + $0x98] sm:$0xff]
      %v257 = vld [vmem:[%s225 + $0xa0] sm:$0xff]
      %v258 = vld [vmem:[%s225 + $0xa8] sm:$0xff]
      %v259 = vld [vmem:[%s225 + $0xb0] sm:$0xff]
      %v260 = vld [vmem:[%s225 + $0xb8] sm:$0xff]
      %v261 = vld [vmem:[%s225 + $0xc0] sm:$0xff]
      %v262 = vld [vmem:[%s225 + $0xc8] sm:$0xff]
      %v263 = vld [vmem:[%s225 + $0xd0] sm:$0xff]
      %v264 = vld [vmem:[%s225 + $0xd8] sm:$0xff]
      %v265 = vld [vmem:[%s225 + $0xe0] sm:$0xff]
      %v266 = vld [vmem:[%s225 + $0xe8] sm:$0xff]
      %v267 = vld [vmem:[%s225 + $0xf0] sm:$0xff]
      %v268 = vld [vmem:[%s225 + $0xf8] sm:$0xff]
      %v269 = vld [vmem:[%s1] sm:$0xff]
      %v270 = vld [vmem:[%s1 + $0x8] sm:$0xff]
      %v271 = vld [vmem:[%s1 + $0x10] sm:$0xff]
      %v272 = vld [vmem:[%s1 + $0x18] sm:$0xff]
      %v273 = vld [vmem:[%s1 + $0x20] sm:$0xff]
      %v274 = vld [vmem:[%s1 + $0x28] sm:$0xff]
      %v275 = vld [vmem:[%s1 + $0x30] sm:$0xff]
      %v276 = vld [vmem:[%s1 + $0x38] sm:$0xff]
      %v277 = vld [vmem:[%s1 + $0x40] sm:$0xff]
      %v278 = vld [vmem:[%s1 + $0x48] sm:$0xff]
      %v279 = vld [vmem:[%s1 + $0x50] sm:$0xff]
      %v280 = vld [vmem:[%s1 + $0x58] sm:$0xff]
      %v281 = vld [vmem:[%s1 + $0x60] sm:$0xff]
      %v282 = vld [vmem:[%s1 + $0x68] sm:$0xff]
      %v283 = vld [vmem:[%s1 + $0x70] sm:$0xff]
      %v284 = vld [vmem:[%s1 + $0x78] sm:$0xff]
      %285 = vmatprep.subr.mxu0 0.0
      %286 = vmatpush1.msra.mxu0 %v284
      %287 = vmatprep.subr.mxu0 0.0
      %288 = vmatpush1.msra.mxu0 %v283
      %289 = vmatprep.subr.mxu0 0.0
      %290 = vmatpush1.msra.mxu0 %v282
      %291 = vmatprep.subr.mxu0 0.0
      %292 = vmatpush1.msra.mxu0 %v281
      %293 = vmatprep.subr.mxu0 0.0
      %294 = vmatpush1.msra.mxu0 %v280
      %295 = vmatprep.subr.mxu0 0.0
      %296 = vmatpush1.msra.mxu0 %v279
      %297 = vmatprep.subr.mxu0 0.0
      %298 = vmatpush1.msra.mxu0 %v278
      %299 = vmatprep.subr.mxu0 0.0
      %300 = vmatpush1.msra.mxu0 %v277
      %301 = vmatprep.subr.mxu0 0.0
      %302 = vmatpush1.msra.mxu0 %v276
      %303 = vmatprep.subr.mxu0 0.0
      %304 = vmatpush1.msra.mxu0 %v275
      %305 = vmatprep.subr.mxu0 0.0
      %306 = vmatpush1.msra.mxu0 %v274
      %307 = vmatprep.subr.mxu0 0.0
      %308 = vmatpush1.msra.mxu0 %v273
      %309 = vmatprep.subr.mxu0 0.0
      %310 = vmatpush1.msra.mxu0 %v272
      %311 = vmatprep.subr.mxu0 0.0
      %312 = vmatpush1.msra.mxu0 %v271
      %313 = vmatprep.subr.mxu0 0.0
      %314 = vmatpush1.msra.mxu0 %v270
      %315 = vmatprep.subr.mxu0 0.0
      %316 = vmatpush1.msra.mxu0 %v269
      %317 = vmatprep.subr.mxu0 0.0
      %318 = vmatpush2.msra.mxu0 0.0
      %319 = vmatprep.subr.mxu0 0.0
      %320 = vmatpush2.msra.mxu0 0.0
      %321 = vmatprep.subr.mxu0 0.0
      %322 = vmatpush2.msra.mxu0 0.0
      %323 = vmatprep.subr.mxu0 0.0
      %324 = vmatpush2.msra.mxu0 0.0
      %325 = vmatprep.subr.mxu0 0.0
      %326 = vmatpush2.msra.mxu0 0.0
      %327 = vmatprep.subr.mxu0 0.0
      %328 = vmatpush2.msra.mxu0 0.0
      %329 = vmatprep.subr.mxu0 0.0
      %330 = vmatpush2.msra.mxu0 0.0
      %331 = vmatprep.subr.mxu0 0.0
      %332 = vmatpush2.msra.mxu0 0.0
      %333 = vmatprep.subr.mxu0 0.0
      %334 = vmatpush2.msra.mxu0 0.0
      %335 = vmatprep.subr.mxu0 0.0
      %336 = vmatpush2.msra.mxu0 0.0
      %337 = vmatprep.subr.mxu0 0.0
      %338 = vmatpush2.msra.mxu0 0.0
      %339 = vmatprep.subr.mxu0 0.0
      %340 = vmatpush2.msra.mxu0 0.0
      %341 = vmatprep.subr.mxu0 0.0
      %342 = vmatpush2.msra.mxu0 0.0
      %343 = vmatprep.subr.mxu0 0.0
      %344 = vmatpush2.msra.mxu0 0.0
      %345 = vmatprep.subr.mxu0 0.0
      %346 = vmatpush2.msra.mxu0 0.0
      %347 = vmatprep.subr.mxu0 0.0
      %348 = vmatpush2.msra.mxu0 0.0
      %349 = vmatprep.mubr.f32.mxu0 0.0
      %350 = vmatmul.mubr.f32.gmra.mxu0 %v237
      %v351 = vpop.f32.mrf.mxu0
      %v352 = vadd.f32 0.0, %v351
      %v353 = vpop.f32.mrf.mxu0
      %354 = vmatprep.mubr.f32.mxu0 0.0
      %355 = vmatmul.mubr.f32.gmra.mxu0 %v238
      %v356 = vpop.f32.mrf.mxu0
      %v357 = vadd.f32 0.0, %v356
      %v358 = vpop.f32.mrf.mxu0
      %359 = vmatprep.mubr.f32.mxu0 0.0
      %360 = vmatmul.mubr.f32.gmra.mxu0 %v239
      %v361 = vpop.f32.mrf.mxu0
      %v362 = vadd.f32 0.0, %v361
      %v363 = vpop.f32.mrf.mxu0
      %364 = vmatprep.mubr.f32.mxu0 0.0
      %365 = vmatmul.mubr.f32.gmra.mxu0 %v240
      %v366 = vpop.f32.mrf.mxu0
      %v367 = vadd.f32 0.0, %v366
      %v368 = vpop.f32.mrf.mxu0
      %369 = vmatprep.mubr.f32.mxu0 0.0
      %370 = vmatmul.mubr.f32.gmra.mxu0 %v241
      %v371 = vpop.f32.mrf.mxu0
      %v372 = vadd.f32 0.0, %v371
      %v373 = vpop.f32.mrf.mxu0
      %374 = vmatprep.mubr.f32.mxu0 0.0
      %375 = vmatmul.mubr.f32.gmra.mxu0 %v242
      %v376 = vpop.f32.mrf.mxu0
      %v377 = vadd.f32 0.0, %v376
      %v378 = vpop.f32.mrf.mxu0
      %379 = vmatprep.mubr.f32.mxu0 0.0
      %380 = vmatmul.mubr.f32.gmra.mxu0 %v243
      %v381 = vpop.f32.mrf.mxu0
      %v382 = vadd.f32 0.0, %v381
      %v383 = vpop.f32.mrf.mxu0
      %384 = vmatprep.mubr.f32.mxu0 0.0
      %385 = vmatmul.mubr.f32.gmra.mxu0 %v244
      %v386 = vpop.f32.mrf.mxu0
      %v387 = vadd.f32 0.0, %v386
      %v388 = vpop.f32.mrf.mxu0
      %389 = vmatprep.mubr.f32.mxu0 0.0
      %390 = vmatmul.mubr.f32.gmra.mxu0 %v245
      %v391 = vpop.f32.mrf.mxu0
      %v392 = vadd.f32 0.0, %v391
      %v393 = vpop.f32.mrf.mxu0
      %394 = vmatprep.mubr.f32.mxu0 0.0
      %395 = vmatmul.mubr.f32.gmra.mxu0 %v246
      %v396 = vpop.f32.mrf.mxu0
      %v397 = vadd.f32 0.0, %v396
      %v398 = vpop.f32.mrf.mxu0
      %399 = vmatprep.mubr.f32.mxu0 0.0
      %400 = vmatmul.mubr.f32.gmra.mxu0 %v247
      %v401 = vpop.f32.mrf.mxu0
      %v402 = vadd.f32 0.0, %v401
      %v403 = vpop.f32.mrf.mxu0
      %404 = vmatprep.mubr.f32.mxu0 0.0
      %405 = vmatmul.mubr.f32.gmra.mxu0 %v248
      %v406 = vpop.f32.mrf.mxu0
      %v407 = vadd.f32 0.0, %v406
      %v408 = vpop.f32.mrf.mxu0
      %409 = vmatprep.mubr.f32.mxu0 0.0
      %410 = vmatmul.mubr.f32.gmra.mxu0 %v249
      %v411 = vpop.f32.mrf.mxu0
      %v412 = vadd.f32 0.0, %v411
      %v413 = vpop.f32.mrf.mxu0
      %414 = vmatprep.mubr.f32.mxu0 0.0
      %415 = vmatmul.mubr.f32.gmra.mxu0 %v250
      %v416 = vpop.f32.mrf.mxu0
      %v417 = vadd.f32 0.0, %v416
      %v418 = vpop.f32.mrf.mxu0
      %419 = vmatprep.mubr.f32.mxu0 0.0
      %420 = vmatmul.mubr.f32.gmra.mxu0 %v251
      %v421 = vpop.f32.mrf.mxu0
      %v422 = vadd.f32 0.0, %v421
      %v423 = vpop.f32.mrf.mxu0
      %424 = vmatprep.mubr.f32.mxu0 0.0
      %425 = vmatmul.mubr.f32.gmra.mxu0 %v252
      %v426 = vpop.f32.mrf.mxu0
      %v427 = vadd.f32 0.0, %v426
      %v428 = vpop.f32.mrf.mxu0
      %429 = vmatprep.mubr.f32.mxu0 0.0
      %430 = vmatmul.mubr.f32.gmra.mxu0 %v253
      %v431 = vpop.f32.mrf.mxu0
      %v432 = vadd.f32 0.0, %v431
      %v433 = vpop.f32.mrf.mxu0
      %434 = vmatprep.mubr.f32.mxu0 0.0
      %435 = vmatmul.mubr.f32.gmra.mxu0 %v254
      %v436 = vpop.f32.mrf.mxu0
      %v437 = vadd.f32 0.0, %v436
      %v438 = vpop.f32.mrf.mxu0
      %439 = vmatprep.mubr.f32.mxu0 0.0
      %440 = vmatmul.mubr.f32.gmra.mxu0 %v255
      %v441 = vpop.f32.mrf.mxu0
      %v442 = vadd.f32 0.0, %v441
      %v443 = vpop.f32.mrf.mxu0
      %444 = vmatprep.mubr.f32.mxu0 0.0
      %445 = vmatmul.mubr.f32.gmra.mxu0 %v256
      %v446 = vpop.f32.mrf.mxu0
      %v447 = vadd.f32 0.0, %v446
      %v448 = vpop.f32.mrf.mxu0
      %449 = vmatprep.mubr.f32.mxu0 0.0
      %450 = vmatmul.mubr.f32.gmra.mxu0 %v257
      %v451 = vpop.f32.mrf.mxu0
      %v452 = vadd.f32 0.0, %v451
      %v453 = vpop.f32.mrf.mxu0
      %454 = vmatprep.mubr.f32.mxu0 0.0
      %455 = vmatmul.mubr.f32.gmra.mxu0 %v258
      %v456 = vpop.f32.mrf.mxu0
      %v457 = vadd.f32 0.0, %v456
      %v458 = vpop.f32.mrf.mxu0
      %459 = vmatprep.mubr.f32.mxu0 0.0
      %460 = vmatmul.mubr.f32.gmra.mxu0 %v259
      %v461 = vpop.f32.mrf.mxu0
      %v462 = vadd.f32 0.0, %v461
      %v463 = vpop.f32.mrf.mxu0
      %464 = vmatprep.mubr.f32.mxu0 0.0
      %465 = vmatmul.mubr.f32.gmra.mxu0 %v260
      %v466 = vpop.f32.mrf.mxu0
      %v467 = vadd.f32 0.0, %v466
      %v468 = vpop.f32.mrf.mxu0
      %469 = vmatprep.mubr.f32.mxu0 0.0
      %470 = vmatmul.mubr.f32.gmra.mxu0 %v261
      %v471 = vpop.f32.mrf.mxu0
      %v472 = vadd.f32 0.0, %v471
      %v473 = vpop.f32.mrf.mxu0
      %474 = vmatprep.mubr.f32.mxu0 0.0
      %475 = vmatmul.mubr.f32.gmra.mxu0 %v262
      %v476 = vpop.f32.mrf.mxu0
      %v477 = vadd.f32 0.0, %v476
      %v478 = vpop.f32.mrf.mxu0
      %479 = vmatprep.mubr.f32.mxu0 0.0
      %480 = vmatmul.mubr.f32.gmra.mxu0 %v263
      %v481 = vpop.f32.mrf.mxu0
      %v482 = vadd.f32 0.0, %v481
      %v483 = vpop.f32.mrf.mxu0
      %484 = vmatprep.mubr.f32.mxu0 0.0
      %485 = vmatmul.mubr.f32.gmra.mxu0 %v264
      %v486 = vpop.f32.mrf.mxu0
      %v487 = vadd.f32 0.0, %v486
      %v488 = vpop.f32.mrf.mxu0
      %489 = vmatprep.mubr.f32.mxu0 0.0
      %490 = vmatmul.mubr.f32.gmra.mxu0 %v265
      %v491 = vpop.f32.mrf.mxu0
      %v492 = vadd.f32 0.0, %v491
      %v493 = vpop.f32.mrf.mxu0
      %494 = vmatprep.mubr.f32.mxu0 0.0
      %495 = vmatmul.mubr.f32.gmra.mxu0 %v266
      %v496 = vpop.f32.mrf.mxu0
      %v497 = vadd.f32 0.0, %v496
      %v498 = vpop.f32.mrf.mxu0
      %499 = vmatprep.mubr.f32.mxu0 0.0
      %500 = vmatmul.mubr.f32.gmra.mxu0 %v267
      %v501 = vpop.f32.mrf.mxu0
      %v502 = vadd.f32 0.0, %v501
      %v503 = vpop.f32.mrf.mxu0
      %504 = vmatprep.mubr.f32.mxu0 0.0
      %505 = vmatmul.mubr.f32.gmra.mxu0 %v268
      %v506 = vpop.f32.mrf.mxu0
      %v507 = vadd.f32 0.0, %v506
      %v508 = vpop.f32.mrf.mxu0
      %509 = vdwg.mxu0
      %v510 = vld [vmem:[%s2] sm:$0x1]
      %v512 = vlaneseq
      %v513 = vshrl.u32 %v512, 7
      %v514 = vsub.s32 0, %v513
      %v515 = vrot.slane %v510, %v514
      %v517 = vmul.f32 %v352, %v515
      %v518 = vmul.f32 %v357, %v515
      %v519 = vmul.f32 %v362, %v515
      %v520 = vmul.f32 %v367, %v515
      %v521 = vmul.f32 %v372, %v515
      %v522 = vmul.f32 %v377, %v515
      %v523 = vmul.f32 %v382, %v515
      %v524 = vmul.f32 %v387, %v515
      %v525 = vmul.f32 %v392, %v515
      %v526 = vmul.f32 %v397, %v515
      %v527 = vmul.f32 %v402, %v515
      %v528 = vmul.f32 %v407, %v515
      %v529 = vmul.f32 %v412, %v515
      %v530 = vmul.f32 %v417, %v515
      %v531 = vmul.f32 %v422, %v515
      %v532 = vmul.f32 %v427, %v515
      %v533 = vmul.f32 %v432, %v515
      %v534 = vmul.f32 %v437, %v515
      %v535 = vmul.f32 %v442, %v515
      %v536 = vmul.f32 %v447, %v515
      %v537 = vmul.f32 %v452, %v515
      %v538 = vmul.f32 %v457, %v515
      %v539 = vmul.f32 %v462, %v515
      %v540 = vmul.f32 %v467, %v515
      %v541 = vmul.f32 %v472, %v515
      %v542 = vmul.f32 %v477, %v515
      %v543 = vmul.f32 %v482, %v515
      %v544 = vmul.f32 %v487, %v515
      %v545 = vmul.f32 %v492, %v515
      %v546 = vmul.f32 %v497, %v515
      %v547 = vmul.f32 %v502, %v515
      %v548 = vmul.f32 %v507, %v515
      %v549 = vld [vmem:[%s3] sm:$0x1]
      %v551 = vlaneseq
      %v552 = vshrl.u32 %v551, 7
      %v553 = vsub.s32 0, %v552
      %v554 = vrot.slane %v549, %v553
      %v556 = vadd.f32 %v517, %v554
      %v557 = vadd.f32 %v518, %v554
      %v558 = vadd.f32 %v519, %v554
      %v559 = vadd.f32 %v520, %v554
      %v560 = vadd.f32 %v521, %v554
      %v561 = vadd.f32 %v522, %v554
      %v562 = vadd.f32 %v523, %v554
      %v563 = vadd.f32 %v524, %v554
      %v564 = vadd.f32 %v525, %v554
      %v565 = vadd.f32 %v526, %v554
      %v566 = vadd.f32 %v527, %v554
      %v567 = vadd.f32 %v528, %v554
      %v568 = vadd.f32 %v529, %v554
      %v569 = vadd.f32 %v530, %v554
      %v570 = vadd.f32 %v531, %v554
      %v571 = vadd.f32 %v532, %v554
      %v572 = vadd.f32 %v533, %v554
      %v573 = vadd.f32 %v534, %v554
      %v574 = vadd.f32 %v535, %v554
      %v575 = vadd.f32 %v536, %v554
      %v576 = vadd.f32 %v537, %v554
      %v577 = vadd.f32 %v538, %v554
      %v578 = vadd.f32 %v539, %v554
      %v579 = vadd.f32 %v540, %v554
      %v580 = vadd.f32 %v541, %v554
      %v581 = vadd.f32 %v542, %v554
      %v582 = vadd.f32 %v543, %v554
      %v583 = vadd.f32 %v544, %v554
      %v584 = vadd.f32 %v545, %v554
      %v585 = vadd.f32 %v546, %v554
      %v586 = vadd.f32 %v547, %v554
      %v587 = vadd.f32 %v548, %v554
      %v588 = vmul.f32 %v556, 0.5
      %v589 = vmul.f32 %v557, 0.5
      %v590 = vmul.f32 %v558, 0.5
      %v591 = vmul.f32 %v559, 0.5
      %v592 = vmul.f32 %v560, 0.5
      %v593 = vmul.f32 %v561, 0.5
      %v594 = vmul.f32 %v562, 0.5
      %v595 = vmul.f32 %v563, 0.5
      %v596 = vmul.f32 %v564, 0.5
      %v597 = vmul.f32 %v565, 0.5
      %v598 = vmul.f32 %v566, 0.5
      %v599 = vmul.f32 %v567, 0.5
      %v600 = vmul.f32 %v568, 0.5
      %v601 = vmul.f32 %v569, 0.5
      %v602 = vmul.f32 %v570, 0.5
      %v603 = vmul.f32 %v571, 0.5
      %v604 = vmul.f32 %v572, 0.5
      %v605 = vmul.f32 %v573, 0.5
      %v606 = vmul.f32 %v574, 0.5
      %v607 = vmul.f32 %v575, 0.5
      %v608 = vmul.f32 %v576, 0.5
      %v609 = vmul.f32 %v577, 0.5
      %v610 = vmul.f32 %v578, 0.5
      %v611 = vmul.f32 %v579, 0.5
      %v612 = vmul.f32 %v580, 0.5
      %v613 = vmul.f32 %v581, 0.5
      %v614 = vmul.f32 %v582, 0.5
      %v615 = vmul.f32 %v583, 0.5
      %v616 = vmul.f32 %v584, 0.5
      %v617 = vmul.f32 %v585, 0.5
      %v618 = vmul.f32 %v586, 0.5
      %v619 = vmul.f32 %v587, 0.5
      %v620 = vtanh.pop %v588
      %v621 = vtanh.pop %v589
      %v622 = vtanh.pop %v590
      %v623 = vtanh.pop %v591
      %v624 = vtanh.pop %v592
      %v625 = vtanh.pop %v593
      %v626 = vtanh.pop %v594
      %v627 = vtanh.pop %v595
      %v628 = vtanh.pop %v596
      %v629 = vtanh.pop %v597
      %v630 = vtanh.pop %v598
      %v631 = vtanh.pop %v599
      %v632 = vtanh.pop %v600
      %v633 = vtanh.pop %v601
      %v634 = vtanh.pop %v602
      %v635 = vtanh.pop %v603
      %v636 = vtanh.pop %v604
      %v637 = vtanh.pop %v605
      %v638 = vtanh.pop %v606
      %v639 = vtanh.pop %v607
      %v640 = vtanh.pop %v608
      %v641 = vtanh.pop %v609
      %v642 = vtanh.pop %v610
      %v643 = vtanh.pop %v611
      %v644 = vtanh.pop %v612
      %v645 = vtanh.pop %v613
      %v646 = vtanh.pop %v614
      %v647 = vtanh.pop %v615
      %v648 = vtanh.pop %v616
      %v649 = vtanh.pop %v617
      %v650 = vtanh.pop %v618
      %v651 = vtanh.pop %v619
      %v652 = vmul.f32 %v620, 0.5
      %v653 = vmul.f32 %v621, 0.5
      %v654 = vmul.f32 %v622, 0.5
      %v655 = vmul.f32 %v623, 0.5
      %v656 = vmul.f32 %v624, 0.5
      %v657 = vmul.f32 %v625, 0.5
      %v658 = vmul.f32 %v626, 0.5
      %v659 = vmul.f32 %v627, 0.5
      %v660 = vmul.f32 %v628, 0.5
      %v661 = vmul.f32 %v629, 0.5
      %v662 = vmul.f32 %v630, 0.5
      %v663 = vmul.f32 %v631, 0.5
      %v664 = vmul.f32 %v632, 0.5
      %v665 = vmul.f32 %v633, 0.5
      %v666 = vmul.f32 %v634, 0.5
      %v667 = vmul.f32 %v635, 0.5
      %v668 = vmul.f32 %v636, 0.5
      %v669 = vmul.f32 %v637, 0.5
      %v670 = vmul.f32 %v638, 0.5
      %v671 = vmul.f32 %v639, 0.5
      %v672 = vmul.f32 %v640, 0.5
      %v673 = vmul.f32 %v641, 0.5
      %v674 = vmul.f32 %v642, 0.5
      %v675 = vmul.f32 %v643, 0.5
      %v676 = vmul.f32 %v644, 0.5
      %v677 = vmul.f32 %v645, 0.5
      %v678 = vmul.f32 %v646, 0.5
      %v679 = vmul.f32 %v647, 0.5
      %v680 = vmul.f32 %v648, 0.5
      %v681 = vmul.f32 %v649, 0.5
      %v682 = vmul.f32 %v650, 0.5
      %v683 = vmul.f32 %v651, 0.5
      %v684 = vadd.f32 %v652, 0.5
      %v685 = vadd.f32 %v653, 0.5
      %v686 = vadd.f32 %v654, 0.5
      %v687 = vadd.f32 %v655, 0.5
      %v688 = vadd.f32 %v656, 0.5
      %v689 = vadd.f32 %v657, 0.5
      %v690 = vadd.f32 %v658, 0.5
      %v691 = vadd.f32 %v659, 0.5
      %v692 = vadd.f32 %v660, 0.5
      %v693 = vadd.f32 %v661, 0.5
      %v694 = vadd.f32 %v662, 0.5
      %v695 = vadd.f32 %v663, 0.5
      %v696 = vadd.f32 %v664, 0.5
      %v697 = vadd.f32 %v665, 0.5
      %v698 = vadd.f32 %v666, 0.5
      %v699 = vadd.f32 %v667, 0.5
      %v700 = vadd.f32 %v668, 0.5
      %v701 = vadd.f32 %v669, 0.5
      %v702 = vadd.f32 %v670, 0.5
      %v703 = vadd.f32 %v671, 0.5
      %v704 = vadd.f32 %v672, 0.5
      %v705 = vadd.f32 %v673, 0.5
      %v706 = vadd.f32 %v674, 0.5
      %v707 = vadd.f32 %v675, 0.5
      %v708 = vadd.f32 %v676, 0.5
      %v709 = vadd.f32 %v677, 0.5
      %v710 = vadd.f32 %v678, 0.5
      %v711 = vadd.f32 %v679, 0.5
      %v712 = vadd.f32 %v680, 0.5
      %v713 = vadd.f32 %v681, 0.5
      %v714 = vadd.f32 %v682, 0.5
      %v715 = vadd.f32 %v683, 0.5
      %v716 = vmul.f32 %v556, %v684
      %v717 = vmul.f32 %v557, %v685
      %v718 = vmul.f32 %v558, %v686
      %v719 = vmul.f32 %v559, %v687
      %v720 = vmul.f32 %v560, %v688
      %v721 = vmul.f32 %v561, %v689
      %v722 = vmul.f32 %v562, %v690
      %v723 = vmul.f32 %v563, %v691
      %v724 = vmul.f32 %v564, %v692
      %v725 = vmul.f32 %v565, %v693
      %v726 = vmul.f32 %v566, %v694
      %v727 = vmul.f32 %v567, %v695
      %v728 = vmul.f32 %v568, %v696
      %v729 = vmul.f32 %v569, %v697
      %v730 = vmul.f32 %v570, %v698
      %v731 = vmul.f32 %v571, %v699
      %v732 = vmul.f32 %v572, %v700
      %v733 = vmul.f32 %v573, %v701
      %v734 = vmul.f32 %v574, %v702
      %v735 = vmul.f32 %v575, %v703
      %v736 = vmul.f32 %v576, %v704
      %v737 = vmul.f32 %v577, %v705
      %v738 = vmul.f32 %v578, %v706
      %v739 = vmul.f32 %v579, %v707
      %v740 = vmul.f32 %v580, %v708
      %v741 = vmul.f32 %v581, %v709
      %v742 = vmul.f32 %v582, %v710
      %v743 = vmul.f32 %v583, %v711
      %v744 = vmul.f32 %v584, %v712
      %v745 = vmul.f32 %v585, %v713
      %v746 = vmul.f32 %v586, %v714
      %v747 = vmul.f32 %v587, %v715
      %748 = vst [vmem:[%s235] sm:$0xff] %v716
      %749 = vst [vmem:[%s235 + $0x8] sm:$0xff] %v717
      %750 = vst [vmem:[%s235 + $0x10] sm:$0xff] %v718
      %751 = vst [vmem:[%s235 + $0x18] sm:$0xff] %v719
      %752 = vst [vmem:[%s235 + $0x20] sm:$0xff] %v720
      %753 = vst [vmem:[%s235 + $0x28] sm:$0xff] %v721
      %754 = vst [vmem:[%s235 + $0x30] sm:$0xff] %v722
      %755 = vst [vmem:[%s235 + $0x38] sm:$0xff] %v723
      %756 = vst [vmem:[%s235 + $0x40] sm:$0xff] %v724
      %757 = vst [vmem:[%s235 + $0x48] sm:$0xff] %v725
      %758 = vst [vmem:[%s235 + $0x50] sm:$0xff] %v726
      %759 = vst [vmem:[%s235 + $0x58] sm:$0xff] %v727
      %760 = vst [vmem:[%s235 + $0x60] sm:$0xff] %v728
      %761 = vst [vmem:[%s235 + $0x68] sm:$0xff] %v729
      %762 = vst [vmem:[%s235 + $0x70] sm:$0xff] %v730
      %763 = vst [vmem:[%s235 + $0x78] sm:$0xff] %v731
      %764 = vst [vmem:[%s235 + $0x80] sm:$0xff] %v732
      %765 = vst [vmem:[%s235 + $0x88] sm:$0xff] %v733
      %766 = vst [vmem:[%s235 + $0x90] sm:$0xff] %v734
      %767 = vst [vmem:[%s235 + $0x98] sm:$0xff] %v735
      %768 = vst [vmem:[%s235 + $0xa0] sm:$0xff] %v736
      %769 = vst [vmem:[%s235 + $0xa8] sm:$0xff] %v737
      %770 = vst [vmem:[%s235 + $0xb0] sm:$0xff] %v738
      %771 = vst [vmem:[%s235 + $0xb8] sm:$0xff] %v739
      %772 = vst [vmem:[%s235 + $0xc0] sm:$0xff] %v740
      %773 = vst [vmem:[%s235 + $0xc8] sm:$0xff] %v741
      %774 = vst [vmem:[%s235 + $0xd0] sm:$0xff] %v742
      %775 = vst [vmem:[%s235 + $0xd8] sm:$0xff] %v743
      %776 = vst [vmem:[%s235 + $0xe0] sm:$0xff] %v744
      %777 = vst [vmem:[%s235 + $0xe8] sm:$0xff] %v745
      %778 = vst [vmem:[%s235 + $0xf0] sm:$0xff] %v746
      %779 = vst [vmem:[%s235 + $0xf8] sm:$0xff] %v747
      %s780 = smul.u32 32, %s20
      %p781 = scmp.lt.s32.totalorder %s19, 1
      %s782 = scalar_select %p781, %s19, 1
      %p783 = scmp.lt.s32.totalorder %s780, 31
      %s784 = scalar_select %p783, %s780, 31
      %s785 = smul.addr %s782, 32
      %s786 = sadd.s32 %s784, %s785
      %s787 = smul.addr %s786, 8
      %s788 = scalar_lea.vmem %s4, %s787
      // Predicated region
      $region37: #{mbconv_forward.3} parent=35 // pred_check
        %p789 = pneg %p138
      $region38: #{mbconv_forward.3} parent=35 // pred_check_branch
        %791 = sbr.rel (%p789) target = $region40
      $region39: #{mbconv_forward.3} parent=35 // pred_region
        %s792 = smul.u32 32, %s20
      $region40: #{mbconv_forward.3} parent=35 // pred_fallthru
        _
    $region36: #{mbconv_forward.3} parent=5 // pred_fallthru
      _
    %p793 = scmp.le.s32.totalorder 2, %s10
    // Predicated region
    $region41: #{mbconv_forward.3} parent=5 // pred_check
      %p794 = pneg %p793
    $region42: #{mbconv_forward.3} parent=5 // pred_check_branch
      %796 = sbr.rel (%p794) target = $region44
    $region43: #{mbconv_forward.3} parent=5 // pred_region
      %s797 = ssub.s32 %s10, 2
      // Predicated region
      $region45: #{mbconv_forward.3} parent=43 // pred_check
        %p798 = pneg %p144
      $region46: #{mbconv_forward.3} parent=43 // pred_check_branch
        %800 = sbr.rel (%p798) target = $region48
      $region47: #{mbconv_forward.3} parent=43 // pred_region
        %s801 = smul.u32 32, %s22
        %p802 = scmp.lt.s32.totalorder %s21, 1
        %s803 = scalar_select %p802, %s21, 1
        %p804 = scmp.lt.s32.totalorder %s801, 31
        %s805 = scalar_select %p804, %s801, 31
        %s806 = smul.addr %s803, 32
        %s807 = sadd.s32 %s805, %s806
        %s808 = smul.addr %s807, 8
        %s809 = scalar_lea.vmem %s4, %s808
      $region48: #{mbconv_forward.3} parent=43 // pred_fallthru
        _
    $region44: #{mbconv_forward.3} parent=5 // pred_fallthru
      _
  $region6: #{mbconv_forward.3} parent=0 // loop_footer
    %s14 = sadd.s32 1, %s10
  $region7: #{mbconv_forward.3} parent=0 // loop_footer_branch
    %9 = sbr.rel target = $region3
  $region8: #{mbconv_forward.3} parent=0 // loop_exit
    _

// kernel: mbconv_forward.4
$region0: #{mbconv_forward.4}
  #allocation0 [shape = 'u32[]', space=smem, size = 0x4, offset = 0x4, fixed_abs, tag = 'smem constant byte address 0x4 - core index']
  #allocation1 [shape = 'u32[144,128]{1,0:T(1,128)}', space=vmem, size = 0x12000, scoped, tag = 'internal scratch']
  %s0 = inlined_call_operand.vmem [shape: f32[2,22,24,128], index: 0, kind: input, shape index: {}]
  %s1 = inlined_call_operand.vmem [shape: f32[9,128], index: 1, kind: input, shape index: {}]
  %s2 = inlined_call_operand.vmem [shape: f32[1,128], index: 2, kind: input, shape index: {}]
  %s3 = inlined_call_operand.vmem [shape: f32[1,128], index: 3, kind: input, shape index: {}]
  %s4 = inlined_call_operand.vmem [shape: f32[2,20,20,128], index: 4, kind: output, shape index: {0}]
  %s5 = inlined_call_operand.vmem [shape: f32[2,1,128], index: 5, kind: output, shape index: {1}]
  %6 = xla_tuple %s4, %s5
  %s7 = sld [smem:[#allocation0]]
  $region61: #{mbconv_forward.4} parent=0
    _
  %s9 = ssub.s32 1, %s7
  %s10 = scalar_select 0, %s9, %s7
  loop: start=0, step=1, limit=6
  $region2: #{mbconv_forward.4} parent=0 // loop_pre_header
    _
  $region3: #{mbconv_forward.4} parent=0 // loop_header
    %s12 = sphi 0, %s16
    %p13 = scmp.ge.s32.totalorder %s12, 6
    %s19 = sphi 0, %s38
    %s20 = sphi 0, %s34
    %s21 = sphi 0, %s30
    %s22 = sphi 0, %s19
    %s23 = sphi 0, %s20
    %s24 = sphi 0, %s21
    %s25 = sphi 0, %s22
    %s26 = sphi 0, %s23
    %s27 = sphi 0, %s24
    %s43 = sphi 0, %s45
    %s46 = sphi 0, %s43
    %s47 = sphi 0, %s46
    %s63 = sphi 0, %s47
    %s69 = sphi 0, %s71
    %s72 = sphi 0, %s69
    %s73 = sphi 0, %s72
    %s89 = sphi 0, %s73
    %s95 = sphi 0, %s97
    %s98 = sphi 0, %s95
    %s99 = sphi 0, %s98
    %s115 = sphi 0, %s99
    %s121 = sphi 0, %s123
    %s124 = sphi 0, %s121
    %s125 = sphi 0, %s124
    %s141 = sphi 0, %s125
    %s151 = sphi 0, %s153
    %s154 = sphi 0, %s151
    %s155 = sphi 0, %s154
    %s171 = sphi 0, %s155
    %s179 = sphi 0, %s181
    %s182 = sphi 0, %s179
    %s183 = sphi 0, %s182
    %s199 = sphi 0, %s183
  $region4: #{mbconv_forward.4} parent=0 // loop_header_branch
    %15 = sbr.rel (%p13) target = $region8
  $region5: #{mbconv_forward.4} parent=0 // loop_body
    %s17 = ssub.s32 %s12, 1
    %s18 = ssub.s32 %s12, 2
    %s28 = sadd.s32 1, %s21
    %p29 = scmp.ge.s32.totalorder %s28, 2
    %s30 = scalar_select %p29, 0, %s28
    %s31 = sadd.s32 1, %s20
    %s32 = scalar_select %p29, %s31, %s20
    %p33 = scmp.ge.s32.totalorder %s32, 1
    %s34 = scalar_select %p33, 0, %s32
    %s35 = sadd.s32 1, %s19
    %s36 = scalar_select %p33, %s35, %s19
    %p37 = scmp.ge.s32.totalorder %s36, 2
    %s38 = scalar_select %p37, 0, %s36
    %s39 = ssub.s32 %s19, %s38
    %s40 = ssub.s32 %s20, %s34
    %s41 = sor.u32 %s39, %s40
    %p42 = scmp.eq.s32.totalorder %s41, 0
    %s44 = sadd.s32 %s43, 1
    %s45 = scalar_select %p42, %s43, %s44
    %p48 = pneg %p42
    %p49 = scmp.eq.s32.totalorder %s12, 3
    %p50 = por %p48, %p49
    %p51 = scmp.ne.s32.totalorder %s43, %s46
    %p52 = scmp.eq.s32.totalorder %s12, 0
    %p53 = por %p51, %p52
    %p54 = scmp.ne.s32.totalorder %s43, %s46
    %p55 = scmp.eq.s32.totalorder %s17, 3
    %p56 = por %p54, %p55
    %p57 = scmp.ne.s32.totalorder %s46, %s47
    %p58 = scmp.eq.s32.totalorder %s17, 0
    %p59 = por %p57, %p58
    %p60 = scmp.ne.s32.totalorder %s46, %s47
    %p61 = scmp.eq.s32.totalorder %s18, 3
    %p62 = por %p60, %p61
    %p64 = scmp.ne.s32.totalorder %s47, %s63
    %p65 = scmp.eq.s32.totalorder %s18, 0
    %p66 = por %p64, %p65
    %s67 = ssub.s32 %s20, %s34
    %p68 = scmp.eq.s32.totalorder %s67, 0
    %s70 = sadd.s32 %s69, 1
    %s71 = scalar_select %p68, %s69, %s70
    %p74 = pneg %p68
    %p75 = scmp.eq.s32.totalorder %s12, 3
    %p76 = por %p74, %p75
    %p77 = scmp.ne.s32.totalorder %s69, %s72
    %p78 = scmp.eq.s32.totalorder %s12, 0
    %p79 = por %p77, %p78
    %p80 = scmp.ne.s32.totalorder %s69, %s72
    %p81 = scmp.eq.s32.totalorder %s17, 3
    %p82 = por %p80, %p81
    %p83 = scmp.ne.s32.totalorder %s72, %s73
    %p84 = scmp.eq.s32.totalorder %s17, 0
    %p85 = por %p83, %p84
    %p86 = scmp.ne.s32.totalorder %s72, %s73
    %p87 = scmp.eq.s32.totalorder %s18, 3
    %p88 = por %p86, %p87
    %p90 = scmp.ne.s32.totalorder %s73, %s89
    %p91 = scmp.eq.s32.totalorder %s18, 0
    %p92 = por %p90, %p91
    %s93 = ssub.s32 %s20, %s34
    %p94 = scmp.eq.s32.totalorder %s93, 0
    %s96 = sadd.s32 %s95, 1
    %s97 = scalar_select %p94, %s95, %s96
    %p100 = pneg %p94
    %p101 = scmp.eq.s32.totalorder %s12, 3
    %p102 = por %p100, %p101
    %p103 = scmp.ne.s32.totalorder %s95, %s98
    %p104 = scmp.eq.s32.totalorder %s12, 0
    %p105 = por %p103, %p104
    %p106 = scmp.ne.s32.totalorder %s95, %s98
    %p107 = scmp.eq.s32.totalorder %s17, 3
    %p108 = por %p106, %p107
    %p109 = scmp.ne.s32.totalorder %s98, %s99
    %p110 = scmp.eq.s32.totalorder %s17, 0
    %p111 = por %p109, %p110
    %p112 = scmp.ne.s32.totalorder %s98, %s99
    %p113 = scmp.eq.s32.totalorder %s18, 3
    %p114 = por %p112, %p113
    %p116 = scmp.ne.s32.totalorder %s99, %s115
    %p117 = scmp.eq.s32.totalorder %s18, 0
    %p118 = por %p116, %p117
    %s119 = ssub.s32 %s20, %s34
    %p120 = scmp.eq.s32.totalorder %s119, 0
    %s122 = sadd.s32 %s121, 1
    %s123 = scalar_select %p120, %s121, %s122
    %p126 = pneg %p120
    %p127 = scmp.eq.s32.totalorder %s12, 3
    %p128 = por %p126, %p127
    %p129 = scmp.ne.s32.totalorder %s121, %s124
    %p130 = scmp.eq.s32.totalorder %s12, 0
    %p131 = por %p129, %p130
    %p132 = scmp.ne.s32.totalorder %s121, %s124
    %p133 = scmp.eq.s32.totalorder %s17, 3
    %p134 = por %p132, %p133
    %p135 = scmp.ne.s32.totalorder %s124, %s125
    %p136 = scmp.eq.s32.totalorder %s17, 0
    %p137 = por %p135, %p136
    %p138 = scmp.ne.s32.totalorder %s124, %s125
    %p139 = scmp.eq.s32.totalorder %s18, 3
    %p140 = por %p138, %p139
    %p142 = scmp.ne.s32.totalorder %s125, %s141
    %p143 = scmp.eq.s32.totalorder %s18, 0
    %p144 = por %p142, %p143
    %s145 = ssub.s32 %s19, %s38
    %s146 = ssub.s32 %s21, %s30
    %s147 = sor.u32 %s145, %s146
    %s148 = ssub.s32 %s20, %s34
    %s149 = sor.u32 %s147, %s148
    %p150 = scmp.eq.s32.totalorder %s149, 0
    %s152 = sadd.s32 %s151, 1
    %s153 = scalar_select %p150, %s151, %s152
    %p156 = pneg %p150
    %p157 = scmp.eq.s32.totalorder %s12, 3
    %p158 = por %p156, %p157
    %p159 = scmp.ne.s32.totalorder %s151, %s154
    %p160 = scmp.eq.s32.totalorder %s12, 0
    %p161 = por %p159, %p160
    %p162 = scmp.ne.s32.totalorder %s151, %s154
    %p163 = scmp.eq.s32.totalorder %s17, 3
    %p164 = por %p162, %p163
    %p165 = scmp.ne.s32.totalorder %s154, %s155
    %p166 = scmp.eq.s32.totalorder %s17, 0
    %p167 = por %p165, %p166
    %p168 = scmp.ne.s32.totalorder %s154, %s155
    %p169 = scmp.eq.s32.totalorder %s18, 3
    %p170 = por %p168, %p169
    %p172 = scmp.ne.s32.totalorder %s155, %s171
    %p173 = scmp.eq.s32.totalorder %s18, 0
    %p174 = por %p172, %p173
    %s175 = ssub.s32 %s19, %s38
    %s176 = ssub.s32 %s20, %s34
    %s177 = sor.u32 %s175, %s176
    %p178 = scmp.eq.s32.totalorder %s177, 0
    %s180 = sadd.s32 %s179, 1
    %s181 = scalar_select %p178, %s179, %s180
    %p184 = pneg %p178
    %p185 = scmp.eq.s32.totalorder %s12, 3
    %p186 = por %p184, %p185
    %p187 = scmp.ne.s32.totalorder %s179, %s182
    %p188 = scmp.eq.s32.totalorder %s12, 0
    %p189 = por %p187, %p188
    %p190 = scmp.ne.s32.totalorder %s179, %s182
    %p191 = scmp.eq.s32.totalorder %s17, 3
    %p192 = por %p190, %p191
    %p193 = scmp.ne.s32.totalorder %s182, %s183
    %p194 = scmp.eq.s32.totalorder %s17, 0
    %p195 = por %p193, %p194
    %p196 = scmp.ne.s32.totalorder %s182, %s183
    %p197 = scmp.eq.s32.totalorder %s18, 3
    %p198 = por %p196, %p197
    %p200 = scmp.ne.s32.totalorder %s183, %s199
    %p201 = scmp.eq.s32.totalorder %s18, 0
    %p202 = por %p200, %p201
    %p203 = scmp.le.s32.totalorder 1, %s12
    %p204 = scmp.lt.s32.totalorder %s12, 5
    %p205 = pnand %p203, %p204
    %p206 = pneg %p205
    // Predicated region
    $region9: #{mbconv_forward.4} parent=5 // pred_check
      _
    $region10: #{mbconv_forward.4} parent=5 // pred_check_branch
      %208 = sbr.rel (%p205) target = $region12
    $region11: #{mbconv_forward.4} parent=5 // pred_region
      %s209 = ssub.s32 %s12, 1
      // Predicated region
      $region13: #{mbconv_forward.4} parent=11 // pred_check
        %p210 = pneg %p85
      $region14: #{mbconv_forward.4} parent=11 // pred_check_branch
        %212 = sbr.rel (%p210) target = $region16
      $region15: #{mbconv_forward.4} parent=11 // pred_region
        %p213 = scmp.lt.s32.totalorder %s23, 0
        %s214 = scalar_select %p213, %s23, 0
        %s215 = smul.addr %s214, 8
        %s216 = scalar_lea.vmem %s1, %s215
      $region16: #{mbconv_forward.4} parent=11 // pred_fallthru
        _
      // Predicated region
      $region17: #{mbconv_forward.4} parent=11 // pred_check
        %p217 = pneg %p111
      $region18: #{mbconv_forward.4} parent=11 // pred_check_branch
        %219 = sbr.rel (%p217) target = $region20
      $region19: #{mbconv_forward.4} parent=11 // pred_region
        %p220 = scmp.lt.s32.totalorder %s23, 0
        %s221 = scalar_select %p220, %s23, 0
        %s222 = scalar_lea.vmem %s2, %s221
      $region20: #{mbconv_forward.4} parent=11 // pred_fallthru
        _
      // Predicated region
      $region21: #{mbconv_forward.4} parent=11 // pred_check
        %p223 = pneg %p137
      $region22: #{mbconv_forward.4} parent=11 // pred_check_branch
        %225 = sbr.rel (%p223) target = $region24
      $region23: #{mbconv_forward.4} parent=11 // pred_region
        %p226 = scmp.lt.s32.totalorder %s23, 0
        %s227 = scalar_select %p226, %s23, 0
        %s228 = scalar_lea.vmem %s3, %s227
      $region24: #{mbconv_forward.4} parent=11 // pred_fallthru
        _
    $region12: #{mbconv_forward.4} parent=5 // pred_fallthru
      _
    %p229 = scmp.lt.s32.totalorder %s12, 4
    // Predicated region
    $region25: #{mbconv_forward.4} parent=5 // pred_check
      %p230 = pneg %p229
    $region26: #{mbconv_forward.4} parent=5 // pred_check_branch
      %232 = sbr.rel (%p230) target = $region28
    $region27: #{mbconv_forward.4} parent=5 // pred_region
      // Predicated region
      $region29: #{mbconv_forward.4} parent=27 // pred_check
        %p233 = pneg %p53
      $region30: #{mbconv_forward.4} parent=27 // pred_check_branch
        %235 = sbr.rel (%p233) target = $region32
      $region31: #{mbconv_forward.4} parent=27 // pred_region
        %p236 = scmp.lt.s32.totalorder %s19, 1
        %s237 = scalar_select %p236, %s19, 1
        %p238 = scmp.lt.s32.totalorder %s20, 0
        %s239 = scalar_select %p238, %s20, 0
        %s240 = smul.addr %s237, 66
        %s241 = sadd.s32 %s239, %s240
        %s242 = smul.addr %s241, 8
        %s243 = scalar_lea.vmem %s0, %s242
      $region32: #{mbconv_forward.4} parent=27 // pred_fallthru
        _
    $region28: #{mbconv_forward.4} parent=5 // pred_fallthru
      _
    %p244 = scmp.le.s32.totalorder 1, %s12
    %p245 = scmp.lt.s32.totalorder %s12, 5
    %p246 = pnand %p244, %p245
    %p247 = pneg %p246
    // Predicated region
    $region33: #{mbconv_forward.4} parent=5 // pred_check
      _
    $region34: #{mbconv_forward.4} parent=5 // pred_check_branch
      %249 = sbr.rel (%p246) target = $region36
    $region35: #{mbconv_forward.4} parent=5 // pred_region
      %s250 = ssub.s32 %s12, 1
      %p251 = scmp.lt.s32.totalorder %s22, 1
      %s252 = scalar_select %p251, %s22, 1
      %p253 = scmp.lt.s32.totalorder %s23, 0
      %s254 = scalar_select %p253, %s23, 0
      %s255 = smul.addr %s252, 66
      %s256 = sadd.s32 %s254, %s255
      %s257 = smul.addr %s256, 8
      %s258 = scalar_lea.vmem %s0, %s257
      %p259 = pneg %p59
      %p260 = pneg %p56
      %p261 = scmp.lt.s32.totalorder %s23, 0
      %s262 = scalar_select %p261, %s23, 0
      %s263 = smul.addr %s262, 8
      %s264 = scalar_lea.vmem %s1, %s263
      %p265 = pneg %p85
      %p266 = pneg %p82
      %p267 = scmp.lt.s32.totalorder %s23, 0
      %s268 = scalar_select %p267, %s23, 0
      %s269 = scalar_lea.vmem %s2, %s268
      %p270 = pneg %p111
      %p271 = pneg %p108
      %p272 = scmp.lt.s32.totalorder %s23, 0
      %s273 = scalar_select %p272, %s23, 0
      %s274 = scalar_lea.vmem %s3, %s273
      %p275 = pneg %p137
      %p276 = pneg %p134
      %p277 = pneg %p167
      %p278 = pneg %p164
      %s279 = smul.u32 10, %s24
      %p280 = scmp.lt.s32.totalorder %s22, 1
      %s281 = scalar_select %p280, %s22, 1
      %p282 = scmp.lt.s32.totalorder %s279, 19
      %s283 = scalar_select %p282, %s279, 19
      %p284 = scmp.lt.s32.totalorder %s23, 0
      %s285 = scalar_select %p284, %s23, 0
      %s286 = smul.addr %s283, 3
      %s287 = sadd.s32 %s285, %s286
      %s288 = smul.addr %s281, 60
      %s289 = sadd.s32 %s287, %s288
      %s290 = smul.addr %s289, 8
      %s291 = scalar_lea.vmem %s4, %s290
      %p292 = pneg %p195
      %p293 = pneg %p192
      %p294 = scmp.lt.s32.totalorder %s22, 1
      %s295 = scalar_select %p294, %s22, 1
      %p296 = scmp.lt.s32.totalorder %s23, 0
      %s297 = scalar_select %p296, %s23, 0
      %s298 = sadd.s32 %s297, %s295
      %s299 = scalar_lea.vmem %s5, %s298
      %p300 = scmp.lt.s32.totalorder %s22, 1
      %s301 = scalar_select %p300, %s22, 1
      %p302 = scmp.lt.s32.totalorder %s23, 0
      %s303 = scalar_select %p302, %s23, 0
      %s304 = smul.addr %s301, 66
      %s305 = sadd.s32 %s303, %s304
      %s306 = smul.addr %s305, 8
      %s307 = scalar_lea.vmem %s0, %s306
      %p308 = scmp.lt.s32.totalorder %s23, 0
      %s309 = scalar_select %p308, %s23, 0
      %s310 = smul.addr %s309, 8
      %s311 = scalar_lea.vmem %s1, %s310
      %p312 = scmp.lt.s32.totalorder %s23, 0
      %s313 = scalar_select %p312, %s23, 0
      %s314 = scalar_lea.vmem %s2, %s313
      %p315 = scmp.lt.s32.totalorder %s23, 0
      %s316 = scalar_select %p315, %s23, 0
      %s317 = scalar_lea.vmem %s3, %s316
      %s318 = smul.u32 10, %s24
      %p319 = scmp.lt.s32.totalorder %s22, 1
      %s320 = scalar_select %p319, %s22, 1
      %p321 = scmp.lt.s32.totalorder %s318, 19
      %s322 = scalar_select %p321, %s318, 19
      %p323 = scmp.lt.s32.totalorder %s23, 0
      %s324 = scalar_select %p323, %s23, 0
      %s325 = smul.addr %s322, 3
      %s326 = sadd.s32 %s324, %s325
      %s327 = smul.addr %s320, 60
      %s328 = sadd.s32 %s326, %s327
      %s329 = smul.addr %s328, 8
      %s330 = scalar_lea.vmem %s4, %s329
      %s331 = smul.u32 10, %s24
      %p332 = scmp.lt.s32.totalorder %s22, 1
      %s333 = scalar_select %p332, %s22, 1
      %p334 = scmp.lt.s32.totalorder %s23, 0
      %s335 = scalar_select %p334, %s23, 0
      %s336 = sadd.s32 %s335, %s333
      %s337 = scalar_lea.vmem %s5, %s336
      %s338 = smul.u32 %s24, 10
      %v339 = vld [vmem:[%s311] sm:$0xff]
      %v340 = vld [vmem:[%s311 + $0x8] sm:$0x1]
      %s341 = smul.u32 %s338, 24
      %s342 = scalar_lea.vmem %s307, %s341
      %v343 = vld [vmem:[%s342] sm:$0xff]
      %v344 = vld [vmem:[%s342 + $0x8] sm:$0xff]
      %v345 = vld [vmem:[%s342 + $0x10] sm:$0xff]
      %v346 = vld [vmem:[%s342 + $0x18] sm:$0xff]
      %v347 = vld [vmem:[%s342 + $0x20] sm:$0xff]
      %v348 = vld [vmem:[%s342 + $0x28] sm:$0xff]
      %v349 = vld [vmem:[%s342 + $0x30] sm:$0xff]
      %v350 = vld [vmem:[%s342 + $0x38] sm:$0xff]
      %v351 = vld [vmem:[%s342 + $0x40] sm:$0xff]
      %v352 = vld [vmem:[%s342 + $0x48] sm:$0xff]
      %v353 = vld [vmem:[%s342 + $0x50] sm:$0xff]
      %v354 = vld [vmem:[%s342 + $0x58] sm:$0xff]
      %v355 = vld [vmem:[%s342 + $0x60] sm:$0xff]
      %v356 = vld [vmem:[%s342 + $0x68] sm:$0xff]
      %v357 = vld [vmem:[%s342 + $0x70] sm:$0xff]
      %v358 = vld [vmem:[%s342 + $0x78] sm:$0xff]
      %v359 = vld [vmem:[%s342 + $0x80] sm:$0xff]
      %v360 = vld [vmem:[%s342 + $0x88] sm:$0xff]
      %v361 = vld [vmem:[%s342 + $0x90] sm:$0xff]
      %v362 = vld [vmem:[%s342 + $0x98] sm:$0xff]
      %v363 = vld [vmem:[%s342 + $0xa0] sm:$0xff]
      %v364 = vld [vmem:[%s342 + $0xa8] sm:$0xff]
      %v365 = vld [vmem:[%s342 + $0xb0] sm:$0xff]
      %v366 = vld [vmem:[%s342 + $0xb8] sm:$0xff]
      %v367 = vld [vmem:[%s342 + $0xc0] sm:$0xff]
      %v368 = vld [vmem:[%s342 + $0xc8] sm:$0xff]
      %v369 = vld [vmem:[%s342 + $0xd0] sm:$0xff]
      %v370 = vld [vmem:[%s342 + $0xd8] sm:$0xff]
      %v371 = vld [vmem:[%s342 + $0xe0] sm:$0xff]
      %v372 = vld [vmem:[%s342 + $0xe8] sm:$0xff]
      %v373 = vld [vmem:[%s342 + $0xf0] sm:$0xff]
      %v374 = vld [vmem:[%s342 + $0xf8] sm:$0xff]
      %v375 = vld [vmem:[%s342 + $0x100] sm:$0xff]
      %v376 = vld [vmem:[%s342 + $0x108] sm:$0xff]
      %v377 = vld [vmem:[%s342 + $0x110] sm:$0xff]
      %v378 = vld [vmem:[%s342 + $0x118] sm:$0xff]
      %v379 = vlaneseq
      %v380 = vshrl.u32 %v379, 7
      %v381 = vsub.s32 0, %v380
      %v382 = vrot.slane %v339, %v381
      %v383 = vmul.f32 %v343, %v382
      %v384 = vmul.f32 %v344, %v382
      %v385 = vmul.f32 %v345, %v382
      %v386 = vmul.f32 %v346, %v382
      %v387 = vmul.f32 %v347, %v382
      %v388 = vmul.f32 %v348, %v382
      %v389 = vmul.f32 %v349, %v382
      %v390 = vmul.f32 %v350, %v382
      %v391 = vmul.f32 %v351, %v382
      %v392 = vmul.f32 %v352, %v382
      %v393 = vmul.f32 %v353, %v382
      %v394 = vmul.f32 %v354, %v382
      %v395 = vmul.f32 %v355, %v382
      %v396 = vmul.f32 %v356, %v382
      %v397 = vmul.f32 %v357, %v382
      %v398 = vmul.f32 %v358, %v382
      %v399 = vmul.f32 %v359, %v382
      %v400 = vmul.f32 %v360, %v382
      %v401 = vmul.f32 %v361, %v382
      %v402 = vmul.f32 %v362, %v382
      %v403 = vmul.f32 %v363, %v382
      %v404 = vmul.f32 %v364, %v382
      %v405 = vmul.f32 %v365, %v382
      %v406 = vmul.f32 %v366, %v382
      %v407 = vmul.f32 %v367, %v382
      %v408 = vmul.f32 %v368, %v382
      %v409 = vmul.f32 %v369, %v382
      %v410 = vmul.f32 %v370, %v382
      %v411 = vmul.f32 %v371, %v382
      %v412 = vmul.f32 %v372, %v382
      %v413 = vadd.f32 %v383, 0.0
      %v414 = vadd.f32 %v384, 0.0
      %v415 = vadd.f32 %v385, 0.0
      %v416 = vadd.f32 %v386, 0.0
      %v417 = vadd.f32 %v387, 0.0
      %v418 = vadd.f32 %v388, 0.0
      %v419 = vadd.f32 %v389, 0.0
      %v420 = vadd.f32 %v390, 0.0
      %v421 = vadd.f32 %v391, 0.0
      %v422 = vadd.f32 %v392, 0.0
      %v423 = vadd.f32 %v393, 0.0
      %v424 = vadd.f32 %v394, 0.0
      %v425 = vadd.f32 %v395, 0.0
      %v426 = vadd.f32 %v396, 0.0
      %v427 = vadd.f32 %v397, 0.0
      %v428 = vadd.f32 %v398, 0.0
      %v429 = vadd.f32 %v399, 0.0
      %v430 = vadd.f32 %v400, 0.0
      %v431 = vadd.f32 %v401, 0.0
      %v432 = vadd.f32 %v402, 0.0
      %v433 = vadd.f32 %v403, 0.0
      %v434 = vadd.f32 %v404, 0.0
      %v435 = vadd.f32 %v405, 0.0
      %v436 = vadd.f32 %v406, 0.0
      %v437 = vadd.f32 %v407, 0.0
      %v438 = vadd.f32 %v408, 0.0
      %v439 = vadd.f32 %v409, 0.0
      %v440 = vadd.f32 %v410, 0.0
      %v441 = vadd.f32 %v411, 0.0
      %v442 = vadd.f32 %v412, 0.0
      %v443 = vlaneseq
      %v444 = vshrl.u32 %v443, 7
      %v445 = vsub.s32 1, %v444
      %v446 = vrot.slane %v339, %v445
      %v447 = vmul.f32 %v343, %v446
      %v448 = vmul.f32 %v344, %v446
      %v449 = vmul.f32 %v345, %v446
      %v450 = vmul.f32 %v346, %v446
      %v451 = vmul.f32 %v347, %v446
      %v452 = vmul.f32 %v348, %v446
      %v453 = vmul.f32 %v349, %v446
      %v454 = vmul.f32 %v350, %v446
      %v455 = vmul.f32 %v351, %v446
      %v456 = vmul.f32 %v352, %v446
      %v457 = vmul.f32 %v353, %v446
      %v458 = vmul.f32 %v354, %v446
      %v459 = vmul.f32 %v355, %v446
      %v460 = vmul.f32 %v356, %v446
      %v461 = vmul.f32 %v357, %v446
      %v462 = vmul.f32 %v358, %v446
      %v463 = vmul.f32 %v359, %v446
      %v464 = vmul.f32 %v360, %v446
      %v465 = vmul.f32 %v361, %v446
      %v466 = vmul.f32 %v362, %v446
      %v467 = vmul.f32 %v363, %v446
      %v468 = vmul.f32 %v364, %v446
      %v469 = vmul.f32 %v365, %v446
      %v470 = vmul.f32 %v366, %v446
      %v471 = vmul.f32 %v367, %v446
      %v472 = vmul.f32 %v368, %v446
      %v473 = vmul.f32 %v369, %v446
      %v474 = vmul.f32 %v370, %v446
      %v475 = vmul.f32 %v371, %v446
      %v476 = vmul.f32 %v372, %v446
      %vm507 = vcmask 1046528
      %v508 = vrot.slane %v447, 1
      %v509 = vrot.slane %v448, 1
      %v510 = vsel %vm507, %v508, %v509
      %v511 = vrot.slane %v449, 1
      %v512 = vsel %vm507, %v509, %v511
      %v513 = vrot.slane %v450, 1
      %v514 = vrot.slane %v451, 1
      %v515 = vsel %vm507, %v513, %v514
      %v516 = vrot.slane %v452, 1
      %v517 = vsel %vm507, %v514, %v516
      %v518 = vrot.slane %v453, 1
      %v519 = vrot.slane %v454, 1
      %v520 = vsel %vm507, %v518, %v519
      %v521 = vrot.slane %v455, 1
      %v522 = vsel %vm507, %v519, %v521
      %v523 = vrot.slane %v456, 1
      %v524 = vrot.slane %v457, 1
      %v525 = vsel %vm507, %v523, %v524
      %v526 = vrot.slane %v458, 1
      %v527 = vsel %vm507, %v524, %v526
      %v528 = vrot.slane %v459, 1
      %v529 = vrot.slane %v460, 1
      %v530 = vsel %vm507, %v528, %v529
      %v531 = vrot.slane %v461, 1
      %v532 = vsel %vm507, %v529, %v531
      %v533 = vrot.slane %v462, 1
      %v534 = vrot.slane %v463, 1
      %v535 = vsel %vm507, %v533, %v534
      %v536 = vrot.slane %v464, 1
      %v537 = vsel %vm507, %v534, %v536
      %v538 = vrot.slane %v465, 1
      %v539 = vrot.slane %v466, 1
      %v540 = vsel %vm507, %v538, %v539
      %v541 = vrot.slane %v467, 1
      %v542 = vsel %vm507, %v539, %v541
      %v543 = vrot.slane %v468, 1
      %v544 = vrot.slane %v469, 1
      %v545 = vsel %vm507, %v543, %v544
      %v546 = vrot.slane %v470, 1
      %v547 = vsel %vm507, %v544, %v546
      %v548 = vrot.slane %v471, 1
      %v549 = vrot.slane %v472, 1
      %v550 = vsel %vm507, %v548, %v549
      %v551 = vrot.slane %v473, 1
      %v552 = vsel %vm507, %v549, %v551
      %v553 = vrot.slane %v474, 1
      %v554 = vrot.slane %v475, 1
      %v555 = vsel %vm507, %v553, %v554
      %v556 = vrot.slane %v476, 1
      %v557 = vsel %vm507, %v554, %v556
      %v588 = vadd.f32 %v413, %v510
      %v589 = vadd.f32 %v414, %v512
      %v590 = vadd.f32 %v415, %v511
      %v591 = vadd.f32 %v416, %v515
      %v592 = vadd.f32 %v417, %v517
      %v593 = vadd.f32 %v418, %v516
      %v594 = vadd.f32 %v419, %v520
      %v595 = vadd.f32 %v420, %v522
      %v596 = vadd.f32 %v421, %v521
      %v597 = vadd.f32 %v422, %v525
      %v598 = vadd.f32 %v423, %v527
      %v599 = vadd.f32 %v424, %v526
      %v600 = vadd.f32 %v425, %v530
      %v601 = vadd.f32 %v426, %v532
      %v602 = vadd.f32 %v427, %v531
      %v603 = vadd.f32 %v428, %v535
      %v604 = vadd.f32 %v429, %v537
      %v605 = vadd.f32 %v430, %v536
      %v606 = vadd.f32 %v431, %v540
      %v607 = vadd.f32 %v432, %v542
      %v608 = vadd.f32 %v433, %v541
      %v609 = vadd.f32 %v434, %v545
      %v610 = vadd.f32 %v435, %v547
      %v611 = vadd.f32 %v436, %v546
      %v612 = vadd.f32 %v437, %v550
      %v613 = vadd.f32 %v438, %v552
      %v614 = vadd.f32 %v439, %v551
      %v615 = vadd.f32 %v440, %v555
      %v616 = vadd.f32 %v441, %v557
      %v617 = vadd.f32 %v442, %v556
      %v618 = vlaneseq
      %v619 = vshrl.u32 %v618, 7
      %v620 = vsub.s32 2, %v619
      %v621 = vrot.slane %v339, %v620
      %v622 = vmul.f32 %v343, %v621
      %v623 = vmul.f32 %v344, %v621
      %v624 = vmul.f32 %v345, %v621
      %v625 = vmul.f32 %v346, %v621
      %v626 = vmul.f32 %v347, %v621
      %v627 = vmul.f32 %v348, %v621
      %v628 = vmul.f32 %v349, %v621
      %v629 = vmul.f32 %v350, %v621
      %v630 = vmul.f32 %v351, %v621
      %v631 = vmul.f32 %v352, %v621
      %v632 = vmul.f32 %v353, %v621
      %v633 = vmul.f32 %v354, %v621
      %v634 = vmul.f32 %v355, %v621
      %v635 = vmul.f32 %v356, %v621
      %v636 = vmul.f32 %v357, %v621
      %v637 = vmul.f32 %v358, %v621
      %v638 = vmul.f32 %v359, %v621
      %v639 = vmul.f32 %v360, %v621
      %v640 = vmul.f32 %v361, %v621
      %v641 = vmul.f32 %v362, %v621
      %v642 = vmul.f32 %v363, %v621
      %v643 = vmul.f32 %v364, %v621
      %v644 = vmul.f32 %v365, %v621
      %v645 = vmul.f32 %v366, %v621
      %v646 = vmul.f32 %v367, %v621
      %v647 = vmul.f32 %v368, %v621
      %v648 = vmul.f32 %v369, %v621
      %v649 = vmul.f32 %v370, %v621
      %v650 = vmul.f32 %v371, %v621
      %v651 = vmul.f32 %v372, %v621
      %vm682 = vcmask 1045504
      %v683 = vrot.slane %v622, 2
      %v684 = vrot.slane %v623, 2
      %v685 = vsel %vm682, %v683, %v684
      %v686 = vrot.slane %v624, 2
      %v687 = vsel %vm682, %v684, %v686
      %v688 = vrot.slane %v625, 2
      %v689 = vrot.slane %v626, 2
      %v690 = vsel %vm682, %v688, %v689
      %v691 = vrot.slane %v627, 2
      %v692 = vsel %vm682, %v689, %v691
      %v693 = vrot.slane %v628, 2
      %v694 = vrot.slane %v629, 2
      %v695 = vsel %vm682, %v693, %v694
      %v696 = vrot.slane %v630, 2
      %v697 = vsel %vm682, %v694, %v696
      %v698 = vrot.slane %v631, 2
      %v699 = vrot.slane %v632, 2
      %v700 = vsel %vm682, %v698, %v699
      %v701 = vrot.slane %v633, 2
      %v702 = vsel %vm682, %v699, %v701
      %v703 = vrot.slane %v634, 2
      %v704 = vrot.slane %v635, 2
      %v705 = vsel %vm682, %v703, %v704
      %v706 = vrot.slane %v636, 2
      %v707 = vsel %vm682, %v704, %v706
      %v708 = vrot.slane %v637, 2
      %v709 = vrot.slane %v638, 2
      %v710 = vsel %vm682, %v708, %v709
      %v711 = vrot.slane %v639, 2
      %v712 = vsel %vm682, %v709, %v711
      %v713 = vrot.slane %v640, 2
      %v714 = vrot.slane %v641, 2
      %v715 = vsel %vm682, %v713, %v714
      %v716 = vrot.slane %v642, 2
      %v717 = vsel %vm682, %v714, %v716
      %v718 = vrot.slane %v643, 2
      %v719 = vrot.slane %v644, 2
      %v720 = vsel %vm682, %v718, %v719
      %v721 = vrot.slane %v645, 2
      %v722 = vsel %vm682, %v719, %v721
      %v723 = vrot.slane %v646, 2
      %v724 = vrot.slane %v647, 2
      %v725 = vsel %vm682, %v723, %v724
      %v726 = vrot.slane %v648, 2
      %v727 = vsel %vm682, %v724, %v726
      %v728 = vrot.slane %v649, 2
      %v729 = vrot.slane %v650, 2
      %v730 = vsel %vm682, %v728, %v729
      %v731 = vrot.slane %v651, 2
      %v732 = vsel %vm682, %v729, %v731
      %v763 = vadd.f32 %v588, %v685
      %v764 = vadd.f32 %v589, %v687
      %v765 = vadd.f32 %v590, %v686
      %v766 = vadd.f32 %v591, %v690
      %v767 = vadd.f32 %v592, %v692
      %v768 = vadd.f32 %v593, %v691
      %v769 = vadd.f32 %v594, %v695
      %v770 = vadd.f32 %v595, %v697
      %v771 = vadd.f32 %v596, %v696
      %v772 = vadd.f32 %v597, %v700
      %v773 = vadd.f32 %v598, %v702
      %v774 = vadd.f32 %v599, %v701
      %v775 = vadd.f32 %v600, %v705
      %v776 = vadd.f32 %v601, %v707
      %v777 = vadd.f32 %v602, %v706
      %v778 = vadd.f32 %v603, %v710
      %v779 = vadd.f32 %v604, %v712
      %v780 = vadd.f32 %v605, %v711
      %v781 = vadd.f32 %v606, %v715
      %v782 = vadd.f32 %v607, %v717
      %v783 = vadd.f32 %v608, %v716
      %v784 = vadd.f32 %v609, %v720
      %v785 = vadd.f32 %v610, %v722
      %v786 = vadd.f32 %v611, %v721
      %v787 = vadd.f32 %v612, %v725
      %v788 = vadd.f32 %v613, %v727
      %v789 = vadd.f32 %v614, %v726
      %v790 = vadd.f32 %v615, %v730
      %v791 = vadd.f32 %v616, %v732
      %v792 = vadd.f32 %v617, %v731
      %v793 = vlaneseq
      %v794 = vshrl.u32 %v793, 7
      %v795 = vsub.s32 3, %v794
      %v796 = vrot.slane %v339, %v795
      %v797 = vmul.f32 %v346, %v796
      %v798 = vmul.f32 %v347, %v796
      %v799 = vmul.f32 %v348, %v796
      %v800 = vmul.f32 %v349, %v796
      %v801 = vmul.f32 %v350, %v796
      %v802 = vmul.f32 %v351, %v796
      %v803 = vmul.f32 %v352, %v796
      %v804 = vmul.f32 %v353, %v796
      %v805 = vmul.f32 %v354, %v796
      %v806 = vmul.f32 %v355, %v796
      %v807 = vmul.f32 %v356, %v796
      %v808 = vmul.f32 %v357, %v796
      %v809 = vmul.f32 %v358, %v796
      %v810 = vmul.f32 %v359, %v796
      %v811 = vmul.f32 %v360, %v796
      %v812 = vmul.f32 %v361, %v796
      %v813 = vmul.f32 %v362, %v796
      %v814 = vmul.f32 %v363, %v796
      %v815 = vmul.f32 %v364, %v796
      %v816 = vmul.f32 %v365, %v796
      %v817 = vmul.f32 %v366, %v796
      %v818 = vmul.f32 %v367, %v796
      %v819 = vmul.f32 %v368, %v796
      %v820 = vmul.f32 %v369, %v796
      %v821 = vmul.f32 %v370, %v796
      %v822 = vmul.f32 %v371, %v796
      %v823 = vmul.f32 %v372, %v796
      %v824 = vmul.f32 %v373, %v796
      %v825 = vmul.f32 %v374, %v796
      %v826 = vmul.f32 %v375, %v796
      %v827 = vadd.f32 %v763, %v797
      %v828 = vadd.f32 %v764, %v798
      %v829 = vadd.f32 %v765, %v799
      %v830 = vadd.f32 %v766, %v800
      %v831 = vadd.f32 %v767, %v801
      %v832 = vadd.f32 %v768, %v802
      %v833 = vadd.f32 %v769, %v803
      %v834 = vadd.f32 %v770, %v804
      %v835 = vadd.f32 %v771, %v805
      %v836 = vadd.f32 %v772, %v806
      %v837 = vadd.f32 %v773, %v807
      %v838 = vadd.f32 %v774, %v808
      %v839 = vadd.f32 %v775, %v809
      %v840 = vadd.f32 %v776, %v810
      %v841 = vadd.f32 %v777, %v811
      %v842 = vadd.f32 %v778, %v812
      %v843 = vadd.f32 %v779, %v813
      %v844 = vadd.f32 %v780, %v814
      %v845 = vadd.f32 %v781, %v815
      %v846 = vadd.f32 %v782, %v816
      %v847 = vadd.f32 %v783, %v817
      %v848 = vadd.f32 %v784, %v818
      %v849 = vadd.f32 %v785, %v819
      %v850 = vadd.f32 %v786, %v820
      %v851 = vadd.f32 %v787, %v821
      %v852 = vadd.f32 %v788, %v822
      %v853 = vadd.f32 %v789, %v823
      %v854 = vadd.f32 %v790, %v824
      %v855 = vadd.f32 %v791, %v825
      %v856 = vadd.f32 %v792, %v826
      %v857 = vlaneseq
      %v858 = vshrl.u32 %v857, 7
      %v859 = vsub.s32 4, %v858
      %v860 = vrot.slane %v339, %v859
      %v861 = vmul.f32 %v346, %v860
      %v862 = vmul.f32 %v347, %v860
      %v863 = vmul.f32 %v348, %v860
      %v864 = vmul.f32 %v349, %v860
      %v865 = vmul.f32 %v350, %v860
      %v866 = vmul.f32 %v351, %v860
      %v867 = vmul.f32 %v352, %v860
      %v868 = vmul.f32 %v353, %v860
      %v869 = vmul.f32 %v354, %v860
      %v870 = vmul.f32 %v355, %v860
      %v871 = vmul.f32 %v356, %v860
      %v872 = vmul.f32 %v357, %v860
      %v873 = vmul.f32 %v358, %v860
      %v874 = vmul.f32 %v359, %v860
      %v875 = vmul.f32 %v360, %v860
      %v876 = vmul.f32 %v361, %v860
      %v877 = vmul.f32 %v362, %v860
      %v878 = vmul.f32 %v363, %v860
      %v879 = vmul.f32 %v364, %v860
      %v880 = vmul.f32 %v365, %v860
      %v881 = vmul.f32 %v366, %v860
      %v882 = vmul.f32 %v367, %v860
      %v883 = vmul.f32 %v368, %v860
      %v884 = vmul.f32 %v369, %v860
      %v885 = vmul.f32 %v370, %v860
      %v886 = vmul.f32 %v371, %v860
      %v887 = vmul.f32 %v372, %v860
      %v888 = vmul.f32 %v373, %v860
      %v889 = vmul.f32 %v374, %v860
      %v890 = vmul.f32 %v375, %v860
      %v921 = vrot.slane %v861, 1
      %v922 = vrot.slane %v862, 1
      %v923 = vsel %vm507, %v921, %v922
      %v924 = vrot.slane %v863, 1
      %v925 = vsel %vm507, %v922, %v924
      %v926 = vrot.slane %v864, 1
      %v927 = vrot.slane %v865, 1
      %v928 = vsel %vm507, %v926, %v927
      %v929 = vrot.slane %v866, 1
      %v930 = vsel %vm507, %v927, %v929
      %v931 = vrot.slane %v867, 1
      %v932 = vrot.slane %v868, 1
      %v933 = vsel %vm507, %v931, %v932
      %v934 = vrot.slane %v869, 1
      %v935 = vsel %vm507, %v932, %v934
      %v936 = vrot.slane %v870, 1
      %v937 = vrot.slane %v871, 1
      %v938 = vsel %vm507, %v936, %v937
      %v939 = vrot.slane %v872, 1
      %v940 = vsel %vm507, %v937, %v939
      %v941 = vrot.slane %v873, 1
      %v942 = vrot.slane %v874, 1
      %v943 = vsel %vm507, %v941, %v942
      %v944 = vrot.slane %v875, 1
      %v945 = vsel %vm507, %v942, %v944
      %v946 = vrot.slane %v876, 1
      %v947 = vrot.slane %v877, 1
      %v948 = vsel %vm507, %v946, %v947
      %v949 = vrot.slane %v878, 1
      %v950 = vsel %vm507, %v947, %v949
      %v951 = vrot.slane %v879, 1
      %v952 = vrot.slane %v880, 1
      %v953 = vsel %vm507, %v951, %v952
      %v954 = vrot.slane %v881, 1
      %v955 = vsel %vm507, %v952, %v954
      %v956 = vrot.slane %v882, 1
      %v957 = vrot.slane %v883, 1
      %v958 = vsel %vm507, %v956, %v957
      %v959 = vrot.slane %v884, 1
      %v960 = vsel %vm507, %v957, %v959
      %v961 = vrot.slane %v885, 1
      %v962 = vrot.slane %v886, 1
      %v963 = vsel %vm507, %v961, %v962
      %v964 = vrot.slane %v887, 1
      %v965 = vsel %vm507, %v962, %v964
      %v966 = vrot.slane %v888, 1
      %v967 = vrot.slane %v889, 1
      %v968 = vsel %vm507, %v966, %v967
      %v969 = vrot.slane %v890, 1
      %v970 = vsel %vm507, %v967, %v969
      %v1001 = vadd.f32 %v827, %v923
      %v1002 = vadd.f32 %v828, %v925
      %v1003 = vadd.f32 %v829, %v924
      %v1004 = vadd.f32 %v830, %v928
      %v1005 = vadd.f32 %v831, %v930
      %v1006 = vadd.f32 %v832, %v929
      %v1007 = vadd.f32 %v833, %v933
      %v1008 = vadd.f32 %v834, %v935
      %v1009 = vadd.f32 %v835, %v934
      %v1010 = vadd.f32 %v836, %v938
      %v1011 = vadd.f32 %v837, %v940
      %v1012 = vadd.f32 %v838, %v939
      %v1013 = vadd.f32 %v839, %v943
      %v1014 = vadd.f32 %v840, %v945
      %v1015 = vadd.f32 %v841, %v944
      %v1016 = vadd.f32 %v842, %v948
      %v1017 = vadd.f32 %v843, %v950
      %v1018 = vadd.f32 %v844, %v949
      %v1019 = vadd.f32 %v845, %v953
      %v1020 = vadd.f32 %v846, %v955
      %v1021 = vadd.f32 %v847, %v954
      %v1022 = vadd.f32 %v848, %v958
      %v1023 = vadd.f32 %v849, %v960
      %v1024 = vadd.f32 %v850, %v959
      %v1025 = vadd.f32 %v851, %v963
      %v1026 = vadd.f32 %v852, %v965
      %v1027 = vadd.f32 %v853, %v964
      %v1028 = vadd.f32 %v854, %v968
      %v1029 = vadd.f32 %v855, %v970
      %v1030 = vadd.f32 %v856, %v969
      %v1031 = vlaneseq
      %v1032 = vshrl.u32 %v1031, 7
      %v1033 = vsub.s32 5, %v1032
      %v1034 = vrot.slane %v339, %v1033
      %v1035 = vmul.f32 %v346, %v1034
      %v1036 = vmul.f32 %v347, %v1034
      %v1037 = vmul.f32 %v348, %v1034
      %v1038 = vmul.f32 %v349, %v1034
      %v1039 = vmul.f32 %v350, %v1034
      %v1040 = vmul.f32 %v351, %v1034
      %v1041 = vmul.f32 %v352, %v1034
      %v1042 = vmul.f32 %v353, %v1034
      %v1043 = vmul.f32 %v354, %v1034
      %v1044 = vmul.f32 %v355, %v1034
      %v1045 = vmul.f32 %v356, %v1034
      %v1046 = vmul.f32 %v357, %v1034
      %v1047 = vmul.f32 %v358, %v1034
      %v1048 = vmul.f32 %v359, %v1034
      %v1049 = vmul.f32 %v360, %v1034
      %v1050 = vmul.f32 %v361, %v1034
      %v1051 = vmul.f32 %v362, %v1034
      %v1052 = vmul.f32 %v363, %v1034
      %v1053 = vmul.f32 %v364, %v1034
      %v1054 = vmul.f32 %v365, %v1034
      %v1055 = vmul.f32 %v366, %v1034
      %v1056 = vmul.f32 %v367, %v1034
      %v1057 = vmul.f32 %v368, %v1034
      %v1058 = vmul.f32 %v369, %v1034
      %v1059 = vmul.f32 %v370, %v1034
      %v1060 = vmul.f32 %v371, %v1034
      %v1061 = vmul.f32 %v372, %v1034
      %v1062 = vmul.f32 %v373, %v1034
      %v1063 = vmul.f32 %v374, %v1034
      %v1064 = vmul.f32 %v375, %v1034
      %v1095 = vrot.slane %v1035, 2
      %v1096 = vrot.slane %v1036, 2
      %v1097 = vsel %vm682, %v1095, %v1096
      %v1098 = vrot.slane %v1037, 2
      %v1099 = vsel %vm682, %v1096, %v1098
      %v1100 = vrot.slane %v1038, 2
      %v1101 = vrot.slane %v1039, 2
      %v1102 = vsel %vm682, %v1100, %v1101
      %v1103 = vrot.slane %v1040, 2
      %v1104 = vsel %vm682, %v1101, %v1103
      %v1105 = vrot.slane %v1041, 2
      %v1106 = vrot.slane %v1042, 2
      %v1107 = vsel %vm682, %v1105, %v1106
      %v1108 = vrot.slane %v1043, 2
      %v1109 = vsel %vm682, %v1106, %v1108
      %v1110 = vrot.slane %v1044, 2
      %v1111 = vrot.slane %v1045, 2
      %v1112 = vsel %vm682, %v1110, %v1111
      %v1113 = vrot.slane %v1046, 2
      %v1114 = vsel %vm682, %v1111, %v1113
      %v1115 = vrot.slane %v1047, 2
      %v1116 = vrot.slane %v1048, 2
      %v1117 = vsel %vm682, %v1115, %v1116
      %v1118 = vrot.slane %v1049, 2
      %v1119 = vsel %vm682, %v1116, %v1118
      %v1120 = vrot.slane %v1050, 2
      %v1121 = vrot.slane %v1051, 2
      %v1122 = vsel %vm682, %v1120, %v1121
      %v1123 = vrot.slane %v1052, 2
      %v1124 = vsel %vm682, %v1121, %v1123
      %v1125 = vrot.slane %v1053, 2
      %v1126 = vrot.slane %v1054, 2
      %v1127 = vsel %vm682, %v1125, %v1126
      %v1128 = vrot.slane %v1055, 2
      %v1129 = vsel %vm682, %v1126, %v1128
      %v1130 = vrot.slane %v1056, 2
      %v1131 = vrot.slane %v1057, 2
      %v1132 = vsel %vm682, %v1130, %v1131
      %v1133 = vrot.slane %v1058, 2
      %v1134 = vsel %vm682, %v1131, %v1133
      %v1135 = vrot.slane %v1059, 2
      %v1136 = vrot.slane %v1060, 2
      %v1137 = vsel %vm682, %v1135, %v1136
      %v1138 = vrot.slane %v1061, 2
      %v1139 = vsel %vm682, %v1136, %v1138
      %v1140 = vrot.slane %v1062, 2
      %v1141 = vrot.slane %v1063, 2
      %v1142 = vsel %vm682, %v1140, %v1141
      %v1143 = vrot.slane %v1064, 2
      %v1144 = vsel %vm682, %v1141, %v1143
      %v1175 = vadd.f32 %v1001, %v1097
      %v1176 = vadd.f32 %v1002, %v1099
      %v1177 = vadd.f32 %v1003, %v1098
      %v1178 = vadd.f32 %v1004, %v1102
      %v1179 = vadd.f32 %v1005, %v1104
      %v1180 = vadd.f32 %v1006, %v1103
      %v1181 = vadd.f32 %v1007, %v1107
      %v1182 = vadd.f32 %v1008, %v1109
      %v1183 = vadd.f32 %v1009, %v1108
      %v1184 = vadd.f32 %v1010, %v1112
      %v1185 = vadd.f32 %v1011, %v1114
      %v1186 = vadd.f32 %v1012, %v1113
      %v1187 = vadd.f32 %v1013, %v1117
      %v1188 = vadd.f32 %v1014, %v1119
      %v1189 = vadd.f32 %v1015, %v1118
      %v1190 = vadd.f32 %v1016, %v1122
      %v1191 = vadd.f32 %v1017, %v1124
      %v1192 = vadd.f32 %v1018, %v1123
      %v1193 = vadd.f32 %v1019, %v1127
      %v1194 = vadd.f32 %v1020, %v1129
      %v1195 = vadd.f32 %v1021, %v1128
      %v1196 = vadd.f32 %v1022, %v1132
      %v1197 = vadd.f32 %v1023, %v1134
      %v1198 = vadd.f32 %v1024, %v1133
      %v1199 = vadd.f32 %v1025, %v1137
      %v1200 = vadd.f32 %v1026, %v1139
      %v1201 = vadd.f32 %v1027, %v1138
      %v1202 = vadd.f32 %v1028, %v1142
      %v1203 = vadd.f32 %v1029, %v1144
      %v1204 = vadd.f32 %v1030, %v1143
      %v1205 = vlaneseq
      %v1206 = vshrl.u32 %v1205, 7
      %v1207 = vsub.s32 6, %v1206
      %v1208 = vrot.slane %v339, %v1207
      %v1209 = vmul.f32 %v349, %v1208
      %v1210 = vmul.f32 %v350, %v1208
      %v1211 = vmul.f32 %v351, %v1208
      %v1212 = vmul.f32 %v352, %v1208
      %v1213 = vmul.f32 %v353, %v1208
      %v1214 = vmul.f32 %v354, %v1208
      %v1215 = vmul.f32 %v355, %v1208
      %v1216 = vmul.f32 %v356, %v1208
      %v1217 = vmul.f32 %v357, %v1208
      %v1218 = vmul.f32 %v358, %v1208
      %v1219 = vmul.f32 %v359, %v1208
      %v1220 = vmul.f32 %v360, %v1208
      %v1221 = vmul.f32 %v361, %v1208
      %v1222 = vmul.f32 %v362, %v1208
      %v1223 = vmul.f32 %v363, %v1208
      %v1224 = vmul.f32 %v364, %v1208
      %v1225 = vmul.f32 %v365, %v1208
      %v1226 = vmul.f32 %v366, %v1208
      %v1227 = vmul.f32 %v367, %v1208
      %v1228 = vmul.f32 %v368, %v1208
      %v1229 = vmul.f32 %v369, %v1208
      %v1230 = vmul.f32 %v370, %v1208
      %v1231 = vmul.f32 %v371, %v1208
      %v1232 = vmul.f32 %v372, %v1208
      %v1233 = vmul.f32 %v373, %v1208
      %v1234 = vmul.f32 %v374, %v1208
      %v1235 = vmul.f32 %v375, %v1208
      %v1236 = vmul.f32 %v376, %v1208
      %v1237 = vmul.f32 %v377, %v1208
      %v1238 = vmul.f32 %v378, %v1208
      %v1239 = vadd.f32 %v1175, %v1209
      %v1240 = vadd.f32 %v1176, %v1210
      %v1241 = vadd.f32 %v1177, %v1211
      %v1242 = vadd.f32 %v1178, %v1212
      %v1243 = vadd.f32 %v1179, %v1213
      %v1244 = vadd.f32 %v1180, %v1214
      %v1245 = vadd.f32 %v1181, %v1215
      %v1246 = vadd.f32 %v1182, %v1216
      %v1247 = vadd.f32 %v1183, %v1217
      %v1248 = vadd.f32 %v1184, %v1218
      %v1249 = vadd.f32 %v1185, %v1219
      %v1250 = vadd.f32 %v1186, %v1220
      %v1251 = vadd.f32 %v1187, %v1221
      %v1252 = vadd.f32 %v1188, %v1222
      %v1253 = vadd.f32 %v1189, %v1223
      %v1254 = vadd.f32 %v1190, %v1224
      %v1255 = vadd.f32 %v1191, %v1225
      %v1256 = vadd.f32 %v1192, %v1226
      %v1257 = vadd.f32 %v1193, %v1227
      %v1258 = vadd.f32 %v1194, %v1228
      %v1259 = vadd.f32 %v1195, %v1229
      %v1260 = vadd.f32 %v1196, %v1230
      %v1261 = vadd.f32 %v1197, %v1231
      %v1262 = vadd.f32 %v1198, %v1232
      %v1263 = vadd.f32 %v1199, %v1233
      %v1264 = vadd.f32 %v1200, %v1234
      %v1265 = vadd.f32 %v1201, %v1235
      %v1266 = vadd.f32 %v1202, %v1236
      %v1267 = vadd.f32 %v1203, %v1237
      %v1268 = vadd.f32 %v1204, %v1238
      %v1269 = vlaneseq
      %v1270 = vshrl.u32 %v1269, 7
      %v1271 = vsub.s32 7, %v1270
      %v1272 = vrot.slane %v339, %v1271
      %v1273 = vmul.f32 %v349, %v1272
      %v1274 = vmul.f32 %v350, %v1272
      %v1275 = vmul.f32 %v351, %v1272
      %v1276 = vmul.f32 %v352, %v1272
      %v1277 = vmul.f32 %v353, %v1272
      %v1278 = vmul.f32 %v354, %v1272
      %v1279 = vmul.f32 %v355, %v1272
      %v1280 = vmul.f32 %v356, %v1272
      %v1281 = vmul.f32 %v357, %v1272
      %v1282 = vmul.f32 %v358, %v1272
      %v1283 = vmul.f32 %v359, %v1272
      %v1284 = vmul.f32 %v360, %v1272
      %v1285 = vmul.f32 %v361, %v1272
      %v1286 = vmul.f32 %v362, %v1272
      %v1287 = vmul.f32 %v363, %v1272
      %v1288 = vmul.f32 %v364, %v1272
      %v1289 = vmul.f32 %v365, %v1272
      %v1290 = vmul.f32 %v366, %v1272
      %v1291 = vmul.f32 %v367, %v1272
      %v1292 = vmul.f32 %v368, %v1272
      %v1293 = vmul.f32 %v369, %v1272
      %v1294 = vmul.f32 %v370, %v1272
      %v1295 = vmul.f32 %v371, %v1272
      %v1296 = vmul.f32 %v372, %v1272
      %v1297 = vmul.f32 %v373, %v1272
      %v1298 = vmul.f32 %v374, %v1272
      %v1299 = vmul.f32 %v375, %v1272
      %v1300 = vmul.f32 %v376, %v1272
      %v1301 = vmul.f32 %v377, %v1272
      %v1302 = vmul.f32 %v378, %v1272
      %v1333 = vrot.slane %v1273, 1
      %v1334 = vrot.slane %v1274, 1
      %v1335 = vsel %vm507, %v1333, %v1334
      %v1336 = vrot.slane %v1275, 1
      %v1337 = vsel %vm507, %v1334, %v1336
      %v1338 = vrot.slane %v1276, 1
      %v1339 = vrot.slane %v1277, 1
      %v1340 = vsel %vm507, %v1338, %v1339
      %v1341 = vrot.slane %v1278, 1
      %v1342 = vsel %vm507, %v1339, %v1341
      %v1343 = vrot.slane %v1279, 1
      %v1344 = vrot.slane %v1280, 1
      %v1345 = vsel %vm507, %v1343, %v1344
      %v1346 = vrot.slane %v1281, 1
      %v1347 = vsel %vm507, %v1344, %v1346
      %v1348 = vrot.slane %v1282, 1
      %v1349 = vrot.slane %v1283, 1
      %v1350 = vsel %vm507, %v1348, %v1349
      %v1351 = vrot.slane %v1284, 1
      %v1352 = vsel %vm507, %v1349, %v1351
      %v1353 = vrot.slane %v1285, 1
      %v1354 = vrot.slane %v1286, 1
      %v1355 = vsel %vm507, %v1353, %v1354
      %v1356 = vrot.slane %v1287, 1
      %v1357 = vsel %vm507, %v1354, %v1356
      %v1358 = vrot.slane %v1288, 1
      %v1359 = vrot.slane %v1289, 1
      %v1360 = vsel %vm507, %v1358, %v1359
      %v1361 = vrot.slane %v1290, 1
      %v1362 = vsel %vm507, %v1359, %v1361
      %v1363 = vrot.slane %v1291, 1
      %v1364 = vrot.slane %v1292, 1
      %v1365 = vsel %vm507, %v1363, %v1364
      %v1366 = vrot.slane %v1293, 1
      %v1367 = vsel %vm507, %v1364, %v1366
      %v1368 = vrot.slane %v1294, 1
      %v1369 = vrot.slane %v1295, 1
      %v1370 = vsel %vm507, %v1368, %v1369
      %v1371 = vrot.slane %v1296, 1
      %v1372 = vsel %vm507, %v1369, %v1371
      %v1373 = vrot.slane %v1297, 1
      %v1374 = vrot.slane %v1298, 1
      %v1375 = vsel %vm507, %v1373, %v1374
      %v1376 = vrot.slane %v1299, 1
      %v1377 = vsel %vm507, %v1374, %v1376
      %v1378 = vrot.slane %v1300, 1
      %v1379 = vrot.slane %v1301, 1
      %v1380 = vsel %vm507, %v1378, %v1379
      %v1381 = vrot.slane %v1302, 1
      %v1382 = vsel %vm507, %v1379, %v1381
      %v1413 = vadd.f32 %v1239, %v1335
      %v1414 = vadd.f32 %v1240, %v1337
      %v1415 = vadd.f32 %v1241, %v1336
      %v1416 = vadd.f32 %v1242, %v1340
      %v1417 = vadd.f32 %v1243, %v1342
      %v1418 = vadd.f32 %v1244, %v1341
      %v1419 = vadd.f32 %v1245, %v1345
      %v1420 = vadd.f32 %v1246, %v1347
      %v1421 = vadd.f32 %v1247, %v1346
      %v1422 = vadd.f32 %v1248, %v1350
      %v1423 = vadd.f32 %v1249, %v1352
      %v1424 = vadd.f32 %v1250, %v1351
      %v1425 = vadd.f32 %v1251, %v1355
      %v1426 = vadd.f32 %v1252, %v1357
      %v1427 = vadd.f32 %v1253, %v1356
      %v1428 = vadd.f32 %v1254, %v1360
      %v1429 = vadd.f32 %v1255, %v1362
      %v1430 = vadd.f32 %v1256, %v1361
      %v1431 = vadd.f32 %v1257, %v1365
      %v1432 = vadd.f32 %v1258, %v1367
      %v1433 = vadd.f32 %v1259, %v1366
      %v1434 = vadd.f32 %v1260, %v1370
      %v1435 = vadd.f32 %v1261, %v1372
      %v1436 = vadd.f32 %v1262, %v1371
      %v1437 = vadd.f32 %v1263, %v1375
      %v1438 = vadd.f32 %v1264, %v1377
      %v1439 = vadd.f32 %v1265, %v1376
      %v1440 = vadd.f32 %v1266, %v1380
      %v1441 = vadd.f32 %v1267, %v1382
      %v1442 = vadd.f32 %v1268, %v1381
      %v1443 = vlaneseq
      %v1444 = vshrl.u32 %v1443, 7
      %v1445 = vsub.s32 0, %v1444
      %v1446 = vrot.slane %v340, %v1445
      %v1447 = vmul.f32 %v349, %v1446
      %v1448 = vmul.f32 %v350, %v1446
      %v1449 = vmul.f32 %v351, %v1446
      %v1450 = vmul.f32 %v352, %v1446
      %v1451 = vmul.f32 %v353, %v1446
      %v1452 = vmul.f32 %v354, %v1446
      %v1453 = vmul.f32 %v355, %v1446
      %v1454 = vmul.f32 %v356, %v1446
      %v1455 = vmul.f32 %v357, %v1446
      %v1456 = vmul.f32 %v358, %v1446
      %v1457 = vmul.f32 %v359, %v1446
      %v1458 = vmul.f32 %v360, %v1446
      %v1459 = vmul.f32 %v361, %v1446
      %v1460 = vmul.f32 %v362, %v1446
      %v1461 = vmul.f32 %v363, %v1446
      %v1462 = vmul.f32 %v364, %v1446
      %v1463 = vmul.f32 %v365, %v1446
      %v1464 = vmul.f32 %v366, %v1446
      %v1465 = vmul.f32 %v367, %v1446
      %v1466 = vmul.f32 %v368, %v1446
      %v1467 = vmul.f32 %v369, %v1446
      %v1468 = vmul.f32 %v370, %v1446
      %v1469 = vmul.f32 %v371, %v1446
      %v1470 = vmul.f32 %v372, %v1446
      %v1471 = vmul.f32 %v373, %v1446
      %v1472 = vmul.f32 %v374, %v1446
      %v1473 = vmul.f32 %v375, %v1446
      %v1474 = vmul.f32 %v376, %v1446
      %v1475 = vmul.f32 %v377, %v1446
      %v1476 = vmul.f32 %v378, %v1446
      %v1507 = vrot.slane %v1447, 2
      %v1508 = vrot.slane %v1448, 2
      %v1509 = vsel %vm682, %v1507, %v1508
      %v1510 = vrot.slane %v1449, 2
      %v1511 = vsel %vm682, %v1508, %v1510
      %v1512 = vrot.slane %v1450, 2
      %v1513 = vrot.slane %v1451, 2
      %v1514 = vsel %vm682, %v1512, %v1513
      %v1515 = vrot.slane %v1452, 2
      %v1516 = vsel %vm682, %v1513, %v1515
      %v1517 = vrot.slane %v1453, 2
      %v1518 = vrot.slane %v1454, 2
      %v1519 = vsel %vm682, %v1517, %v1518
      %v1520 = vrot.slane %v1455, 2
      %v1521 = vsel %vm682, %v1518, %v1520
      %v1522 = vrot.slane %v1456, 2
      %v1523 = vrot.slane %v1457, 2
      %v1524 = vsel %vm682, %v1522, %v1523
      %v1525 = vrot.slane %v1458, 2
      %v1526 = vsel %vm682, %v1523, %v1525
      %v1527 = vrot.slane %v1459, 2
      %v1528 = vrot.slane %v1460, 2
      %v1529 = vsel %vm682, %v1527, %v1528
      %v1530 = vrot.slane %v1461, 2
      %v1531 = vsel %vm682, %v1528, %v1530
      %v1532 = vrot.slane %v1462, 2
      %v1533 = vrot.slane %v1463, 2
      %v1534 = vsel %vm682, %v1532, %v1533
      %v1535 = vrot.slane %v1464, 2
      %v1536 = vsel %vm682, %v1533, %v1535
      %v1537 = vrot.slane %v1465, 2
      %v1538 = vrot.slane %v1466, 2
      %v1539 = vsel %vm682, %v1537, %v1538
      %v1540 = vrot.slane %v1467, 2
      %v1541 = vsel %vm682, %v1538, %v1540
      %v1542 = vrot.slane %v1468, 2
      %v1543 = vrot.slane %v1469, 2
      %v1544 = vsel %vm682, %v1542, %v1543
      %v1545 = vrot.slane %v1470, 2
      %v1546 = vsel %vm682, %v1543, %v1545
      %v1547 = vrot.slane %v1471, 2
      %v1548 = vrot.slane %v1472, 2
      %v1549 = vsel %vm682, %v1547, %v1548
      %v1550 = vrot.slane %v1473, 2
      %v1551 = vsel %vm682, %v1548, %v1550
      %v1552 = vrot.slane %v1474, 2
      %v1553 = vrot.slane %v1475, 2
      %v1554 = vsel %vm682, %v1552, %v1553
      %v1555 = vrot.slane %v1476, 2
      %v1556 = vsel %vm682, %v1553, %v1555
      %v1587 = vadd.f32 %v1413, %v1509
      %v1588 = vadd.f32 %v1414, %v1511
      %v1589 = vadd.f32 %v1415, %v1510
      %v1590 = vadd.f32 %v1416, %v1514
      %v1591 = vadd.f32 %v1417, %v1516
      %v1592 = vadd.f32 %v1418, %v1515
      %v1593 = vadd.f32 %v1419, %v1519
      %v1594 = vadd.f32 %v1420, %v1521
      %v1595 = vadd.f32 %v1421, %v1520
      %v1596 = vadd.f32 %v1422, %v1524
      %v1597 = vadd.f32 %v1423, %v1526
      %v1598 = vadd.f32 %v1424, %v1525
      %v1599 = vadd.f32 %v1425, %v1529
      %v1600 = vadd.f32 %v1426, %v1531
      %v1601 = vadd.f32 %v1427, %v1530
      %v1602 = vadd.f32 %v1428, %v1534
      %v1603 = vadd.f32 %v1429, %v1536
      %v1604 = vadd.f32 %v1430, %v1535
      %v1605 = vadd.f32 %v1431, %v1539
      %v1606 = vadd.f32 %v1432, %v1541
      %v1607 = vadd.f32 %v1433, %v1540
      %v1608 = vadd.f32 %v1434, %v1544
      %v1609 = vadd.f32 %v1435, %v1546
      %v1610 = vadd.f32 %v1436, %v1545
      %v1611 = vadd.f32 %v1437, %v1549
      %v1612 = vadd.f32 %v1438, %v1551
      %v1613 = vadd.f32 %v1439, %v1550
      %v1614 = vadd.f32 %v1440, %v1554
      %v1615 = vadd.f32 %v1441, %v1556
      %v1616 = vadd.f32 %v1442, %v1555
      %v1617 = vld [vmem:[%s314] sm:$0x1]
      %v1619 = vlaneseq
      %v1620 = vshrl.u32 %v1619, 7
      %v1621 = vsub.s32 0, %v1620
      %v1622 = vrot.slane %v1617, %v1621
      %v1624 = vmul.f32 %v1587, %v1622
      %v1625 = vmul.f32 %v1588, %v1622
      %v1626 = vmul.f32 %v1589, %v1622
      %v1627 = vmul.f32 %v1590, %v1622
      %v1628 = vmul.f32 %v1591, %v1622
      %v1629 = vmul.f32 %v1592, %v1622
      %v1630 = vmul.f32 %v1593, %v1622
      %v1631 = vmul.f32 %v1594, %v1622
      %v1632 = vmul.f32 %v1595, %v1622
      %v1633 = vmul.f32 %v1596, %v1622
      %v1634 = vmul.f32 %v1597, %v1622
      %v1635 = vmul.f32 %v1598, %v1622
      %v1636 = vmul.f32 %v1599, %v1622
      %v1637 = vmul.f32 %v1600, %v1622
      %v1638 = vmul.f32 %v1601, %v1622
      %v1639 = vmul.f32 %v1602, %v1622
      %v1640 = vmul.f32 %v1603, %v1622
      %v1641 = vmul.f32 %v1604, %v1622
      %v1642 = vmul.f32 %v1605, %v1622
      %v1643 = vmul.f32 %v1606, %v1622
      %v1644 = vmul.f32 %v1607, %v1622
      %v1645 = vmul.f32 %v1608, %v1622
      %v1646 = vmul.f32 %v1609, %v1622
      %v1647 = vmul.f32 %v1610, %v1622
      %v1648 = vmul.f32 %v1611, %v1622
      %v1649 = vmul.f32 %v1612, %v1622
      %v1650 = vmul.f32 %v1613, %v1622
      %v1651 = vmul.f32 %v1614, %v1622
      %v1652 = vmul.f32 %v1615, %v1622
      %v1653 = vmul.f32 %v1616, %v1622
      %v1654 = vld [vmem:[%s317] sm:$0x1]
      %v1656 = vlaneseq
      %v1657 = vshrl.u32 %v1656, 7
      %v1658 = vsub.s32 0, %v1657
      %v1659 = vrot.slane %v1654, %v1658
      %v1661 = vadd.f32 %v1624, %v1659
      %v1662 = vadd.f32 %v1625, %v1659
      %v1663 = vadd.f32 %v1626, %v1659
      %v1664 = vadd.f32 %v1627, %v1659
      %v1665 = vadd.f32 %v1628, %v1659
      %v1666 = vadd.f32 %v1629, %v1659
      %v1667 = vadd.f32 %v1630, %v1659
      %v1668 = vadd.f32 %v1631, %v1659
      %v1669 = vadd.f32 %v1632, %v1659
      %v1670 = vadd.f32 %v1633, %v1659
      %v1671 = vadd.f32 %v1634, %v1659
      %v1672 = vadd.f32 %v1635, %v1659
      %v1673 = vadd.f32 %v1636, %v1659
      %v1674 = vadd.f32 %v1637, %v1659
      %v1675 = vadd.f32 %v1638, %v1659
      %v1676 = vadd.f32 %v1639, %v1659
      %v1677 = vadd.f32 %v1640, %v1659
      %v1678 = vadd.f32 %v1641, %v1659
      %v1679 = vadd.f32 %v1642, %v1659
      %v1680 = vadd.f32 %v1643, %v1659
      %v1681 = vadd.f32 %v1644, %v1659
      %v1682 = vadd.f32 %v1645, %v1659
      %v1683 = vadd.f32 %v1646, %v1659
      %v1684 = vadd.f32 %v1647, %v1659
      %v1685 = vadd.f32 %v1648, %v1659
      %v1686 = vadd.f32 %v1649, %v1659
      %v1687 = vadd.f32 %v1650, %v1659
      %v1688 = vadd.f32 %v1651, %v1659
      %v1689 = vadd.f32 %v1652, %v1659
      %v1690 = vadd.f32 %v1653, %v1659
      %v1691 = vmul.f32 %v1661, 0.5
      %v1692 = vmul.f32 %v1662, 0.5
      %v1693 = vmul.f32 %v1663, 0.5
      %v1694 = vmul.f32 %v1664, 0.5
      %v1695 = vmul.f32 %v1665, 0.5
      %v1696 = vmul.f32 %v1666, 0.5
      %v1697 = vmul.f32 %v1667, 0.5
      %v1698 = vmul.f32 %v1668, 0.5
      %v1699 = vmul.f32 %v1669, 0.5
      %v1700 = vmul.f32 %v1670, 0.5
      %v1701 = vmul.f32 %v1671, 0.5
      %v1702 = vmul.f32 %v1672, 0.5
      %v1703 = vmul.f32 %v1673, 0.5
      %v1704 = vmul.f32 %v1674, 0.5
      %v1705 = vmul.f32 %v1675, 0.5
      %v1706 = vmul.f32 %v1676, 0.5
      %v1707 = vmul.f32 %v1677, 0.5
      %v1708 = vmul.f32 %v1678, 0.5
      %v1709 = vmul.f32 %v1679, 0.5
      %v1710 = vmul.f32 %v1680, 0.5
      %v1711 = vmul.f32 %v1681, 0.5
      %v1712 = vmul.f32 %v1682, 0.5
      %v1713 = vmul.f32 %v1683, 0.5
      %v1714 = vmul.f32 %v1684, 0.5
      %v1715 = vmul.f32 %v1685, 0.5
      %v1716 = vmul.f32 %v1686, 0.5
      %v1717 = vmul.f32 %v1687, 0.5
      %v1718 = vmul.f32 %v1688, 0.5
      %v1719 = vmul.f32 %v1689, 0.5
      %v1720 = vmul.f32 %v1690, 0.5
      %v1721 = vtanh.pop %v1691
      %v1722 = vtanh.pop %v1692
      %v1723 = vtanh.pop %v1693
      %v1724 = vtanh.pop %v1694
      %v1725 = vtanh.pop %v1695
      %v1726 = vtanh.pop %v1696
      %v1727 = vtanh.pop %v1697
      %v1728 = vtanh.pop %v1698
      %v1729 = vtanh.pop %v1699
      %v1730 = vtanh.pop %v1700
      %v1731 = vtanh.pop %v1701
      %v1732 = vtanh.pop %v1702
      %v1733 = vtanh.pop %v1703
      %v1734 = vtanh.pop %v1704
      %v1735 = vtanh.pop %v1705
      %v1736 = vtanh.pop %v1706
      %v1737 = vtanh.pop %v1707
      %v1738 = vtanh.pop %v1708
      %v1739 = vtanh.pop %v1709
      %v1740 = vtanh.pop %v1710
      %v1741 = vtanh.pop %v1711
      %v1742 = vtanh.pop %v1712
      %v1743 = vtanh.pop %v1713
      %v1744 = vtanh.pop %v1714
      %v1745 = vtanh.pop %v1715
      %v1746 = vtanh.pop %v1716
      %v1747 = vtanh.pop %v1717
      %v1748 = vtanh.pop %v1718
      %v1749 = vtanh.pop %v1719
      %v1750 = vtanh.pop %v1720
      %v1751 = vmul.f32 %v1721, 0.5
      %v1752 = vmul.f32 %v1722, 0.5
      %v1753 = vmul.f32 %v1723, 0.5
      %v1754 = vmul.f32 %v1724, 0.5
      %v1755 = vmul.f32 %v1725, 0.5
      %v1756 = vmul.f32 %v1726, 0.5
      %v1757 = vmul.f32 %v1727, 0.5
      %v1758 = vmul.f32 %v1728, 0.5
      %v1759 = vmul.f32 %v1729, 0.5
      %v1760 = vmul.f32 %v1730, 0.5
      %v1761 = vmul.f32 %v1731, 0.5
      %v1762 = vmul.f32 %v1732, 0.5
      %v1763 = vmul.f32 %v1733, 0.5
      %v1764 = vmul.f32 %v1734, 0.5
      %v1765 = vmul.f32 %v1735, 0.5
      %v1766 = vmul.f32 %v1736, 0.5
      %v1767 = vmul.f32 %v1737, 0.5
      %v1768 = vmul.f32 %v1738, 0.5
      %v1769 = vmul.f32 %v1739, 0.5
      %v1770 = vmul.f32 %v1740, 0.5
      %v1771 = vmul.f32 %v1741, 0.5
      %v1772 = vmul.f32 %v1742, 0.5
      %v1773 = vmul.f32 %v1743, 0.5
      %v1774 = vmul.f32 %v1744, 0.5
      %v1775 = vmul.f32 %v1745, 0.5
      %v1776 = vmul.f32 %v1746, 0.5
      %v1777 = vmul.f32 %v1747, 0.5
      %v1778 = vmul.f32 %v1748, 0.5
      %v1779 = vmul.f32 %v1749, 0.5
      %v1780 = vmul.f32 %v1750, 0.5
      %v1781 = vadd.f32 %v1751, 0.5
      %v1782 = vadd.f32 %v1752, 0.5
      %v1783 = vadd.f32 %v1753, 0.5
      %v1784 = vadd.f32 %v1754, 0.5
      %v1785 = vadd.f32 %v1755, 0.5
      %v1786 = vadd.f32 %v1756, 0.5
      %v1787 = vadd.f32 %v1757, 0.5
      %v1788 = vadd.f32 %v1758, 0.5
      %v1789 = vadd.f32 %v1759, 0.5
      %v1790 = vadd.f32 %v1760, 0.5
      %v1791 = vadd.f32 %v1761, 0.5
      %v1792 = vadd.f32 %v1762, 0.5
      %v1793 = vadd.f32 %v1763, 0.5
      %v1794 = vadd.f32 %v1764, 0.5
      %v1795 = vadd.f32 %v1765, 0.5
      %v1796 = vadd.f32 %v1766, 0.5
      %v1797 = vadd.f32 %v1767, 0.5
      %v1798 = vadd.f32 %v1768, 0.5
      %v1799 = vadd.f32 %v1769, 0.5
      %v1800 = vadd.f32 %v1770, 0.5
      %v1801 = vadd.f32 %v1771, 0.5
      %v1802 = vadd.f32 %v1772, 0.5
      %v1803 = vadd.f32 %v1773, 0.5
      %v1804 = vadd.f32 %v1774, 0.5
      %v1805 = vadd.f32 %v1775, 0.5
      %v1806 = vadd.f32 %v1776, 0.5
      %v1807 = vadd.f32 %v1777, 0.5
      %v1808 = vadd.f32 %v1778, 0.5
      %v1809 = vadd.f32 %v1779, 0.5
      %v1810 = vadd.f32 %v1780, 0.5
      %v1811 = vmul.f32 %v1661, %v1781
      %v1812 = vmul.f32 %v1662, %v1782
      %v1813 = vmul.f32 %v1663, %v1783
      %v1814 = vmul.f32 %v1664, %v1784
      %v1815 = vmul.f32 %v1665, %v1785
      %v1816 = vmul.f32 %v1666, %v1786
      %v1817 = vmul.f32 %v1667, %v1787
      %v1818 = vmul.f32 %v1668, %v1788
      %v1819 = vmul.f32 %v1669, %v1789
      %v1820 = vmul.f32 %v1670, %v1790
      %v1821 = vmul.f32 %v1671, %v1791
      %v1822 = vmul.f32 %v1672, %v1792
      %v1823 = vmul.f32 %v1673, %v1793
      %v1824 = vmul.f32 %v1674, %v1794
      %v1825 = vmul.f32 %v1675, %v1795
      %v1826 = vmul.f32 %v1676, %v1796
      %v1827 = vmul.f32 %v1677, %v1797
      %v1828 = vmul.f32 %v1678, %v1798
      %v1829 = vmul.f32 %v1679, %v1799
      %v1830 = vmul.f32 %v1680, %v1800
      %v1831 = vmul.f32 %v1681, %v1801
      %v1832 = vmul.f32 %v1682, %v1802
      %v1833 = vmul.f32 %v1683, %v1803
      %v1834 = vmul.f32 %v1684, %v1804
      %v1835 = vmul.f32 %v1685, %v1805
      %v1836 = vmul.f32 %v1686, %v1806
      %v1837 = vmul.f32 %v1687, %v1807
      %v1838 = vmul.f32 %v1688, %v1808
      %v1839 = vmul.f32 %v1689, %v1809
      %v1840 = vmul.f32 %v1690, %v1810
      %1841 = vst [vmem:[%s330] sm:$0xff] %v1811
      %1842 = vst [vmem:[%s330 + $0x8] sm:$0xff] %v1812
      %1843 = vst [vmem:[%s330 + $0x10] sm:$0xf] %v1813
      %1844 = vst [vmem:[%s330 + $0x18] sm:$0xff] %v1814
      %1845 = vst [vmem:[%s330 + $0x20] sm:$0xff] %v1815
      %1846 = vst [vmem:[%s330 + $0x28] sm:$0xf] %v1816
      %1847 = vst [vmem:[%s330 + $0x30] sm:$0xff] %v1817
      %1848 = vst [vmem:[%s330 + $0x38] sm:$0xff] %v1818
      %1849 = vst [vmem:[%s330 + $0x40] sm:$0xf] %v1819
      %1850 = vst [vmem:[%s330 + $0x48] sm:$0xff] %v1820
      %1851 = vst [vmem:[%s330 + $0x50] sm:$0xff] %v1821
      %1852 = vst [vmem:[%s330 + $0x58] sm:$0xf] %v1822
      %1853 = vst [vmem:[%s330 + $0x60] sm:$0xff] %v1823
      %1854 = vst [vmem:[%s330 + $0x68] sm:$0xff] %v1824
      %1855 = vst [vmem:[%s330 + $0x70] sm:$0xf] %v1825
      %1856 = vst [vmem:[%s330 + $0x78] sm:$0xff] %v1826
      %1857 = vst [vmem:[%s330 + $0x80] sm:$0xff] %v1827
      %1858 = vst [vmem:[%s330 + $0x88] sm:$0xf] %v1828
      %1859 = vst [vmem:[%s330 + $0x90] sm:$0xff] %v1829
      %1860 = vst [vmem:[%s330 + $0x98] sm:$0xff] %v1830
      %1861 = vst [vmem:[%s330 + $0xa0] sm:$0xf] %v1831
      %1862 = vst [vmem:[%s330 + $0xa8] sm:$0xff] %v1832
      %1863 = vst [vmem:[%s330 + $0xb0] sm:$0xff] %v1833
      %1864 = vst [vmem:[%s330 + $0xb8] sm:$0xf] %v1834
      %1865 = vst [vmem:[%s330 + $0xc0] sm:$0xff] %v1835
      %1866 = vst [vmem:[%s330 + $0xc8] sm:$0xff] %v1836
      %1867 = vst [vmem:[%s330 + $0xd0] sm:$0xf] %v1837
      %1868 = vst [vmem:[%s330 + $0xd8] sm:$0xff] %v1838
      %1869 = vst [vmem:[%s330 + $0xe0] sm:$0xff] %v1839
      %1870 = vst [vmem:[%s330 + $0xe8] sm:$0xf] %v1840
      %v1871 = vadd.f32 %v1811, %v1812
      %vm1872 = vcmask 1043456
      %v1873 = vsel %vm1872, %v1813, 0.0
      %v1874 = vadd.f32 %v1871, %v1873
      %v1875 = vadd.f32 %v1874, %v1814
      %v1876 = vadd.f32 %v1875, %v1815
      %v1877 = vsel %vm1872, %v1816, 0.0
      %v1878 = vadd.f32 %v1876, %v1877
      %v1879 = vadd.f32 %v1878, %v1817
      %v1880 = vadd.f32 %v1879, %v1818
      %v1881 = vsel %vm1872, %v1819, 0.0
      %v1882 = vadd.f32 %v1880, %v1881
      %v1883 = vadd.f32 %v1882, %v1820
      %v1884 = vadd.f32 %v1883, %v1821
      %v1885 = vsel %vm1872, %v1822, 0.0
      %v1886 = vadd.f32 %v1884, %v1885
      %v1887 = vadd.f32 %v1886, %v1823
      %v1888 = vadd.f32 %v1887, %v1824
      %v1889 = vsel %vm1872, %v1825, 0.0
      %v1890 = vadd.f32 %v1888, %v1889
      %v1891 = vadd.f32 %v1890, %v1826
      %v1892 = vadd.f32 %v1891, %v1827
      %v1893 = vsel %vm1872, %v1828, 0.0
      %v1894 = vadd.f32 %v1892, %v1893
      %v1895 = vadd.f32 %v1894, %v1829
      %v1896 = vadd.f32 %v1895, %v1830
      %v1897 = vsel %vm1872, %v1831, 0.0
      %v1898 = vadd.f32 %v1896, %v1897
      %v1899 = vadd.f32 %v1898, %v1832
      %v1900 = vadd.f32 %v1899, %v1833
      %v1901 = vsel %vm1872, %v1834, 0.0
      %v1902 = vadd.f32 %v1900, %v1901
      %v1903 = vadd.f32 %v1902, %v1835
      %v1904 = vadd.f32 %v1903, %v1836
      %v1905 = vsel %vm1872, %v1837, 0.0
      %v1906 = vadd.f32 %v1904, %v1905
      %v1907 = vadd.f32 %v1906, %v1838
      %v1908 = vadd.f32 %v1907, %v1839
      %v1909 = vsel %vm1872, %v1840, 0.0
      %v1910 = vadd.f32 %v1908, %v1909
      %v1911 = vrot.slane %v1910, 4
      %v1912 = vadd.f32 %v1910, %v1911
      %v1913 = vrot.slane %v1912, 2
      %v1914 = vadd.f32 %v1912, %v1913
      %v1915 = vrot.slane %v1914, 1
      %v1916 = vadd.f32 %v1914, %v1915
      %v1917 = vmul.f32 %v1916, 0.0025
      %p1918 = scmp.eq.s32.totalorder %s24, 0
      // Predicated region
      $region37: #{mbconv_forward.4} parent=35 // pred_check
        %p1919 = pneg %p1918
      $region38: #{mbconv_forward.4} parent=35 // pred_check_branch
        %1921 = sbr.rel (%p1919) target = $region40
      $region39: #{mbconv_forward.4} parent=35 // pred_region
        %1922 = vst [vmem:[%s337] sm:$0x1] 0.0
      $region40: #{mbconv_forward.4} parent=35 // pred_fallthru
        _
      %v1923 = vld [vmem:[%s337] sm:$0x1]
      %v1924 = vadd.f32 %v1923, %v1917
      %1925 = vst [vmem:[%s337] sm:$0x1] %v1924
      %s1926 = smul.u32 10, %s24
      %p1927 = scmp.lt.s32.totalorder %s22, 1
      %s1928 = scalar_select %p1927, %s22, 1
      %p1929 = scmp.lt.s32.totalorder %s1926, 19
      %s1930 = scalar_select %p1929, %s1926, 19
      %p1931 = scmp.lt.s32.totalorder %s23, 0
      %s1932 = scalar_select %p1931, %s23, 0
      %s1933 = smul.addr %s1930, 3
      %s1934 = sadd.s32 %s1932, %s1933
      %s1935 = smul.addr %s1928, 60
      %s1936 = sadd.s32 %s1934, %s1935
      %s1937 = smul.addr %s1936, 8
      %s1938 = scalar_lea.vmem %s4, %s1937
      %p1939 = scmp.lt.s32.totalorder %s22, 1
      %s1940 = scalar_select %p1939, %s22, 1
      %p1941 = scmp.lt.s32.totalorder %s23, 0
      %s1942 = scalar_select %p1941, %s23, 0
      %s1943 = sadd.s32 %s1942, %s1940
      %s1944 = scalar_lea.vmem %s5, %s1943
      // Predicated region
      $region41: #{mbconv_forward.4} parent=35 // pred_check
        %p1945 = pneg %p164
      $region42: #{mbconv_forward.4} parent=35 // pred_check_branch
        %1947 = sbr.rel (%p1945) target = $region44
      $region43: #{mbconv_forward.4} parent=35 // pred_region
        %s1948 = smul.u32 10, %s24
      $region44: #{mbconv_forward.4} parent=35 // pred_fallthru
        _
      // Predicated region
      $region45: #{mbconv_forward.4} parent=35 // pred_check
        %p1949 = pneg %p192
      $region46: #{mbconv_forward.4} parent=35 // pred_check_branch
        %1951 = sbr.rel (%p1949) target = $region48
      $region47: #{mbconv_forward.4} parent=35 // pred_region
        _
      $region48: #{mbconv_forward.4} parent=35 // pred_fallthru
        _
    $region36: #{mbconv_forward.4} parent=5 // pred_fallthru
      _
    %p1952 = scmp.le.s32.totalorder 2, %s12
    // Predicated region
    $region49: #{mbconv_forward.4} parent=5 // pred_check
      %p1953 = pneg %p1952
    $region50: #{mbconv_forward.4} parent=5 // pred_check_branch
      %1955 = sbr.rel (%p1953) target = $region52
    $region51: #{mbconv_forward.4} parent=5 // pred_region
      %s1956 = ssub.s32 %s12, 2
      // Predicated region
      $region53: #{mbconv_forward.4} parent=51 // pred_check
        %p1957 = pneg %p170
      $region54: #{mbconv_forward.4} parent=51 // pred_check_branch
        %1959 = sbr.rel (%p1957) target = $region56
      $region55: #{mbconv_forward.4} parent=51 // pred_region
        %s1960 = smul.u32 10, %s27
        %p1961 = scmp.lt.s32.totalorder %s25, 1
        %s1962 = scalar_select %p1961, %s25, 1
        %p1963 = scmp.lt.s32.totalorder %s1960, 19
        %s1964 = scalar_select %p1963, %s1960, 19
        %p1965 = scmp.lt.s32.totalorder %s26, 0
        %s1966 = scalar_select %p1965, %s26, 0
        %s1967 = smul.addr %s1964, 3
        %s1968 = sadd.s32 %s1966, %s1967
        %s1969 = smul.addr %s1962, 60
        %s1970 = sadd.s32 %s1968, %s1969
        %s1971 = smul.addr %s1970, 8
        %s1972 = scalar_lea.vmem %s4, %s1971
      $region56: #{mbconv_forward.4} parent=51 // pred_fallthru
        _
      // Predicated region
      $region57: #{mbconv_forward.4} parent=51 // pred_check
        %p1973 = pneg %p198
      $region58: #{mbconv_forward.4} parent=51 // pred_check_branch
        %1975 = sbr.rel (%p1973) target = $region60
      $region59: #{mbconv_forward.4} parent=51 // pred_region
        %p1976 = scmp.lt.s32.totalorder %s25, 1
        %s1977 = scalar_select %p1976, %s25, 1
        %p1978 = scmp.lt.s32.totalorder %s26, 0
        %s1979 = scalar_select %p1978, %s26, 0
        %s1980 = sadd.s32 %s1979, %s1977
        %s1981 = scalar_lea.vmem %s5, %s1980
      $region60: #{mbconv_forward.4} parent=51 // pred_fallthru
        _
    $region52: #{mbconv_forward.4} parent=5 // pred_fallthru
      _
  $region6: #{mbconv_forward.4} parent=0 // loop_footer
    %s16 = sadd.s32 1, %s12
  $region7: #{mbconv_forward.4} parent=0 // loop_footer_branch
    %11 = sbr.rel target = $region3
  $region8: #{mbconv_forward.4} parent=0 // loop_exit
    _

// kernel: mbconv_forward.5
$region0: #{mbconv_forward.5}
  #allocation0 [shape = 'u32[]', space=smem, size = 0x4, offset = 0x4, fixed_abs, tag = 'smem constant byte address 0x4 - core index']
  #allocation1 [shape = 'u32[144,128]{1,0:T(1,128)}', space=vmem, size = 0x12000, scoped, tag = 'internal scratch']
  %s0 = inlined_call_operand.vmem [shape: f32[2,400,128], index: 0, kind: input, shape index: {}]
  %s1 = inlined_call_operand.vmem [shape: f32[128,128], index: 1, kind: input, shape index: {}]
  %s2 = inlined_call_operand.vmem [shape: f32[1,128], index: 2, kind: input, shape index: {}]
  %s3 = inlined_call_operand.vmem [shape: f32[1,128], index: 3, kind: input, shape index: {}]
  %s4 = inlined_call_operand.vmem [shape: f32[2,1,128], index: 4, kind: input, shape index: {}]
  %s5 = inlined_call_operand.vmem [shape: f32[2,400,128], index: 5, kind: output, shape index: {}]
  %s6 = sld [smem:[#allocation0]]
  $region53: #{mbconv_forward.5} parent=0
    _
  %s8 = ssub.s32 1, %s6
  %s9 = scalar_select 0, %s8, %s6
  loop: start=0, step=1, limit=4
  $region2: #{mbconv_forward.5} parent=0 // loop_pre_header
    _
  $region3: #{mbconv_forward.5} parent=0 // loop_header
    %s11 = sphi 0, %s15
    %p12 = scmp.ge.s32.totalorder %s11, 4
    %s18 = sphi 0, %s30
    %s19 = sphi 0, %s26
    %s20 = sphi 0, %s18
    %s21 = sphi 0, %s19
    %s22 = sphi 0, %s20
    %s23 = sphi 0, %s21
    %s35 = sphi 0, %s37
    %s38 = sphi 0, %s35
    %s39 = sphi 0, %s38
    %s55 = sphi 0, %s39
    %s59 = sphi 0, %s59
    %s61 = sphi 0, %s59
    %s62 = sphi 0, %s61
    %s76 = sphi 0, %s62
    %s80 = sphi 0, %s80
    %s82 = sphi 0, %s80
    %s83 = sphi 0, %s82
    %s97 = sphi 0, %s83
    %s101 = sphi 0, %s101
    %s103 = sphi 0, %s101
    %s104 = sphi 0, %s103
    %s118 = sphi 0, %s104
    %s124 = sphi 0, %s126
    %s127 = sphi 0, %s124
    %s128 = sphi 0, %s127
    %s144 = sphi 0, %s128
    %s152 = sphi 0, %s154
    %s155 = sphi 0, %s152
    %s156 = sphi 0, %s155
    %s172 = sphi 0, %s156
  $region4: #{mbconv_forward.5} parent=0 // loop_header_branch
    %14 = sbr.rel (%p12) target = $region8
  $region5: #{mbconv_forward.5} parent=0 // loop_body
    %s16 = ssub.s32 %s11, 1
    %s17 = ssub.s32 %s11, 2
    %s24 = sadd.s32 1, %s19
    %p25 = scmp.ge.s32.totalorder %s24, 1
    %s26 = scalar_select %p25, 0, %s24
    %s27 = sadd.s32 1, %s18
    %s28 = scalar_select %p25, %s27, %s18
    %p29 = scmp.ge.s32.totalorder %s28, 2
    %s30 = scalar_select %p29, 0, %s28
    %s31 = ssub.s32 %s18, %s30
    %s32 = ssub.s32 %s19, %s26
    %s33 = sor.u32 %s31, %s32
    %p34 = scmp.eq.s32.totalorder %s33, 0
    %s36 = sadd.s32 %s35, 1
    %s37 = scalar_select %p34, %s35, %s36
    %p40 = pneg %p34
    %p41 = scmp.eq.s32.totalorder %s11, 1
    %p42 = por %p40, %p41
    %p43 = scmp.ne.s32.totalorder %s35, %s38
    %p44 = scmp.eq.s32.totalorder %s11, 0
    %p45 = por %p43, %p44
    %p46 = scmp.ne.s32.totalorder %s35, %s38
    %p47 = scmp.eq.s32.totalorder %s16, 1
    %p48 = por %p46, %p47
    %p49 = scmp.ne.s32.totalorder %s38, %s39
    %p50 = scmp.eq.s32.totalorder %s16, 0
    %p51 = por %p49, %p50
    %p52 = scmp.ne.s32.totalorder %s38, %s39
    %p53 = scmp.eq.s32.totalorder %s17, 1
    %p54 = por %p52, %p53
    %p56 = scmp.ne.s32.totalorder %s39, %s55
    %p57 = scmp.eq.s32.totalorder %s17, 0
    %p58 = por %p56, %p57
    %s60 = sadd.s32 %s59, 1
    %p63 = scmp.eq.s32.totalorder %s11, 1
    %p64 = scmp.ne.s32.totalorder %s59, %s61
    %p65 = scmp.eq.s32.totalorder %s11, 0
    %p66 = por %p64, %p65
    %p67 = scmp.ne.s32.totalorder %s59, %s61
    %p68 = scmp.eq.s32.totalorder %s16, 1
    %p69 = por %p67, %p68
    %p70 = scmp.ne.s32.totalorder %s61, %s62
    %p71 = scmp.eq.s32.totalorder %s16, 0
    %p72 = por %p70, %p71
    %p73 = scmp.ne.s32.totalorder %s61, %s62
    %p74 = scmp.eq.s32.totalorder %s17, 1
    %p75 = por %p73, %p74
    %p77 = scmp.ne.s32.totalorder %s62, %s76
    %p78 = scmp.eq.s32.totalorder %s17, 0
    %p79 = por %p77, %p78
    %s81 = sadd.s32 %s80, 1
    %p84 = scmp.eq.s32.totalorder %s11, 1
    %p85 = scmp.ne.s32.totalorder %s80, %s82
    %p86 = scmp.eq.s32.totalorder %s11, 0
    %p87 = por %p85, %p86
    %p88 = scmp.ne.s32.totalorder %s80, %s82
    %p89 = scmp.eq.s32.totalorder %s16, 1
    %p90 = por %p88, %p89
    %p91 = scmp.ne.s32.totalorder %s82, %s83
    %p92 = scmp.eq.s32.totalorder %s16, 0
    %p93 = por %p91, %p92
    %p94 = scmp.ne.s32.totalorder %s82, %s83
    %p95 = scmp.eq.s32.totalorder %s17, 1
    %p96 = por %p94, %p95
    %p98 = scmp.ne.s32.totalorder %s83, %s97
    %p99 = scmp.eq.s32.totalorder %s17, 0
    %p100 = por %p98, %p99
    %s102 = sadd.s32 %s101, 1
    %p105 = scmp.eq.s32.totalorder %s11, 1
    %p106 = scmp.ne.s32.totalorder %s101, %s103
    %p107 = scmp.eq.s32.totalorder %s11, 0
    %p108 = por %p106, %p107
    %p109 = scmp.ne.s32.totalorder %s101, %s103
    %p110 = scmp.eq.s32.totalorder %s16, 1
    %p111 = por %p109, %p110
    %p112 = scmp.ne.s32.totalorder %s103, %s104
    %p113 = scmp.eq.s32.totalorder %s16, 0
    %p114 = por %p112, %p113
    %p115 = scmp.ne.s32.totalorder %s103, %s104
    %p116 = scmp.eq.s32.totalorder %s17, 1
    %p117 = por %p115, %p116
    %p119 = scmp.ne.s32.totalorder %s104, %s118
    %p120 = scmp.eq.s32.totalorder %s17, 0
    %p121 = por %p119, %p120
    %s122 = ssub.s32 %s18, %s30
    %p123 = scmp.eq.s32.totalorder %s122, 0
    %s125 = sadd.s32 %s124, 1
    %s126 = scalar_select %p123, %s124, %s125
    %p129 = pneg %p123
    %p130 = scmp.eq.s32.totalorder %s11, 1
    %p131 = por %p129, %p130
    %p132 = scmp.ne.s32.totalorder %s124, %s127
    %p133 = scmp.eq.s32.totalorder %s11, 0
    %p134 = por %p132, %p133
    %p135 = scmp.ne.s32.totalorder %s124, %s127
    %p136 = scmp.eq.s32.totalorder %s16, 1
    %p137 = por %p135, %p136
    %p138 = scmp.ne.s32.totalorder %s127, %s128
    %p139 = scmp.eq.s32.totalorder %s16, 0
    %p140 = por %p138, %p139
    %p141 = scmp.ne.s32.totalorder %s127, %s128
    %p142 = scmp.eq.s32.totalorder %s17, 1
    %p143 = por %p141, %p142
    %p145 = scmp.ne.s32.totalorder %s128, %s144
    %p146 = scmp.eq.s32.totalorder %s17, 0
    %p147 = por %p145, %p146
    %s148 = ssub.s32 %s18, %s30
    %s149 = ssub.s32 %s19, %s26
    %s150 = sor.u32 %s148, %s149
    %p151 = scmp.eq.s32.totalorder %s150, 0
    %s153 = sadd.s32 %s152, 1
    %s154 = scalar_select %p151, %s152, %s153
    %p157 = pneg %p151
    %p158 = scmp.eq.s32.totalorder %s11, 1
    %p159 = por %p157, %p158
    %p160 = scmp.ne.s32.totalorder %s152, %s155
    %p161 = scmp.eq.s32.totalorder %s11, 0
    %p162 = por %p160, %p161
    %p163 = scmp.ne.s32.totalorder %s152, %s155
    %p164 = scmp.eq.s32.totalorder %s16, 1
    %p165 = por %p163, %p164
    %p166 = scmp.ne.s32.totalorder %s155, %s156
    %p167 = scmp.eq.s32.totalorder %s16, 0
    %p168 = por %p166, %p167
    %p169 = scmp.ne.s32.totalorder %s155, %s156
    %p170 = scmp.eq.s32.totalorder %s17, 1
    %p171 = por %p169, %p170
    %p173 = scmp.ne.s32.totalorder %s156, %s172
    %p174 = scmp.eq.s32.totalorder %s17, 0
    %p175 = por %p173, %p174
    %p176 = scmp.le.s32.totalorder 1, %s11
    %p177 = scmp.lt.s32.totalorder %s11, 3
    %p178 = pnand %p176, %p177
    %p179 = pneg %p178
    // Predicated region
    $region9: #{mbconv_forward.5} parent=5 // pred_check
      _
    $region10: #{mbconv_forward.5} parent=5 // pred_check_branch
      %181 = sbr.rel (%p178) target = $region12
    $region11: #{mbconv_forward.5} parent=5 // pred_region
      %s182 = ssub.s32 %s11, 1
      // Predicated region
      $region13: #{mbconv_forward.5} parent=11 // pred_check
        %p183 = pneg %p72
      $region14: #{mbconv_forward.5} parent=11 // pred_check_branch
        %185 = sbr.rel (%p183) target = $region16
      $region15: #{mbconv_forward.5} parent=11 // pred_region
        _
      $region16: #{mbconv_forward.5} parent=11 // pred_fallthru
        _
      // Predicated region
      $region17: #{mbconv_forward.5} parent=11 // pred_check
        %p186 = pneg %p93
      $region18: #{mbconv_forward.5} parent=11 // pred_check_branch
        %188 = sbr.rel (%p186) target = $region20
      $region19: #{mbconv_forward.5} parent=11 // pred_region
        _
      $region20: #{mbconv_forward.5} parent=11 // pred_fallthru
        _
      // Predicated region
      $region21: #{mbconv_forward.5} parent=11 // pred_check
        %p189 = pneg %p114
      $region22: #{mbconv_forward.5} parent=11 // pred_check_branch
        %191 = sbr.rel (%p189) target = $region24
      $region23: #{mbconv_forward.5} parent=11 // pred_region
        _
      $region24: #{mbconv_forward.5} parent=11 // pred_fallthru
        _
    $region12: #{mbconv_forward.5} parent=5 // pred_fallthru
      _
    %p192 = scmp.lt.s32.totalorder %s11, 2
    // Predicated region
    $region25: #{mbconv_forward.5} parent=5 // pred_check
      %p193 = pneg %p192
    $region26: #{mbconv_forward.5} parent=5 // pred_check_branch
      %195 = sbr.rel (%p193) target = $region28
    $region27: #{mbconv_forward.5} parent=5 // pred_region
      // Predicated region
      $region29: #{mbconv_forward.5} parent=27 // pred_check
        %p196 = pneg %p45
      $region30: #{mbconv_forward.5} parent=27 // pred_check_branch
        %198 = sbr.rel (%p196) target = $region32
      $region31: #{mbconv_forward.5} parent=27 // pred_region
        %s199 = smul.u32 50, %s19
        %p200 = scmp.lt.s32.totalorder %s18, 1
        %s201 = scalar_select %p200, %s18, 1
        %p202 = scmp.lt.s32.totalorder %s199, 49
        %s203 = scalar_select %p202, %s199, 49
        %s204 = smul.addr %s201, 50
        %s205 = sadd.s32 %s203, %s204
        %s206 = smul.addr %s205, 8
        %s207 = scalar_lea.vmem %s0, %s206
        %s208 = smul.u32 50, %s19
      $region32: #{mbconv_forward.5} parent=27 // pred_fallthru
        _
      // Predicated region
      $region33: #{mbconv_forward.5} parent=27 // pred_check
        %p209 = pneg %p134
      $region34: #{mbconv_forward.5} parent=27 // pred_check_branch
        %211 = sbr.rel (%p209) target = $region36
      $region35: #{mbconv_forward.5} parent=27 // pred_region
        %p212 = scmp.lt.s32.totalorder %s18, 1
        %s213 = scalar_select %p212, %s18, 1
        %s214 = scalar_lea.vmem %s4, %s213
      $region36: #{mbconv_forward.5} parent=27 // pred_fallthru
        _
    $region28: #{mbconv_forward.5} parent=5 // pred_fallthru
      _
    %p215 = scmp.le.s32.totalorder 1, %s11
    %p216 = scmp.lt.s32.totalorder %s11, 3
    %p217 = pnand %p215, %p216
    %p218 = pneg %p217
    // Predicated region
    $region37: #{mbconv_forward.5} parent=5 // pred_check
      _
    $region38: #{mbconv_forward.5} parent=5 // pred_check_branch
      %220 = sbr.rel (%p217) target = $region40
    $region39: #{mbconv_forward.5} parent=5 // pred_region
      %s221 = ssub.s32 %s11, 1
      %s222 = smul.u32 50, %s21
      %p223 = scmp.lt.s32.totalorder %s20, 1
      %s224 = scalar_select %p223, %s20, 1
      %p225 = scmp.lt.s32.totalorder %s222, 49
      %s226 = scalar_select %p225, %s222, 49
      %s227 = smul.addr %s224, 50
      %s228 = sadd.s32 %s226, %s227
      %s229 = smul.addr %s228, 8
      %s230 = scalar_lea.vmem %s0, %s229
      %p231 = pneg %p51
      %p232 = pneg %p48
      %p233 = pneg %p72
      %p234 = pneg %p69
      %p235 = pneg %p93
      %p236 = pneg %p90
      %p237 = pneg %p114
      %p238 = pneg %p111
      %p239 = scmp.lt.s32.totalorder %s20, 1
      %s240 = scalar_select %p239, %s20, 1
      %s241 = scalar_lea.vmem %s4, %s240
      %p242 = pneg %p140
      %p243 = pneg %p137
      %p244 = pneg %p168
      %p245 = pneg %p165
      %s246 = smul.u32 50, %s21
      %p247 = scmp.lt.s32.totalorder %s20, 1
      %s248 = scalar_select %p247, %s20, 1
      %p249 = scmp.lt.s32.totalorder %s246, 49
      %s250 = scalar_select %p249, %s246, 49
      %s251 = smul.addr %s248, 50
      %s252 = sadd.s32 %s250, %s251
      %s253 = smul.addr %s252, 8
      %s254 = scalar_lea.vmem %s5, %s253
      %s255 = smul.u32 50, %s21
      %p256 = scmp.lt.s32.totalorder %s20, 1
      %s257 = scalar_select %p256, %s20, 1
      %p258 = scmp.lt.s32.totalorder %s255, 49
      %s259 = scalar_select %p258, %s255, 49
      %s260 = smul.addr %s257, 50
      %s261 = sadd.s32 %s259, %s260
      %s262 = smul.addr %s261, 8
      %s263 = scalar_lea.vmem %s0, %s262
      %s264 = smul.u32 50, %s21
      %p265 = scmp.lt.s32.totalorder %s20, 1
      %s266 = scalar_select %p265, %s20, 1
      %s267 = scalar_lea.vmem %s4, %s266
      %s268 = smul.u32 50, %s21
      %p269 = scmp.lt.s32.totalorder %s20, 1
      %s270 = scalar_select %p269, %s20, 1
      %p271 = scmp.lt.s32.totalorder %s268, 49
      %s272 = scalar_select %p271, %s268, 49
      %s273 = smul.addr %s270, 50
      %s274 = sadd.s32 %s272, %s273
      %s275 = smul.addr %s274, 8
      %s276 = scalar_lea.vmem %s5, %s275
      %s277 = smul.u32 50, %s21
      %v278 = vld [vmem:[%s263] sm:$0xff]
      %v279 = vld [vmem:[%s263 + $0x8] sm:$0xff]
      %v280 = vld [vmem:[%s263 + $0x10] sm:$0xff]
      %v281 = vld [vmem:[%s263 + $0x18] sm:$0xff]
      %v282 = vld [vmem:[%s263 + $0x20] sm:$0xff]
      %v283 = vld [vmem:[%s263 + $0x28] sm:$0xff]
      %v284 = vld [vmem:[%s263 + $0x30] sm:$0xff]
      %v285 = vld [vmem:[%s263 + $0x38] sm:$0xff]
      %v286 = vld [vmem:[%s263 + $0x40] sm:$0xff]
      %v287 = vld [vmem:[%s263 + $0x48] sm:$0xff]
      %v288 = vld [vmem:[%s263 + $0x50] sm:$0xff]
      %v289 = vld [vmem:[%s263 + $0x58] sm:$0xff]
      %v290 = vld [vmem:[%s263 + $0x60] sm:$0xff]
      %v291 = vld [vmem:[%s263 + $0x68] sm:$0xff]
      %v292 = vld [vmem:[%s263 + $0x70] sm:$0xff]
      %v293 = vld [vmem:[%s263 + $0x78] sm:$0xff]
      %v294 = vld [vmem:[%s263 + $0x80] sm:$0xff]
      %v295 = vld [vmem:[%s263 + $0x88] sm:$0xff]
      %v296 = vld [vmem:[%s263 + $0x90] sm:$0xff]
      %v297 = vld [vmem:[%s263 + $0x98] sm:$0xff]
      %v298 = vld [vmem:[%s263 + $0xa0] sm:$0xff]
      %v299 = vld [vmem:[%s263 + $0xa8] sm:$0xff]
      %v300 = vld [vmem:[%s263 + $0xb0] sm:$0xff]
      %v301 = vld [vmem:[%s263 + $0xb8] sm:$0xff]
      %v302 = vld [vmem:[%s263 + $0xc0] sm:$0xff]
      %v303 = vld [vmem:[%s263 + $0xc8] sm:$0xff]
      %v304 = vld [vmem:[%s263 + $0xd0] sm:$0xff]
      %v305 = vld [vmem:[%s263 + $0xd8] sm:$0xff]
      %v306 = vld [vmem:[%s263 + $0xe0] sm:$0xff]
      %v307 = vld [vmem:[%s263 + $0xe8] sm:$0xff]
      %v308 = vld [vmem:[%s263 + $0xf0] sm:$0xff]
      %v309 = vld [vmem:[%s263 + $0xf8] sm:$0xff]
      %v310 = vld [vmem:[%s263 + $0x100] sm:$0xff]
      %v311 = vld [vmem:[%s263 + $0x108] sm:$0xff]
      %v312 = vld [vmem:[%s263 + $0x110] sm:$0xff]
      %v313 = vld [vmem:[%s263 + $0x118] sm:$0xff]
      %v314 = vld [vmem:[%s263 + $0x120] sm:$0xff]
      %v315 = vld [vmem:[%s263 + $0x128] sm:$0xff]
      %v316 = vld [vmem:[%s263 + $0x130] sm:$0xff]
      %v317 = vld [vmem:[%s263 + $0x138] sm:$0xff]
      %v318 = vld [vmem:[%s263 + $0x140] sm:$0xff]
      %v319 = vld [vmem:[%s263 + $0x148] sm:$0xff]
      %v320 = vld [vmem:[%s263 + $0x150] sm:$0xff]
      %v321 = vld [vmem:[%s263 + $0x158] sm:$0xff]
      %v322 = vld [vmem:[%s263 + $0x160] sm:$0xff]
      %v323 = vld [vmem:[%s263 + $0x168] sm:$0xff]
      %v324 = vld [vmem:[%s263 + $0x170] sm:$0xff]
      %v325 = vld [vmem:[%s263 + $0x178] sm:$0xff]
      %v326 = vld [vmem:[%s263 + $0x180] sm:$0xff]
      %v327 = vld [vmem:[%s263 + $0x188] sm:$0xff]
      %v328 = vld [vmem:[%s267] sm:$0x1]
      %v330 = vlaneseq
      %v331 = vshrl.u32 %v330, 7
      %v332 = vsub.s32 0, %v331
      %v333 = vrot.slane %v328, %v332
      %v335 = vmul.f32 %v278, %v333
      %v336 = vmul.f32 %v279, %v333
      %v337 = vmul.f32 %v280, %v333
      %v338 = vmul.f32 %v281, %v333
      %v339 = vmul.f32 %v282, %v333
      %v340 = vmul.f32 %v283, %v333
      %v341 = vmul.f32 %v284, %v333
      %v342 = vmul.f32 %v285, %v333
      %v343 = vmul.f32 %v286, %v333
      %v344 = vmul.f32 %v287, %v333
      %v345 = vmul.f32 %v288, %v333
      %v346 = vmul.f32 %v289, %v333
      %v347 = vmul.f32 %v290, %v333
      %v348 = vmul.f32 %v291, %v333
      %v349 = vmul.f32 %v292, %v333
      %v350 = vmul.f32 %v293, %v333
      %v351 = vmul.f32 %v294, %v333
      %v352 = vmul.f32 %v295, %v333
      %v353 = vmul.f32 %v296, %v333
      %v354 = vmul.f32 %v297, %v333
      %v355 = vmul.f32 %v298, %v333
      %v356 = vmul.f32 %v299, %v333
      %v357 = vmul.f32 %v300, %v333
      %v358 = vmul.f32 %v301, %v333
      %v359 = vmul.f32 %v302, %v333
      %v360 = vmul.f32 %v303, %v333
      %v361 = vmul.f32 %v304, %v333
      %v362 = vmul.f32 %v305, %v333
      %v363 = vmul.f32 %v306, %v333
      %v364 = vmul.f32 %v307, %v333
      %v365 = vmul.f32 %v308, %v333
      %v366 = vmul.f32 %v309, %v333
      %v367 = vmul.f32 %v310, %v333
      %v368 = vmul.f32 %v311, %v333
      %v369 = vmul.f32 %v312, %v333
      %v370 = vmul.f32 %v313, %v333
      %v371 = vmul.f32 %v314, %v333
      %v372 = vmul.f32 %v315, %v333
      %v373 = vmul.f32 %v316, %v333
      %v374 = vmul.f32 %v317, %v333
      %v375 = vmul.f32 %v318, %v333
      %v376 = vmul.f32 %v319, %v333
      %v377 = vmul.f32 %v320, %v333
      %v378 = vmul.f32 %v321, %v333
      %v379 = vmul.f32 %v322, %v333
      %v380 = vmul.f32 %v323, %v333
      %v381 = vmul.f32 %v324, %v333
      %v382 = vmul.f32 %v325, %v333
      %v383 = vmul.f32 %v326, %v333
      %v384 = vmul.f32 %v327, %v333
      %v385 = vld [vmem:[%s1] sm:$0xff]
      %v386 = vld [vmem:[%s1 + $0x8] sm:$0xff]
      %v387 = vld [vmem:[%s1 + $0x10] sm:$0xff]
      %v388 = vld [vmem:[%s1 + $0x18] sm:$0xff]
      %v389 = vld [vmem:[%s1 + $0x20] sm:$0xff]
      %v390 = vld [vmem:[%s1 + $0x28] sm:$0xff]
      %v391 = vld [vmem:[%s1 + $0x30] sm:$0xff]
      %v392 = vld [vmem:[%s1 + $0x38] sm:$0xff]
      %v393 = vld [vmem:[%s1 + $0x40] sm:$0xff]
      %v394 = vld [vmem:[%s1 + $0x48] sm:$0xff]
      %v395 = vld [vmem:[%s1 + $0x50] sm:$0xff]
      %v396 = vld [vmem:[%s1 + $0x58] sm:$0xff]
      %v397 = vld [vmem:[%s1 + $0x60] sm:$0xff]
      %v398 = vld [vmem:[%s1 + $0x68] sm:$0xff]
      %v399 = vld [vmem:[%s1 + $0x70] sm:$0xff]
      %v400 = vld [vmem:[%s1 + $0x78] sm:$0xff]
      %401 = vmatprep.subr.mxu0 0.0
      %402 = vmatpush1.msra.mxu0 %v400
      %403 = vmatprep.subr.mxu0 0.0
      %404 = vmatpush1.msra.mxu0 %v399
      %405 = vmatprep.subr.mxu0 0.0
      %406 = vmatpush1.msra.mxu0 %v398
      %407 = vmatprep.subr.mxu0 0.0
      %408 = vmatpush1.msra.mxu0 %v397
      %409 = vmatprep.subr.mxu0 0.0
      %410 = vmatpush1.msra.mxu0 %v396
      %411 = vmatprep.subr.mxu0 0.0
      %412 = vmatpush1.msra.mxu0 %v395
      %413 = vmatprep.subr.mxu0 0.0
      %414 = vmatpush1.msra.mxu0 %v394
      %415 = vmatprep.subr.mxu0 0.0
      %416 = vmatpush1.msra.mxu0 %v393
      %417 = vmatprep.subr.mxu0 0.0
      %418 = vmatpush1.msra.mxu0 %v392
      %419 = vmatprep.subr.mxu0 0.0
      %420 = vmatpush1.msra.mxu0 %v391
      %421 = vmatprep.subr.mxu0 0.0
      %422 = vmatpush1.msra.mxu0 %v390
      %423 = vmatprep.subr.mxu0 0.0
      %424 = vmatpush1.msra.mxu0 %v389
      %425 = vmatprep.subr.mxu0 0.0
      %426 = vmatpush1.msra.mxu0 %v388
      %427 = vmatprep.subr.mxu0 0.0
      %428 = vmatpush1.msra.mxu0 %v387
      %429 = vmatprep.subr.mxu0 0.0
      %430 = vmatpush1.msra.mxu0 %v386
      %431 = vmatprep.subr.mxu0 0.0
      %432 = vmatpush1.msra.mxu0 %v385
      %433 = vmatprep.subr.mxu0 0.0
      %434 = vmatpush2.msra.mxu0 0.0
      %435 = vmatprep.subr.mxu0 0.0
      %436 = vmatpush2.msra.mxu0 0.0
      %437 = vmatprep.subr.mxu0 0.0
      %438 = vmatpush2.msra.mxu0 0.0
      %439 = vmatprep.subr.mxu0 0.0
      %440 = vmatpush2.msra.mxu0 0.0
      %441 = vmatprep.subr.mxu0 0.0
      %442 = vmatpush2.msra.mxu0 0.0
      %443 = vmatprep.subr.mxu0 0.0
      %444 = vmatpush2.msra.mxu0 0.0
      %445 = vmatprep.subr.mxu0 0.0
      %446 = vmatpush2.msra.mxu0 0.0
      %447 = vmatprep.subr.mxu0 0.0
      %448 = vmatpush2.msra.mxu0 0.0
      %449 = vmatprep.subr.mxu0 0.0
      %450 = vmatpush2.msra.mxu0 0.0
      %451 = vmatprep.subr.mxu0 0.0
      %452 = vmatpush2.msra.mxu0 0.0
      %453 = vmatprep.subr.mxu0 0.0
      %454 = vmatpush2.msra.mxu0 0.0
      %455 = vmatprep.subr.mxu0 0.0
      %456 = vmatpush2.msra.mxu0 0.0
      %457 = vmatprep.subr.mxu0 0.0
      %458 = vmatpush2.msra.mxu0 0.0
      %459 = vmatprep.subr.mxu0 0.0
      %460 = vmatpush2.msra.mxu0 0.0
      %461 = vmatprep.subr.mxu0 0.0
      %462 = vmatpush2.msra.mxu0 0.0
      %463 = vmatprep.subr.mxu0 0.0
      %464 = vmatpush2.msra.mxu0 0.0
      %465 = vmatprep.mubr.f32.mxu0 0.0
      %466 = vmatmul.mubr.f32.gmra.mxu0 %v335
      %v467 = vpop.f32.mrf.mxu0
      %v468 = vadd.f32 0.0, %v467
      %v469 = vpop.f32.mrf.mxu0
      %470 = vmatprep.mubr.f32.mxu0 0.0
      %471 = vmatmul.mubr.f32.gmra.mxu0 %v336
      %v472 = vpop.f32.mrf.mxu0
      %v473 = vadd.f32 0.0, %v472
      %v474 = vpop.f32.mrf.mxu0
      %475 = vmatprep.mubr.f32.mxu0 0.0
      %476 = vmatmul.mubr.f32.gmra.mxu0 %v337
      %v477 = vpop.f32.mrf.mxu0
      %v478 = vadd.f32 0.0, %v477
      %v479 = vpop.f32.mrf.mxu0
      %480 = vmatprep.mubr.f32.mxu0 0.0
      %481 = vmatmul.mubr.f32.gmra.mxu0 %v338
      %v482 = vpop.f32.mrf.mxu0
      %v483 = vadd.f32 0.0, %v482
      %v484 = vpop.f32.mrf.mxu0
      %485 = vmatprep.mubr.f32.mxu0 0.0
      %486 = vmatmul.mubr.f32.gmra.mxu0 %v339
      %v487 = vpop.f32.mrf.mxu0
      %v488 = vadd.f32 0.0, %v487
      %v489 = vpop.f32.mrf.mxu0
      %490 = vmatprep.mubr.f32.mxu0 0.0
      %491 = vmatmul.mubr.f32.gmra.mxu0 %v340
      %v492 = vpop.f32.mrf.mxu0
      %v493 = vadd.f32 0.0, %v492
      %v494 = vpop.f32.mrf.mxu0
      %495 = vmatprep.mubr.f32.mxu0 0.0
      %496 = vmatmul.mubr.f32.gmra.mxu0 %v341
      %v497 = vpop.f32.mrf.mxu0
      %v498 = vadd.f32 0.0, %v497
      %v499 = vpop.f32.mrf.mxu0
      %500 = vmatprep.mubr.f32.mxu0 0.0
      %501 = vmatmul.mubr.f32.gmra.mxu0 %v342
      %v502 = vpop.f32.mrf.mxu0
      %v503 = vadd.f32 0.0, %v502
      %v504 = vpop.f32.mrf.mxu0
      %505 = vmatprep.mubr.f32.mxu0 0.0
      %506 = vmatmul.mubr.f32.gmra.mxu0 %v343
      %v507 = vpop.f32.mrf.mxu0
      %v508 = vadd.f32 0.0, %v507
      %v509 = vpop.f32.mrf.mxu0
      %510 = vmatprep.mubr.f32.mxu0 0.0
      %511 = vmatmul.mubr.f32.gmra.mxu0 %v344
      %v512 = vpop.f32.mrf.mxu0
      %v513 = vadd.f32 0.0, %v512
      %v514 = vpop.f32.mrf.mxu0
      %515 = vmatprep.mubr.f32.mxu0 0.0
      %516 = vmatmul.mubr.f32.gmra.mxu0 %v345
      %v517 = vpop.f32.mrf.mxu0
      %v518 = vadd.f32 0.0, %v517
      %v519 = vpop.f32.mrf.mxu0
      %520 = vmatprep.mubr.f32.mxu0 0.0
      %521 = vmatmul.mubr.f32.gmra.mxu0 %v346
      %v522 = vpop.f32.mrf.mxu0
      %v523 = vadd.f32 0.0, %v522
      %v524 = vpop.f32.mrf.mxu0
      %525 = vmatprep.mubr.f32.mxu0 0.0
      %526 = vmatmul.mubr.f32.gmra.mxu0 %v347
      %v527 = vpop.f32.mrf.mxu0
      %v528 = vadd.f32 0.0, %v527
      %v529 = vpop.f32.mrf.mxu0
      %530 = vmatprep.mubr.f32.mxu0 0.0
      %531 = vmatmul.mubr.f32.gmra.mxu0 %v348
      %v532 = vpop.f32.mrf.mxu0
      %v533 = vadd.f32 0.0, %v532
      %v534 = vpop.f32.mrf.mxu0
      %535 = vmatprep.mubr.f32.mxu0 0.0
      %536 = vmatmul.mubr.f32.gmra.mxu0 %v349
      %v537 = vpop.f32.mrf.mxu0
      %v538 = vadd.f32 0.0, %v537
      %v539 = vpop.f32.mrf.mxu0
      %540 = vmatprep.mubr.f32.mxu0 0.0
      %541 = vmatmul.mubr.f32.gmra.mxu0 %v350
      %v542 = vpop.f32.mrf.mxu0
      %v543 = vadd.f32 0.0, %v542
      %v544 = vpop.f32.mrf.mxu0
      %545 = vmatprep.mubr.f32.mxu0 0.0
      %546 = vmatmul.mubr.f32.gmra.mxu0 %v351
      %v547 = vpop.f32.mrf.mxu0
      %v548 = vadd.f32 0.0, %v547
      %v549 = vpop.f32.mrf.mxu0
      %550 = vmatprep.mubr.f32.mxu0 0.0
      %551 = vmatmul.mubr.f32.gmra.mxu0 %v352
      %v552 = vpop.f32.mrf.mxu0
      %v553 = vadd.f32 0.0, %v552
      %v554 = vpop.f32.mrf.mxu0
      %555 = vmatprep.mubr.f32.mxu0 0.0
      %556 = vmatmul.mubr.f32.gmra.mxu0 %v353
      %v557 = vpop.f32.mrf.mxu0
      %v558 = vadd.f32 0.0, %v557
      %v559 = vpop.f32.mrf.mxu0
      %560 = vmatprep.mubr.f32.mxu0 0.0
      %561 = vmatmul.mubr.f32.gmra.mxu0 %v354
      %v562 = vpop.f32.mrf.mxu0
      %v563 = vadd.f32 0.0, %v562
      %v564 = vpop.f32.mrf.mxu0
      %565 = vmatprep.mubr.f32.mxu0 0.0
      %566 = vmatmul.mubr.f32.gmra.mxu0 %v355
      %v567 = vpop.f32.mrf.mxu0
      %v568 = vadd.f32 0.0, %v567
      %v569 = vpop.f32.mrf.mxu0
      %570 = vmatprep.mubr.f32.mxu0 0.0
      %571 = vmatmul.mubr.f32.gmra.mxu0 %v356
      %v572 = vpop.f32.mrf.mxu0
      %v573 = vadd.f32 0.0, %v572
      %v574 = vpop.f32.mrf.mxu0
      %575 = vmatprep.mubr.f32.mxu0 0.0
      %576 = vmatmul.mubr.f32.gmra.mxu0 %v357
      %v577 = vpop.f32.mrf.mxu0
      %v578 = vadd.f32 0.0, %v577
      %v579 = vpop.f32.mrf.mxu0
      %580 = vmatprep.mubr.f32.mxu0 0.0
      %581 = vmatmul.mubr.f32.gmra.mxu0 %v358
      %v582 = vpop.f32.mrf.mxu0
      %v583 = vadd.f32 0.0, %v582
      %v584 = vpop.f32.mrf.mxu0
      %585 = vmatprep.mubr.f32.mxu0 0.0
      %586 = vmatmul.mubr.f32.gmra.mxu0 %v359
      %v587 = vpop.f32.mrf.mxu0
      %v588 = vadd.f32 0.0, %v587
      %v589 = vpop.f32.mrf.mxu0
      %590 = vmatprep.mubr.f32.mxu0 0.0
      %591 = vmatmul.mubr.f32.gmra.mxu0 %v360
      %v592 = vpop.f32.mrf.mxu0
      %v593 = vadd.f32 0.0, %v592
      %v594 = vpop.f32.mrf.mxu0
      %595 = vmatprep.mubr.f32.mxu0 0.0
      %596 = vmatmul.mubr.f32.gmra.mxu0 %v361
      %v597 = vpop.f32.mrf.mxu0
      %v598 = vadd.f32 0.0, %v597
      %v599 = vpop.f32.mrf.mxu0
      %600 = vmatprep.mubr.f32.mxu0 0.0
      %601 = vmatmul.mubr.f32.gmra.mxu0 %v362
      %v602 = vpop.f32.mrf.mxu0
      %v603 = vadd.f32 0.0, %v602
      %v604 = vpop.f32.mrf.mxu0
      %605 = vmatprep.mubr.f32.mxu0 0.0
      %606 = vmatmul.mubr.f32.gmra.mxu0 %v363
      %v607 = vpop.f32.mrf.mxu0
      %v608 = vadd.f32 0.0, %v607
      %v609 = vpop.f32.mrf.mxu0
      %610 = vmatprep.mubr.f32.mxu0 0.0
      %611 = vmatmul.mubr.f32.gmra.mxu0 %v364
      %v612 = vpop.f32.mrf.mxu0
      %v613 = vadd.f32 0.0, %v612
      %v614 = vpop.f32.mrf.mxu0
      %615 = vmatprep.mubr.f32.mxu0 0.0
      %616 = vmatmul.mubr.f32.gmra.mxu0 %v365
      %v617 = vpop.f32.mrf.mxu0
      %v618 = vadd.f32 0.0, %v617
      %v619 = vpop.f32.mrf.mxu0
      %620 = vmatprep.mubr.f32.mxu0 0.0
      %621 = vmatmul.mubr.f32.gmra.mxu0 %v366
      %v622 = vpop.f32.mrf.mxu0
      %v623 = vadd.f32 0.0, %v622
      %v624 = vpop.f32.mrf.mxu0
      %625 = vmatprep.mubr.f32.mxu0 0.0
      %626 = vmatmul.mubr.f32.gmra.mxu0 %v367
      %v627 = vpop.f32.mrf.mxu0
      %v628 = vadd.f32 0.0, %v627
      %v629 = vpop.f32.mrf.mxu0
      %630 = vmatprep.mubr.f32.mxu0 0.0
      %631 = vmatmul.mubr.f32.gmra.mxu0 %v368
      %v632 = vpop.f32.mrf.mxu0
      %v633 = vadd.f32 0.0, %v632
      %v634 = vpop.f32.mrf.mxu0
      %635 = vmatprep.mubr.f32.mxu0 0.0
      %636 = vmatmul.mubr.f32.gmra.mxu0 %v369
      %v637 = vpop.f32.mrf.mxu0
      %v638 = vadd.f32 0.0, %v637
      %v639 = vpop.f32.mrf.mxu0
      %640 = vmatprep.mubr.f32.mxu0 0.0
      %641 = vmatmul.mubr.f32.gmra.mxu0 %v370
      %v642 = vpop.f32.mrf.mxu0
      %v643 = vadd.f32 0.0, %v642
      %v644 = vpop.f32.mrf.mxu0
      %645 = vmatprep.mubr.f32.mxu0 0.0
      %646 = vmatmul.mubr.f32.gmra.mxu0 %v371
      %v647 = vpop.f32.mrf.mxu0
      %v648 = vadd.f32 0.0, %v647
      %v649 = vpop.f32.mrf.mxu0
      %650 = vmatprep.mubr.f32.mxu0 0.0
      %651 = vmatmul.mubr.f32.gmra.mxu0 %v372
      %v652 = vpop.f32.mrf.mxu0
      %v653 = vadd.f32 0.0, %v652
      %v654 = vpop.f32.mrf.mxu0
      %655 = vmatprep.mubr.f32.mxu0 0.0
      %656 = vmatmul.mubr.f32.gmra.mxu0 %v373
      %v657 = vpop.f32.mrf.mxu0
      %v658 = vadd.f32 0.0, %v657
      %v659 = vpop.f32.mrf.mxu0
      %660 = vmatprep.mubr.f32.mxu0 0.0
      %661 = vmatmul.mubr.f32.gmra.mxu0 %v374
      %v662 = vpop.f32.mrf.mxu0
      %v663 = vadd.f32 0.0, %v662
      %v664 = vpop.f32.mrf.mxu0
      %665 = vmatprep.mubr.f32.mxu0 0.0
      %666 = vmatmul.mubr.f32.gmra.mxu0 %v375
      %v667 = vpop.f32.mrf.mxu0
      %v668 = vadd.f32 0.0, %v667
      %v669 = vpop.f32.mrf.mxu0
      %670 = vmatprep.mubr.f32.mxu0 0.0
      %671 = vmatmul.mubr.f32.gmra.mxu0 %v376
      %v672 = vpop.f32.mrf.mxu0
      %v673 = vadd.f32 0.0, %v672
      %v674 = vpop.f32.mrf.mxu0
      %675 = vmatprep.mubr.f32.mxu0 0.0
      %676 = vmatmul.mubr.f32.gmra.mxu0 %v377
      %v677 = vpop.f32.mrf.mxu0
      %v678 = vadd.f32 0.0, %v677
      %v679 = vpop.f32.mrf.mxu0
      %680 = vmatprep.mubr.f32.mxu0 0.0
      %681 = vmatmul.mubr.f32.gmra.mxu0 %v378
      %v682 = vpop.f32.mrf.mxu0
      %v683 = vadd.f32 0.0, %v682
      %v684 = vpop.f32.mrf.mxu0
      %685 = vmatprep.mubr.f32.mxu0 0.0
      %686 = vmatmul.mubr.f32.gmra.mxu0 %v379
      %v687 = vpop.f32.mrf.mxu0
      %v688 = vadd.f32 0.0, %v687
      %v689 = vpop.f32.mrf.mxu0
      %690 = vmatprep.mubr.f32.mxu0 0.0
      %691 = vmatmul.mubr.f32.gmra.mxu0 %v380
      %v692 = vpop.f32.mrf.mxu0
      %v693 = vadd.f32 0.0, %v692
      %v694 = vpop.f32.mrf.mxu0
      %695 = vmatprep.mubr.f32.mxu0 0.0
      %696 = vmatmul.mubr.f32.gmra.mxu0 %v381
      %v697 = vpop.f32.mrf.mxu0
      %v698 = vadd.f32 0.0, %v697
      %v699 = vpop.f32.mrf.mxu0
      %700 = vmatprep.mubr.f32.mxu0 0.0
      %701 = vmatmul.mubr.f32.gmra.mxu0 %v382
      %v702 = vpop.f32.mrf.mxu0
      %v703 = vadd.f32 0.0, %v702
      %v704 = vpop.f32.mrf.mxu0
      %705 = vmatprep.mubr.f32.mxu0 0.0
      %706 = vmatmul.mubr.f32.gmra.mxu0 %v383
      %v707 = vpop.f32.mrf.mxu0
      %v708 = vadd.f32 0.0, %v707
      %v709 = vpop.f32.mrf.mxu0
      %710 = vmatprep.mubr.f32.mxu0 0.0
      %711 = vmatmul.mubr.f32.gmra.mxu0 %v384
      %v712 = vpop.f32.mrf.mxu0
      %v713 = vadd.f32 0.0, %v712
      %v714 = vpop.f32.mrf.mxu0
      %715 = vdwg.mxu0
      %v716 = vld [vmem:[%s2] sm:$0x1]
      %v718 = vlaneseq
      %v719 = vshrl.u32 %v718, 7
      %v720 = vsub.s32 0, %v719
      %v721 = vrot.slane %v716, %v720
      %v723 = vmul.f32 %v468, %v721
      %v724 = vmul.f32 %v473, %v721
      %v725 = vmul.f32 %v478, %v721
      %v726 = vmul.f32 %v483, %v721
      %v727 = vmul.f32 %v488, %v721
      %v728 = vmul.f32 %v493, %v721
      %v729 = vmul.f32 %v498, %v721
      %v730 = vmul.f32 %v503, %v721
      %v731 = vmul.f32 %v508, %v721
      %v732 = vmul.f32 %v513, %v721
      %v733 = vmul.f32 %v518, %v721
      %v734 = vmul.f32 %v523, %v721
      %v735 = vmul.f32 %v528, %v721
      %v736 = vmul.f32 %v533, %v721
      %v737 = vmul.f32 %v538, %v721
      %v738 = vmul.f32 %v543, %v721
      %v739 = vmul.f32 %v548, %v721
      %v740 = vmul.f32 %v553, %v721
      %v741 = vmul.f32 %v558, %v721
      %v742 = vmul.f32 %v563, %v721
      %v743 = vmul.f32 %v568, %v721
      %v744 = vmul.f32 %v573, %v721
      %v745 = vmul.f32 %v578, %v721
      %v746 = vmul.f32 %v583, %v721
      %v747 = vmul.f32 %v588, %v721
      %v748 = vmul.f32 %v593, %v721
      %v749 = vmul.f32 %v598, %v721
      %v750 = vmul.f32 %v603, %v721
      %v751 = vmul.f32 %v608, %v721
      %v752 = vmul.f32 %v613, %v721
      %v753 = vmul.f32 %v618, %v721
      %v754 = vmul.f32 %v623, %v721
      %v755 = vmul.f32 %v628, %v721
      %v756 = vmul.f32 %v633, %v721
      %v757 = vmul.f32 %v638, %v721
      %v758 = vmul.f32 %v643, %v721
      %v759 = vmul.f32 %v648, %v721
      %v760 = vmul.f32 %v653, %v721
      %v761 = vmul.f32 %v658, %v721
      %v762 = vmul.f32 %v663, %v721
      %v763 = vmul.f32 %v668, %v721
      %v764 = vmul.f32 %v673, %v721
      %v765 = vmul.f32 %v678, %v721
      %v766 = vmul.f32 %v683, %v721
      %v767 = vmul.f32 %v688, %v721
      %v768 = vmul.f32 %v693, %v721
      %v769 = vmul.f32 %v698, %v721
      %v770 = vmul.f32 %v703, %v721
      %v771 = vmul.f32 %v708, %v721
      %v772 = vmul.f32 %v713, %v721
      %v773 = vld [vmem:[%s3] sm:$0x1]
      %v775 = vlaneseq
      %v776 = vshrl.u32 %v775, 7
      %v777 = vsub.s32 0, %v776
      %v778 = vrot.slane %v773, %v777
      %v780 = vadd.f32 %v723, %v778
      %v781 = vadd.f32 %v724, %v778
      %v782 = vadd.f32 %v725, %v778
      %v783 = vadd.f32 %v726, %v778
      %v784 = vadd.f32 %v727, %v778
      %v785 = vadd.f32 %v728, %v778
      %v786 = vadd.f32 %v729, %v778
      %v787 = vadd.f32 %v730, %v778
      %v788 = vadd.f32 %v731, %v778
      %v789 = vadd.f32 %v732, %v778
      %v790 = vadd.f32 %v733, %v778
      %v791 = vadd.f32 %v734, %v778
      %v792 = vadd.f32 %v735, %v778
      %v793 = vadd.f32 %v736, %v778
      %v794 = vadd.f32 %v737, %v778
      %v795 = vadd.f32 %v738, %v778
      %v796 = vadd.f32 %v739, %v778
      %v797 = vadd.f32 %v740, %v778
      %v798 = vadd.f32 %v741, %v778
      %v799 = vadd.f32 %v742, %v778
      %v800 = vadd.f32 %v743, %v778
      %v801 = vadd.f32 %v744, %v778
      %v802 = vadd.f32 %v745, %v778
      %v803 = vadd.f32 %v746, %v778
      %v804 = vadd.f32 %v747, %v778
      %v805 = vadd.f32 %v748, %v778
      %v806 = vadd.f32 %v749, %v778
      %v807 = vadd.f32 %v750, %v778
      %v808 = vadd.f32 %v751, %v778
      %v809 = vadd.f32 %v752, %v778
      %v810 = vadd.f32 %v753, %v778
      %v811 = vadd.f32 %v754, %v778
      %v812 = vadd.f32 %v755, %v778
      %v813 = vadd.f32 %v756, %v778
      %v814 = vadd.f32 %v757, %v778
      %v815 = vadd.f32 %v758, %v778
      %v816 = vadd.f32 %v759, %v778
      %v817 = vadd.f32 %v760, %v778
      %v818 = vadd.f32 %v761, %v778
      %v819 = vadd.f32 %v762, %v778
      %v820 = vadd.f32 %v763, %v778
      %v821 = vadd.f32 %v764, %v778
      %v822 = vadd.f32 %v765, %v778
      %v823 = vadd.f32 %v766, %v778
      %v824 = vadd.f32 %v767, %v778
      %v825 = vadd.f32 %v768, %v778
      %v826 = vadd.f32 %v769, %v778
      %v827 = vadd.f32 %v770, %v778
      %v828 = vadd.f32 %v771, %v778
      %v829 = vadd.f32 %v772, %v778
      %830 = vst [vmem:[%s276] sm:$0xff] %v780
      %831 = vst [vmem:[%s276 + $0x8] sm:$0xff] %v781
      %832 = vst [vmem:[%s276 + $0x10] sm:$0xff] %v782
      %833 = vst [vmem:[%s276 + $0x18] sm:$0xff] %v783
      %834 = vst [vmem:[%s276 + $0x20] sm:$0xff] %v784
      %835 = vst [vmem:[%s276 + $0x28] sm:$0xff] %v785
      %836 = vst [vmem:[%s276 + $0x30] sm:$0xff] %v786
      %837 = vst [vmem:[%s276 + $0x38] sm:$0xff] %v787
      %838 = vst [vmem:[%s276 + $0x40] sm:$0xff] %v788
      %839 = vst [vmem:[%s276 + $0x48] sm:$0xff] %v789
      %840 = vst [vmem:[%s276 + $0x50] sm:$0xff] %v790
      %841 = vst [vmem:[%s276 + $0x58] sm:$0xff] %v791
      %842 = vst [vmem:[%s276 + $0x60] sm:$0xff] %v792
      %843 = vst [vmem:[%s276 + $0x68] sm:$0xff] %v793
      %844 = vst [vmem:[%s276 + $0x70] sm:$0xff] %v794
      %845 = vst [vmem:[%s276 + $0x78] sm:$0xff] %v795
      %846 = vst [vmem:[%s276 + $0x80] sm:$0xff] %v796
      %847 = vst [vmem:[%s276 + $0x88] sm:$0xff] %v797
      %848 = vst [vmem:[%s276 + $0x90] sm:$0xff] %v798
      %849 = vst [vmem:[%s276 + $0x98] sm:$0xff] %v799
      %850 = vst [vmem:[%s276 + $0xa0] sm:$0xff] %v800
      %851 = vst [vmem:[%s276 + $0xa8] sm:$0xff] %v801
      %852 = vst [vmem:[%s276 + $0xb0] sm:$0xff] %v802
      %853 = vst [vmem:[%s276 + $0xb8] sm:$0xff] %v803
      %854 = vst [vmem:[%s276 + $0xc0] sm:$0xff] %v804
      %855 = vst [vmem:[%s276 + $0xc8] sm:$0xff] %v805
      %856 = vst [vmem:[%s276 + $0xd0] sm:$0xff] %v806
      %857 = vst [vmem:[%s276 + $0xd8] sm:$0xff] %v807
      %858 = vst [vmem:[%s276 + $0xe0] sm:$0xff] %v808
      %859 = vst [vmem:[%s276 + $0xe8] sm:$0xff] %v809
      %860 = vst [vmem:[%s276 + $0xf0] sm:$0xff] %v810
      %861 = vst [vmem:[%s276 + $0xf8] sm:$0xff] %v811
      %862 = vst [vmem:[%s276 + $0x100] sm:$0xff] %v812
      %863 = vst [vmem:[%s276 + $0x108] sm:$0xff] %v813
      %864 = vst [vmem:[%s276 + $0x110] sm:$0xff] %v814
      %865 = vst [vmem:[%s276 + $0x118] sm:$0xff] %v815
      %866 = vst [vmem:[%s276 + $0x120] sm:$0xff] %v816
      %867 = vst [vmem:[%s276 + $0x128] sm:$0xff] %v817
      %868 = vst [vmem:[%s276 + $0x130] sm:$0xff] %v818
      %869 = vst [vmem:[%s276 + $0x138] sm:$0xff] %v819
      %870 = vst [vmem:[%s276 + $0x140] sm:$0xff] %v820
      %871 = vst [vmem:[%s276 + $0x148] sm:$0xff] %v821
      %872 = vst [vmem:[%s276 + $0x150] sm:$0xff] %v822
      %873 = vst [vmem:[%s276 + $0x158] sm:$0xff] %v823
      %874 = vst [vmem:[%s276 + $0x160] sm:$0xff] %v824
      %875 = vst [vmem:[%s276 + $0x168] sm:$0xff] %v825
      %876 = vst [vmem:[%s276 + $0x170] sm:$0xff] %v826
      %877 = vst [vmem:[%s276 + $0x178] sm:$0xff] %v827
      %878 = vst [vmem:[%s276 + $0x180] sm:$0xff] %v828
      %879 = vst [vmem:[%s276 + $0x188] sm:$0xff] %v829
      %s880 = smul.u32 50, %s21
      %p881 = scmp.lt.s32.totalorder %s20, 1
      %s882 = scalar_select %p881, %s20, 1
      %p883 = scmp.lt.s32.totalorder %s880, 49
      %s884 = scalar_select %p883, %s880, 49
      %s885 = smul.addr %s882, 50
      %s886 = sadd.s32 %s884, %s885
      %s887 = smul.addr %s886, 8
      %s888 = scalar_lea.vmem %s5, %s887
      // Predicated region
      $region41: #{mbconv_forward.5} parent=39 // pred_check
        %p889 = pneg %p165
      $region42: #{mbconv_forward.5} parent=39 // pred_check_branch
        %891 = sbr.rel (%p889) target = $region44
      $region43: #{mbconv_forward.5} parent=39 // pred_region
        %s892 = smul.u32 50, %s21
      $region44: #{mbconv_forward.5} parent=39 // pred_fallthru
        _
    $region40: #{mbconv_forward.5} parent=5 // pred_fallthru
      _
    %p893 = scmp.le.s32.totalorder 2, %s11
    // Predicated region
    $region45: #{mbconv_forward.5} parent=5 // pred_check
      %p894 = pneg %p893
    $region46: #{mbconv_forward.5} parent=5 // pred_check_branch
      %896 = sbr.rel (%p894) target = $region48
    $region47: #{mbconv_forward.5} parent=5 // pred_region
      %s897 = ssub.s32 %s11, 2
      // Predicated region
      $region49: #{mbconv_forward.5} parent=47 // pred_check
        %p898 = pneg %p171
      $region50: #{mbconv_forward.5} parent=47 // pred_check_branch
        %900 = sbr.rel (%p898) target = $region52
      $region51: #{mbconv_forward.5} parent=47 // pred_region
        %s901 = smul.u32 50, %s23
        %p902 = scmp.lt.s32.totalorder %s22, 1
        %s903 = scalar_select %p902, %s22, 1
        %p904 = scmp.lt.s32.totalorder %s901, 49
        %s905 = scalar_select %p904, %s901, 49
        %s906 = smul.addr %s903, 50
        %s907 = sadd.s32 %s905, %s906
        %s908 = smul.addr %s907, 8
        %s909 = scalar_lea.vmem %s5, %s908
      $region52: #{mbconv_forward.5} parent=47 // pred_fallthru
        _
    $region48: #{mbconv_forward.5} parent=5 // pred_fallthru
      _
  $region6: #{mbconv_forward.5} parent=0 // loop_footer
    %s15 = sadd.s32 1, %s11
  $region7: #{mbconv_forward.5} parent=0 // loop_footer_branch
    %10 = sbr.rel target = $region3
  $region8: #{mbconv_forward.5} parent=0 // loop_exit
    _

</llo_original>
